<compile_context>
chip_gen: v7x
topology: tpu7x:2x2x1
jax: 0.10.0
libtpu: 0.0.40
codegen_flags: <defaults>
</compile_context>

<pallas_src>
import functools

import jax
import jax.numpy as jnp
from jax.experimental import pallas as pl
from jax.experimental.pallas import tpu as pltpu

_LANE = 128


def _feature_kernel(x_ref, w_ref, b_ref, p_ref, o_ref, *, tap_shifts, wd):
    """conv (shifted-window matmuls) + bias + ReLU + avg-pool matmul.

    x_ref: (Cin, bb*Spad)   flattened zero-padded inputs, spatial on lanes
    w_ref: (T, Cout, Cin)   per-tap conv weights, T = KH*KW, t = dh*KW + dw
    b_ref: (Cout, 1)        f32 bias
    p_ref: (Wd, bb)         f32 pooling matrix (valid-lane mask * 1/(H*W))
    o_ref: (1, Cout, bb)    pooled features for this batch block
    """
    cout = w_ref.shape[1]
    bb = p_ref.shape[1]

    # Fused conv: one accumulating MXU matmul per tap; tap (dh, dw) is simply
    # the static lane window starting at dh*Wp + dw.  Lanes whose window
    # spills into the next item / tail padding are zeroed later by P.
    acc = jnp.dot(w_ref[0], x_ref[:, pl.ds(tap_shifts[0], wd)],
                  preferred_element_type=jnp.float32)
    for t in range(1, len(tap_shifts)):
        acc += jnp.dot(w_ref[t], x_ref[:, pl.ds(tap_shifts[t], wd)],
                       preferred_element_type=jnp.float32)

    acc = jnp.maximum(acc + b_ref[...], 0.0)                 # bias + ReLU (f32)

    # Global average pool == one more matmul (MXU is idle): P selects each
    # item's valid output lanes and folds in the 1/(H*W) scaling.
    pooled = jnp.dot(acc, p_ref[...], preferred_element_type=jnp.float32)
    o_ref[...] = pooled.reshape(1, cout, bb).astype(o_ref.dtype)


def feature_extractor(x_nchw, weight, bias, *, batch_block=None,
                      compute_dtype=jnp.bfloat16):
    """conv KxK (padding='same') -> ReLU -> AdaptiveAvgPool2d(1) -> (N,Cout,1,1)."""
    N, Cin, H, W = x_nchw.shape
    Cout, Cin2, KH, KW = weight.shape
    assert Cin2 == Cin
    assert KH % 2 == 1 and KW % 2 == 1, "padding=1-style conv needs odd kernels"
    ph, pw = (KH - 1) // 2, (KW - 1) // 2
    Hp, Wp = H + 2 * ph, W + 2 * pw
    S0 = Hp * Wp                                    # flattened padded item size
    max_k = (KH - 1) * Wp + (KW - 1)                # largest tap lane shift
    s_valid_max = (H - 1) * Wp + (W - 1)            # last valid output lane
    tail = ((max_k + _LANE - 1) // _LANE) * _LANE if max_k else 0
    # Per-item lane stride: large enough that every tap window of every valid
    # output lane stays inside its own item's chunk; rounded to 128 lanes.
    Spad = ((max(S0, s_valid_max + 1 + tail) + _LANE - 1) // _LANE) * _LANE

    itemsize = jnp.dtype(compute_dtype).itemsize

    # ---- generation-aware sizing (v7x: 64 MiB VMEM/TC, v5e/v6e: 128 MiB) ----
    try:
        vmem_cap = int(pltpu.get_tpu_info().vmem_capacity_bytes)
    except Exception:  # be robust if the query is unavailable
        vmem_cap = 64 * 1024 * 1024
    vmem_limit = int(min(max(vmem_cap * 3 // 5, 32 * 1024 * 1024),
                         112 * 1024 * 1024))

    if batch_block is None:
        budget = vmem_cap // 4
        per_item = Spad * (2 * Cin * itemsize       # double-buffered input
                           + 4 * Cout               # f32 accumulator
                           + 4)                     # pooling-matrix column
        bb = max(1, min(N, budget // max(per_item, 1), 256))
        # Keep >=2 grid steps for dual-TensorCore parts (v7x) only when each
        # step stays comfortably large; small problems keep one big block
        # (best for single-TC v5e/v6e and harmless on v7x).
        if bb >= N and N >= 2 and (N // 2) * Spad >= 8 * 1024:
            bb = (N + 1) // 2
        batch_block = bb
    bb = max(1, min(int(batch_block), N))
    nb = -(-N // bb)                                # ceil div
    Np = nb * bb
    Wd = bb * Spad - tail                           # accumulator lane width (x128)

    # ---- wrapper glue: ONE lane-dense copy of the (cast, zero-padded) input.
    xc = x_nchw.astype(compute_dtype)               # cast early: half-size copies
    xp = jnp.pad(xc, ((0, 0), (0, 0), (ph, ph), (pw, pw)))        # (N,Cin,Hp,Wp)
    xf = jnp.pad(xp.reshape(N, Cin, S0),
                 ((0, Np - N), (0, 0), (0, Spad - S0)))           # (Np,Cin,Spad)
    x2 = jnp.transpose(xf, (1, 0, 2)).reshape(Cin, Np * Spad)     # (Cin, lanes)

    # Per-tap weights (t = dh*KW + dw, matching tap_shifts) and f32 bias.
    w_taps = jnp.transpose(weight, (2, 3, 0, 1)).reshape(KH * KW, Cout, Cin)
    w_taps = w_taps.astype(compute_dtype)
    b2 = bias.reshape(Cout, 1).astype(jnp.float32)

    # Pooling matrix: P[m*Spad+s, m] = 1/(H*W) iff lane s is a valid output
    # position of item m; zero elsewhere (also kills spill / padding lanes).
    r = jnp.arange(Wd, dtype=jnp.int32)
    item, s = r // Spad, r % Spad
    valid = (s % Wp < W) & (s // Wp < H)
    pmat = jnp.where(valid[:, None] & (item[:, None] == jnp.arange(bb)[None, :]),
                     jnp.float32(1.0 / (H * W)), jnp.float32(0.0))

    tap_shifts = tuple(dh * Wp + dw for dh in range(KH) for dw in range(KW))
    kernel = functools.partial(_feature_kernel, tap_shifts=tap_shifts, wd=Wd)

    flops = 2 * nb * Wd * Cout * (KH * KW * Cin + bb)
    bytes_accessed = (x2.size * itemsize + w_taps.size * itemsize
                      + b2.size * 4 + pmat.size * 4 + Np * Cout * 4)

    out = pl.pallas_call(
        kernel,
        out_shape=jax.ShapeDtypeStruct((nb, Cout, bb), x_nchw.dtype),
        grid_spec=pltpu.PrefetchScalarGridSpec(
            num_scalar_prefetch=0,
            grid=(nb,),
            in_specs=[
                pl.BlockSpec((Cin, bb * Spad), lambda i: (0, i)),
                pl.BlockSpec((KH * KW, Cout, Cin), lambda i: (0, 0, 0)),
                pl.BlockSpec((Cout, 1), lambda i: (0, 0)),
                pl.BlockSpec((Wd, bb), lambda i: (0, 0)),
            ],
            out_specs=pl.BlockSpec((1, Cout, bb), lambda i: (i, 0, 0)),
        ),
        compiler_params=pltpu.CompilerParams(
            dimension_semantics=("parallel",),
            vmem_limit_bytes=vmem_limit,
        ),
        cost_estimate=pl.CostEstimate(flops=int(flops), transcendentals=0,
                                      bytes_accessed=int(bytes_accessed)),
    )(x2, w_taps, b2, pmat)

    feats = jnp.transpose(out, (0, 2, 1)).reshape(Np, Cout)[:N]   # (N, Cout)
    return feats.reshape(N, Cout, 1, 1)


def _reference(x, weight, bias):
    """Precise f32 reference (pure elementwise ops; no matmul-precision ambiguity)."""
    N, Cin, H, W = x.shape
    Cout, _, KH, KW = weight.shape
    ph, pw = (KH - 1) // 2, (KW - 1) // 2
    xp = jnp.pad(x.astype(jnp.float32), ((0, 0), (0, 0), (ph, ph), (pw, pw)))
    out = jnp.zeros((N, Cout, H, W), jnp.float32)
    for dh in range(KH):
        for dw in range(KW):
            patch = xp[:, None, :, dh:dh + H, dw:dw + W]          # (N,1,Cin,H,W)
            wt = weight[None, :, :, dh, dw, None, None].astype(jnp.float32)
            out = out + jnp.sum(patch * wt, axis=2)
    out = jnp.maximum(out + bias.reshape(1, -1, 1, 1).astype(jnp.float32), 0.0)
    return jnp.mean(out, axis=(2, 3), keepdims=True)


if __name__ == "__main__":
    N, Cin, H, W = 2, 4, 16, 16
    Cout, KH, KW = 8, 3, 3

    key = jax.random.PRNGKey(0)
    kx, kw, kb = jax.random.split(key, 3)
    x = jax.random.normal(kx, (N, Cin, H, W), dtype=jnp.float32)
    weight = 0.1 * jax.random.normal(kw, (Cout, Cin, KH, KW), dtype=jnp.float32)
    bias = 0.05 * jax.random.normal(kb, (Cout,), dtype=jnp.float32)

    ref = _reference(x, weight, bias)

    # f32-operand path: tight check of the conv/pool indexing and layout.
    out_f32 = jax.block_until_ready(
        feature_extractor(x, weight, bias, compute_dtype=jnp.float32))
    assert out_f32.shape == (N, Cout, 1, 1), out_f32.shape
    assert jnp.allclose(out_f32, ref, atol=2e-3, rtol=2e-3), \
        float(jnp.max(jnp.abs(out_f32 - ref)))

    # Default bf16-operand path (f32 accumulation): compare against a reference
    # fed the same bf16-rounded operands, plus a loose check vs the f32 ref.
    out_bf16 = jax.block_until_ready(feature_extractor(x, weight, bias))
    ref_bf16 = _reference(x.astype(jnp.bfloat16).astype(jnp.float32),
                          weight.astype(jnp.bfloat16).astype(jnp.float32), bias)
    assert out_bf16.shape == (N, Cout, 1, 1), out_bf16.shape
    assert jnp.allclose(out_bf16, ref_bf16, atol=2e-3, rtol=2e-3), \
        float(jnp.max(jnp.abs(out_bf16 - ref_bf16)))
    assert jnp.allclose(out_bf16, ref, atol=3e-2, rtol=3e-2), \
        float(jnp.max(jnp.abs(out_bf16 - ref)))

    print("KERNEL_OK")
</pallas_src>

<mosaic_0001>
module attributes {stable_mosaic.version = 11 : i64} {
  func.func @_feature_kernel(%arg0: i32, %arg1: memref<4x1024xf32, #tpu.memory_space<vmem>>, %arg2: memref<9x8x4xf32, #tpu.memory_space<vmem>>, %arg3: memref<8x1xf32, #tpu.memory_space<vmem>>, %arg4: memref<896x2xf32, #tpu.memory_space<vmem>>, %arg5: memref<1x8x2xf32, #tpu.memory_space<vmem>>) attributes {dimension_semantics = [#tpu.dimension_semantics<parallel>], iteration_bounds = array<i64: 1>, scalar_prefetch = 0 : i64, scratch_operands = 0 : i64, tpu.core_type = #tpu.core_type<tc>, window_params = [{transform_indices = @transform_0, window_bounds = array<i64: 4, 1024>}, {pipeline_mode = #tpu.pipeline_mode<synchronous>, transform_indices = @transform_1, window_bounds = array<i64: 9, 8, 4>}, {pipeline_mode = #tpu.pipeline_mode<synchronous>, transform_indices = @transform_2, window_bounds = array<i64: 8, 1>}, {pipeline_mode = #tpu.pipeline_mode<synchronous>, transform_indices = @transform_3, window_bounds = array<i64: 896, 2>}, {transform_indices = @transform_4, window_bounds = array<i64: 1, 8, 2>}]} {
    %c0 = arith.constant 0 : index
    %c0_0 = arith.constant 0 : index
    %c0_1 = arith.constant 0 : index
    %0 = vector.load %arg2[%c0, %c0_0, %c0_1] : memref<9x8x4xf32, #tpu.memory_space<vmem>>, vector<1x8x4xf32>
    %1 = vector.shape_cast %0 : vector<1x8x4xf32> to vector<8x4xf32>
    %c0_2 = arith.constant 0 : index
    %c0_3 = arith.constant 0 : index
    %2 = vector.load %arg1[%c0_2, %c0_3] : memref<4x1024xf32, #tpu.memory_space<vmem>>, vector<4x896xf32>
    %cst = arith.constant dense<0.000000e+00> : vector<8x896xf32>
    %3 = tpu.matmul %1, %2, %cst {dimension_numbers = #tpu.dot_dimension_numbers<[1], [0], [0], [1], [0, 0, 1, 1], [], []>} : vector<8x4xf32>, vector<4x896xf32>, vector<8x896xf32> -> vector<8x896xf32>
    %c1 = arith.constant 1 : index
    %c0_4 = arith.constant 0 : index
    %c0_5 = arith.constant 0 : index
    %4 = vector.load %arg2[%c1, %c0_4, %c0_5] : memref<9x8x4xf32, #tpu.memory_space<vmem>>, vector<1x8x4xf32>
    %5 = vector.shape_cast %4 : vector<1x8x4xf32> to vector<8x4xf32>
    %c0_6 = arith.constant 0 : index
    %c1_7 = arith.constant 1 : index
    %6 = vector.load %arg1[%c0_6, %c1_7] : memref<4x1024xf32, #tpu.memory_space<vmem>>, vector<4x896xf32>
    %cst_8 = arith.constant dense<0.000000e+00> : vector<8x896xf32>
    %7 = tpu.matmul %5, %6, %cst_8 {dimension_numbers = #tpu.dot_dimension_numbers<[1], [0], [0], [1], [0, 0, 1, 1], [], []>} : vector<8x4xf32>, vector<4x896xf32>, vector<8x896xf32> -> vector<8x896xf32>
    %8 = arith.addf %3, %7 : vector<8x896xf32>
    %c2 = arith.constant 2 : index
    %c0_9 = arith.constant 0 : index
    %c0_10 = arith.constant 0 : index
    %9 = vector.load %arg2[%c2, %c0_9, %c0_10] : memref<9x8x4xf32, #tpu.memory_space<vmem>>, vector<1x8x4xf32>
    %10 = vector.shape_cast %9 : vector<1x8x4xf32> to vector<8x4xf32>
    %c0_11 = arith.constant 0 : index
    %c2_12 = arith.constant 2 : index
    %11 = vector.load %arg1[%c0_11, %c2_12] : memref<4x1024xf32, #tpu.memory_space<vmem>>, vector<4x896xf32>
    %cst_13 = arith.constant dense<0.000000e+00> : vector<8x896xf32>
    %12 = tpu.matmul %10, %11, %cst_13 {dimension_numbers = #tpu.dot_dimension_numbers<[1], [0], [0], [1], [0, 0, 1, 1], [], []>} : vector<8x4xf32>, vector<4x896xf32>, vector<8x896xf32> -> vector<8x896xf32>
    %13 = arith.addf %8, %12 : vector<8x896xf32>
    %c3 = arith.constant 3 : index
    %c0_14 = arith.constant 0 : index
    %c0_15 = arith.constant 0 : index
    %14 = vector.load %arg2[%c3, %c0_14, %c0_15] : memref<9x8x4xf32, #tpu.memory_space<vmem>>, vector<1x8x4xf32>
    %15 = vector.shape_cast %14 : vector<1x8x4xf32> to vector<8x4xf32>
    %c0_16 = arith.constant 0 : index
    %c18 = arith.constant 18 : index
    %16 = vector.load %arg1[%c0_16, %c18] : memref<4x1024xf32, #tpu.memory_space<vmem>>, vector<4x896xf32>
    %cst_17 = arith.constant dense<0.000000e+00> : vector<8x896xf32>
    %17 = tpu.matmul %15, %16, %cst_17 {dimension_numbers = #tpu.dot_dimension_numbers<[1], [0], [0], [1], [0, 0, 1, 1], [], []>} : vector<8x4xf32>, vector<4x896xf32>, vector<8x896xf32> -> vector<8x896xf32>
    %18 = arith.addf %13, %17 : vector<8x896xf32>
    %c4 = arith.constant 4 : index
    %c0_18 = arith.constant 0 : index
    %c0_19 = arith.constant 0 : index
    %19 = vector.load %arg2[%c4, %c0_18, %c0_19] : memref<9x8x4xf32, #tpu.memory_space<vmem>>, vector<1x8x4xf32>
    %20 = vector.shape_cast %19 : vector<1x8x4xf32> to vector<8x4xf32>
    %c0_20 = arith.constant 0 : index
    %c19 = arith.constant 19 : index
    %21 = vector.load %arg1[%c0_20, %c19] : memref<4x1024xf32, #tpu.memory_space<vmem>>, vector<4x896xf32>
    %cst_21 = arith.constant dense<0.000000e+00> : vector<8x896xf32>
    %22 = tpu.matmul %20, %21, %cst_21 {dimension_numbers = #tpu.dot_dimension_numbers<[1], [0], [0], [1], [0, 0, 1, 1], [], []>} : vector<8x4xf32>, vector<4x896xf32>, vector<8x896xf32> -> vector<8x896xf32>
    %23 = arith.addf %18, %22 : vector<8x896xf32>
    %c5 = arith.constant 5 : index
    %c0_22 = arith.constant 0 : index
    %c0_23 = arith.constant 0 : index
    %24 = vector.load %arg2[%c5, %c0_22, %c0_23] : memref<9x8x4xf32, #tpu.memory_space<vmem>>, vector<1x8x4xf32>
    %25 = vector.shape_cast %24 : vector<1x8x4xf32> to vector<8x4xf32>
    %c0_24 = arith.constant 0 : index
    %c20 = arith.constant 20 : index
    %26 = vector.load %arg1[%c0_24, %c20] : memref<4x1024xf32, #tpu.memory_space<vmem>>, vector<4x896xf32>
    %cst_25 = arith.constant dense<0.000000e+00> : vector<8x896xf32>
    %27 = tpu.matmul %25, %26, %cst_25 {dimension_numbers = #tpu.dot_dimension_numbers<[1], [0], [0], [1], [0, 0, 1, 1], [], []>} : vector<8x4xf32>, vector<4x896xf32>, vector<8x896xf32> -> vector<8x896xf32>
    %28 = arith.addf %23, %27 : vector<8x896xf32>
    %c6 = arith.constant 6 : index
    %c0_26 = arith.constant 0 : index
    %c0_27 = arith.constant 0 : index
    %29 = vector.load %arg2[%c6, %c0_26, %c0_27] : memref<9x8x4xf32, #tpu.memory_space<vmem>>, vector<1x8x4xf32>
    %30 = vector.shape_cast %29 : vector<1x8x4xf32> to vector<8x4xf32>
    %c0_28 = arith.constant 0 : index
    %c36 = arith.constant 36 : index
    %31 = vector.load %arg1[%c0_28, %c36] : memref<4x1024xf32, #tpu.memory_space<vmem>>, vector<4x896xf32>
    %cst_29 = arith.constant dense<0.000000e+00> : vector<8x896xf32>
    %32 = tpu.matmul %30, %31, %cst_29 {dimension_numbers = #tpu.dot_dimension_numbers<[1], [0], [0], [1], [0, 0, 1, 1], [], []>} : vector<8x4xf32>, vector<4x896xf32>, vector<8x896xf32> -> vector<8x896xf32>
    %33 = arith.addf %28, %32 : vector<8x896xf32>
    %c7 = arith.constant 7 : index
    %c0_30 = arith.constant 0 : index
    %c0_31 = arith.constant 0 : index
    %34 = vector.load %arg2[%c7, %c0_30, %c0_31] : memref<9x8x4xf32, #tpu.memory_space<vmem>>, vector<1x8x4xf32>
    %35 = vector.shape_cast %34 : vector<1x8x4xf32> to vector<8x4xf32>
    %c0_32 = arith.constant 0 : index
    %c37 = arith.constant 37 : index
    %36 = vector.load %arg1[%c0_32, %c37] : memref<4x1024xf32, #tpu.memory_space<vmem>>, vector<4x896xf32>
    %cst_33 = arith.constant dense<0.000000e+00> : vector<8x896xf32>
    %37 = tpu.matmul %35, %36, %cst_33 {dimension_numbers = #tpu.dot_dimension_numbers<[1], [0], [0], [1], [0, 0, 1, 1], [], []>} : vector<8x4xf32>, vector<4x896xf32>, vector<8x896xf32> -> vector<8x896xf32>
    %38 = arith.addf %33, %37 : vector<8x896xf32>
    %c8 = arith.constant 8 : index
    %c0_34 = arith.constant 0 : index
    %c0_35 = arith.constant 0 : index
    %39 = vector.load %arg2[%c8, %c0_34, %c0_35] : memref<9x8x4xf32, #tpu.memory_space<vmem>>, vector<1x8x4xf32>
    %40 = vector.shape_cast %39 : vector<1x8x4xf32> to vector<8x4xf32>
    %c0_36 = arith.constant 0 : index
    %c38 = arith.constant 38 : index
    %41 = vector.load %arg1[%c0_36, %c38] : memref<4x1024xf32, #tpu.memory_space<vmem>>, vector<4x896xf32>
    %cst_37 = arith.constant dense<0.000000e+00> : vector<8x896xf32>
    %42 = tpu.matmul %40, %41, %cst_37 {dimension_numbers = #tpu.dot_dimension_numbers<[1], [0], [0], [1], [0, 0, 1, 1], [], []>} : vector<8x4xf32>, vector<4x896xf32>, vector<8x896xf32> -> vector<8x896xf32>
    %43 = arith.addf %38, %42 : vector<8x896xf32>
    %c0_38 = arith.constant 0 : index
    %c0_39 = arith.constant 0 : index
    %44 = vector.load %arg3[%c0_38, %c0_39] : memref<8x1xf32, #tpu.memory_space<vmem>>, vector<8x1xf32>
    %45 = vector.broadcast %44 : vector<8x1xf32> to vector<8x896xf32>
    %46 = arith.addf %43, %45 : vector<8x896xf32>
    %cst_40 = arith.constant 0.000000e+00 : f32
    %47 = vector.broadcast %cst_40 : f32 to vector<8x896xf32>
    %48 = arith.maximumf %46, %47 : vector<8x896xf32>
    %c0_41 = arith.constant 0 : index
    %c0_42 = arith.constant 0 : index
    %49 = vector.load %arg4[%c0_41, %c0_42] : memref<896x2xf32, #tpu.memory_space<vmem>>, vector<896x2xf32>
    %cst_43 = arith.constant dense<0.000000e+00> : vector<8x2xf32>
    %50 = tpu.matmul %48, %49, %cst_43 {dimension_numbers = #tpu.dot_dimension_numbers<[1], [0], [0], [1], [0, 0, 1, 1], [], []>} : vector<8x896xf32>, vector<896x2xf32>, vector<8x2xf32> -> vector<8x2xf32>
    %51 = vector.shape_cast %50 : vector<8x2xf32> to vector<1x8x2xf32>
    %c0_44 = arith.constant 0 : index
    %c0_45 = arith.constant 0 : index
    %c0_46 = arith.constant 0 : index
    %52 = vector.load %arg5[%c0_44, %c0_45, %c0_46] : memref<1x8x2xf32, #tpu.memory_space<vmem>>, vector<1x8x2xf32>
    tpu.vector_store %arg5[%c0_44, %c0_45, %c0_46], %51 {strides = array<i32>} : memref<1x8x2xf32, #tpu.memory_space<vmem>>, vector<1x8x2xf32>,
    return
  }
  func.func @transform_0(%arg0: i32) -> (i32, i32) {
    %c0_i32 = arith.constant 0 : i32
    %c0_i32_0 = arith.constant 0 : i32
    return %c0_i32, %arg0 : i32, i32
  }
  func.func @transform_1(%arg0: i32) -> (i32, i32, i32) {
    %c0_i32 = arith.constant 0 : i32
    %c0_i32_0 = arith.constant 0 : i32
    %c0_i32_1 = arith.constant 0 : i32
    %c0_i32_2 = arith.constant 0 : i32
    return %c0_i32, %c0_i32_0, %c0_i32_1 : i32, i32, i32
  }
  func.func @transform_2(%arg0: i32) -> (i32, i32) {
    %c0_i32 = arith.constant 0 : i32
    %c0_i32_0 = arith.constant 0 : i32
    %c0_i32_1 = arith.constant 0 : i32
    return %c0_i32, %c0_i32_0 : i32, i32
  }
  func.func @transform_3(%arg0: i32) -> (i32, i32) {
    %c0_i32 = arith.constant 0 : i32
    %c0_i32_0 = arith.constant 0 : i32
    %c0_i32_1 = arith.constant 0 : i32
    return %c0_i32, %c0_i32_0 : i32, i32
  }
  func.func @transform_4(%arg0: i32) -> (i32, i32, i32) {
    %c0_i32 = arith.constant 0 : i32
    %c0_i32_0 = arith.constant 0 : i32
    %c0_i32_1 = arith.constant 0 : i32
    return %arg0, %c0_i32, %c0_i32_0 : i32, i32, i32
  }
}

</mosaic_0001>

<llo_original>
// kernel: tpu_custom_call.1
$region0: #{tpu_custom_call.1}
  #allocation0 [shape = 'u32[]', space=smem, size = 0x4, offset = 0x4, fixed_abs, tag = 'smem constant byte address 0x4 - core index']
  #allocation1 [shape = 'u32[144,128]{1,0:T(1,128)}', space=vmem, size = 0x12000, scoped, tag = 'internal scratch']
  %s0 = inlined_call_operand.vmem [shape: f32[4,1024], index: 0, kind: input, shape index: {}]
  %s1 = inlined_call_operand.vmem [shape: f32[9,8,4], index: 1, kind: input, shape index: {}]
  %s2 = inlined_call_operand.vmem [shape: f32[8,1], index: 2, kind: input, shape index: {}]
  %s3 = inlined_call_operand.vmem [shape: f32[896,2], index: 3, kind: input, shape index: {}]
  %s4 = inlined_call_operand.vmem [shape: f32[1,8,2], index: 4, kind: output, shape index: {}]
  %s5 = sld [smem:[#allocation0]]
  $region26: #{tpu_custom_call.1} parent=0
    _
  %s7 = ssub.s32 1, %s5
  %s8 = scalar_select 0, %s7, %s5
  // Predicated region
  $region2: #{tpu_custom_call.1} parent=0 // pred_check
    _
  $region3: #{tpu_custom_call.1} parent=0 // pred_check_branch
    %10 = sbr.rel (0) target = $region5
  $region4: #{tpu_custom_call.1} parent=0 // pred_region
    _
  $region5: #{tpu_custom_call.1} parent=0 // pred_fallthru
    _
  // Predicated region
  $region6: #{tpu_custom_call.1} parent=0 // pred_check
    _
  $region7: #{tpu_custom_call.1} parent=0 // pred_check_branch
    %12 = sbr.rel (0) target = $region9
  $region8: #{tpu_custom_call.1} parent=0 // pred_region
    _
  $region9: #{tpu_custom_call.1} parent=0 // pred_fallthru
    _
  // Predicated region
  $region10: #{tpu_custom_call.1} parent=0 // pred_check
    _
  $region11: #{tpu_custom_call.1} parent=0 // pred_check_branch
    %14 = sbr.rel (0) target = $region13
  $region12: #{tpu_custom_call.1} parent=0 // pred_region
    _
  $region13: #{tpu_custom_call.1} parent=0 // pred_fallthru
    _
  // Predicated region
  $region14: #{tpu_custom_call.1} parent=0 // pred_check
    _
  $region15: #{tpu_custom_call.1} parent=0 // pred_check_branch
    %16 = sbr.rel (0) target = $region17
  $region16: #{tpu_custom_call.1} parent=0 // pred_region
    _
  $region17: #{tpu_custom_call.1} parent=0 // pred_fallthru
    _
  %v17 = vld [vmem:[%s1] sm:$0xff]
  %v18 = vld [vmem:[%s0] sm:$0xff]
  %v19 = vld [vmem:[%s0 + $0x8] sm:$0xff]
  %v20 = vld [vmem:[%s0 + $0x10] sm:$0xff]
  %v21 = vld [vmem:[%s0 + $0x18] sm:$0xf]
  %s22 = scalar_lea.vmem %s1, 8
  %v23 = vld [vmem:[%s22] sm:$0xff]
  %v24 = vld [vmem:[%s0] sm:$0xff]
  %v25 = vld [vmem:[%s0 + $0x8] sm:$0xff]
  %v26 = vld [vmem:[%s0 + $0x10] sm:$0xff]
  %v27 = vld [vmem:[%s0 + $0x18] sm:$0xff]
  %v32 = vcombine.high %v24, %v24
  %v33 = vcombine.high %v25, %v25
  %v34 = vcombine.high %v26, %v26
  %v35 = vcombine.high %v27, %v27
  %36 = vrot.lane.b32.xlu0 %v24, 127
  %v37 = vpop.permute.xlu0 %36
  %38 = vrot.lane.b32.xlu0 %v32, 127
  %v39 = vpop.permute.xlu0 %38
  %40 = vrot.lane.b32.xlu0 %v25, 127
  %v41 = vpop.permute.xlu0 %40
  %42 = vrot.lane.b32.xlu0 %v33, 127
  %v43 = vpop.permute.xlu0 %42
  %44 = vrot.lane.b32.xlu0 %v26, 127
  %v45 = vpop.permute.xlu0 %44
  %46 = vrot.lane.b32.xlu0 %v34, 127
  %v47 = vpop.permute.xlu0 %46
  %48 = vrot.lane.b32.xlu0 %v27, 127
  %v49 = vpop.permute.xlu0 %48
  %50 = vrot.lane.b32.xlu0 %v35, 127
  %v51 = vpop.permute.xlu0 %50
  %vm52 = vcmask 1039360
  %v53 = vsel %vm52, %v37, %v39
  %v54 = vsel %vm52, %v39, %v41
  %v55 = vsel %vm52, %v41, %v43
  %v56 = vsel %vm52, %v43, %v45
  %v57 = vsel %vm52, %v45, %v47
  %v58 = vsel %vm52, %v47, %v49
  %v59 = vsel %vm52, %v49, %v51
  %vm60 = vcmask 31744
  %v62 = vsel %vm60, %v23, 0
  %vm64 = vcmask 1043456
  %v65 = vsel %vm64, %v53, 0
  %v67 = vsel %vm64, %v54, 0
  %v69 = vsel %vm64, %v55, 0
  %v71 = vsel %vm64, %v56, 0
  %v73 = vsel %vm64, %v57, 0
  %v75 = vsel %vm64, %v58, 0
  %v77 = vsel %vm64, %v59, 0
  %79 = vmatprep.subr.mxu0 %v67
  %80 = vmatpush1.msra.mxu0 %v65
  %81 = vmatprep.subr.mxu0 0.0
  %82 = vmatpush1.msra.mxu0 0.0
  %83 = vmatprep.subr.mxu0 0.0
  %84 = vmatpush1.msra.mxu0 0.0
  %85 = vmatprep.subr.mxu0 0.0
  %86 = vmatpush1.msra.mxu0 0.0
  %87 = vmatprep.subr.mxu0 0.0
  %88 = vmatpush1.msra.mxu0 0.0
  %89 = vmatprep.subr.mxu0 0.0
  %90 = vmatpush1.msra.mxu0 0.0
  %91 = vmatprep.subr.mxu0 0.0
  %92 = vmatpush1.msra.mxu0 0.0
  %93 = vmatprep.subr.mxu0 0.0
  %94 = vmatpush1.msra.mxu0 0.0
  %95 = vmatprep.subr.mxu0 0.0
  %96 = vmatpush1.msra.mxu0 0.0
  %97 = vmatprep.subr.mxu0 0.0
  %98 = vmatpush1.msra.mxu0 0.0
  %99 = vmatprep.subr.mxu0 0.0
  %100 = vmatpush1.msra.mxu0 0.0
  %101 = vmatprep.subr.mxu0 0.0
  %102 = vmatpush1.msra.mxu0 0.0
  %103 = vmatprep.subr.mxu0 0.0
  %104 = vmatpush1.msra.mxu0 0.0
  %105 = vmatprep.subr.mxu0 0.0
  %106 = vmatpush1.msra.mxu0 0.0
  %107 = vmatprep.subr.mxu0 0.0
  %108 = vmatpush1.msra.mxu0 0.0
  %109 = vmatprep.subr.mxu0 0.0
  %110 = vmatpush1.msra.mxu0 0.0
  %111 = vmatprep.subr.mxu0 0.0
  %112 = vmatpush1.msra.mxu0 0.0
  %113 = vmatprep.subr.mxu0 0.0
  %114 = vmatpush1.msra.mxu0 0.0
  %115 = vmatprep.subr.mxu0 0.0
  %116 = vmatpush1.msra.mxu0 0.0
  %117 = vmatprep.subr.mxu0 0.0
  %118 = vmatpush1.msra.mxu0 0.0
  %119 = vmatprep.subr.mxu0 0.0
  %120 = vmatpush1.msra.mxu0 0.0
  %121 = vmatprep.subr.mxu0 0.0
  %122 = vmatpush1.msra.mxu0 0.0
  %123 = vmatprep.subr.mxu0 0.0
  %124 = vmatpush1.msra.mxu0 0.0
  %125 = vmatprep.subr.mxu0 0.0
  %126 = vmatpush1.msra.mxu0 0.0
  %127 = vmatprep.subr.mxu0 0.0
  %128 = vmatpush1.msra.mxu0 0.0
  %129 = vmatprep.subr.mxu0 0.0
  %130 = vmatpush1.msra.mxu0 0.0
  %131 = vmatprep.subr.mxu0 0.0
  %132 = vmatpush1.msra.mxu0 0.0
  %133 = vmatprep.subr.mxu0 0.0
  %134 = vmatpush1.msra.mxu0 0.0
  %135 = vmatprep.subr.mxu0 0.0
  %136 = vmatpush1.msra.mxu0 0.0
  %137 = vmatprep.subr.mxu0 0.0
  %138 = vmatpush1.msra.mxu0 0.0
  %139 = vmatprep.subr.mxu0 0.0
  %140 = vmatpush1.msra.mxu0 0.0
  %141 = vmatprep.subr.mxu0 0.0
  %142 = vmatpush1.msra.mxu0 0.0
  %143 = vmatprep.mubr.f32.mxu0 0.0
  %144 = vmatmul.mubr.f32.gmra.mrb[0].mxu0 %v62
  %v145 = vpop.f32.mrb[0].mxu0
  %v146 = vadd.f32 0.0, %v145
  %v147 = vpop.f32.mrb[0].mxu0
  %v148 = vadd.f32 0.0, %v147
  %149 = vdwg.mxu0
  %150 = vmatprep.subr.mxu0 %v71
  %151 = vmatpush1.msra.mxu0 %v69
  %152 = vmatprep.subr.mxu0 0.0
  %153 = vmatpush1.msra.mxu0 0.0
  %154 = vmatprep.subr.mxu0 0.0
  %155 = vmatpush1.msra.mxu0 0.0
  %156 = vmatprep.subr.mxu0 0.0
  %157 = vmatpush1.msra.mxu0 0.0
  %158 = vmatprep.subr.mxu0 0.0
  %159 = vmatpush1.msra.mxu0 0.0
  %160 = vmatprep.subr.mxu0 0.0
  %161 = vmatpush1.msra.mxu0 0.0
  %162 = vmatprep.subr.mxu0 0.0
  %163 = vmatpush1.msra.mxu0 0.0
  %164 = vmatprep.subr.mxu0 0.0
  %165 = vmatpush1.msra.mxu0 0.0
  %166 = vmatprep.subr.mxu0 0.0
  %167 = vmatpush1.msra.mxu0 0.0
  %168 = vmatprep.subr.mxu0 0.0
  %169 = vmatpush1.msra.mxu0 0.0
  %170 = vmatprep.subr.mxu0 0.0
  %171 = vmatpush1.msra.mxu0 0.0
  %172 = vmatprep.subr.mxu0 0.0
  %173 = vmatpush1.msra.mxu0 0.0
  %174 = vmatprep.subr.mxu0 0.0
  %175 = vmatpush1.msra.mxu0 0.0
  %176 = vmatprep.subr.mxu0 0.0
  %177 = vmatpush1.msra.mxu0 0.0
  %178 = vmatprep.subr.mxu0 0.0
  %179 = vmatpush1.msra.mxu0 0.0
  %180 = vmatprep.subr.mxu0 0.0
  %181 = vmatpush1.msra.mxu0 0.0
  %182 = vmatprep.subr.mxu0 0.0
  %183 = vmatpush1.msra.mxu0 0.0
  %184 = vmatprep.subr.mxu0 0.0
  %185 = vmatpush1.msra.mxu0 0.0
  %186 = vmatprep.subr.mxu0 0.0
  %187 = vmatpush1.msra.mxu0 0.0
  %188 = vmatprep.subr.mxu0 0.0
  %189 = vmatpush1.msra.mxu0 0.0
  %190 = vmatprep.subr.mxu0 0.0
  %191 = vmatpush1.msra.mxu0 0.0
  %192 = vmatprep.subr.mxu0 0.0
  %193 = vmatpush1.msra.mxu0 0.0
  %194 = vmatprep.subr.mxu0 0.0
  %195 = vmatpush1.msra.mxu0 0.0
  %196 = vmatprep.subr.mxu0 0.0
  %197 = vmatpush1.msra.mxu0 0.0
  %198 = vmatprep.subr.mxu0 0.0
  %199 = vmatpush1.msra.mxu0 0.0
  %200 = vmatprep.subr.mxu0 0.0
  %201 = vmatpush1.msra.mxu0 0.0
  %202 = vmatprep.subr.mxu0 0.0
  %203 = vmatpush1.msra.mxu0 0.0
  %204 = vmatprep.subr.mxu0 0.0
  %205 = vmatpush1.msra.mxu0 0.0
  %206 = vmatprep.subr.mxu0 0.0
  %207 = vmatpush1.msra.mxu0 0.0
  %208 = vmatprep.subr.mxu0 0.0
  %209 = vmatpush1.msra.mxu0 0.0
  %210 = vmatprep.subr.mxu0 0.0
  %211 = vmatpush1.msra.mxu0 0.0
  %212 = vmatprep.subr.mxu0 0.0
  %213 = vmatpush1.msra.mxu0 0.0
  %214 = vmatprep.mubr.f32.mxu0 0.0
  %215 = vmatmul.mubr.f32.gmra.mrb[0].mxu0 %v62
  %v216 = vpop.f32.mrb[0].mxu0
  %v217 = vadd.f32 0.0, %v216
  %v218 = vpop.f32.mrb[0].mxu0
  %v219 = vadd.f32 0.0, %v218
  %220 = vdwg.mxu0
  %221 = vmatprep.subr.mxu0 %v75
  %222 = vmatpush1.msra.mxu0 %v73
  %223 = vmatprep.subr.mxu0 0.0
  %224 = vmatpush1.msra.mxu0 0.0
  %225 = vmatprep.subr.mxu0 0.0
  %226 = vmatpush1.msra.mxu0 0.0
  %227 = vmatprep.subr.mxu0 0.0
  %228 = vmatpush1.msra.mxu0 0.0
  %229 = vmatprep.subr.mxu0 0.0
  %230 = vmatpush1.msra.mxu0 0.0
  %231 = vmatprep.subr.mxu0 0.0
  %232 = vmatpush1.msra.mxu0 0.0
  %233 = vmatprep.subr.mxu0 0.0
  %234 = vmatpush1.msra.mxu0 0.0
  %235 = vmatprep.subr.mxu0 0.0
  %236 = vmatpush1.msra.mxu0 0.0
  %237 = vmatprep.subr.mxu0 0.0
  %238 = vmatpush1.msra.mxu0 0.0
  %239 = vmatprep.subr.mxu0 0.0
  %240 = vmatpush1.msra.mxu0 0.0
  %241 = vmatprep.subr.mxu0 0.0
  %242 = vmatpush1.msra.mxu0 0.0
  %243 = vmatprep.subr.mxu0 0.0
  %244 = vmatpush1.msra.mxu0 0.0
  %245 = vmatprep.subr.mxu0 0.0
  %246 = vmatpush1.msra.mxu0 0.0
  %247 = vmatprep.subr.mxu0 0.0
  %248 = vmatpush1.msra.mxu0 0.0
  %249 = vmatprep.subr.mxu0 0.0
  %250 = vmatpush1.msra.mxu0 0.0
  %251 = vmatprep.subr.mxu0 0.0
  %252 = vmatpush1.msra.mxu0 0.0
  %253 = vmatprep.subr.mxu0 0.0
  %254 = vmatpush1.msra.mxu0 0.0
  %255 = vmatprep.subr.mxu0 0.0
  %256 = vmatpush1.msra.mxu0 0.0
  %257 = vmatprep.subr.mxu0 0.0
  %258 = vmatpush1.msra.mxu0 0.0
  %259 = vmatprep.subr.mxu0 0.0
  %260 = vmatpush1.msra.mxu0 0.0
  %261 = vmatprep.subr.mxu0 0.0
  %262 = vmatpush1.msra.mxu0 0.0
  %263 = vmatprep.subr.mxu0 0.0
  %264 = vmatpush1.msra.mxu0 0.0
  %265 = vmatprep.subr.mxu0 0.0
  %266 = vmatpush1.msra.mxu0 0.0
  %267 = vmatprep.subr.mxu0 0.0
  %268 = vmatpush1.msra.mxu0 0.0
  %269 = vmatprep.subr.mxu0 0.0
  %270 = vmatpush1.msra.mxu0 0.0
  %271 = vmatprep.subr.mxu0 0.0
  %272 = vmatpush1.msra.mxu0 0.0
  %273 = vmatprep.subr.mxu0 0.0
  %274 = vmatpush1.msra.mxu0 0.0
  %275 = vmatprep.subr.mxu0 0.0
  %276 = vmatpush1.msra.mxu0 0.0
  %277 = vmatprep.subr.mxu0 0.0
  %278 = vmatpush1.msra.mxu0 0.0
  %279 = vmatprep.subr.mxu0 0.0
  %280 = vmatpush1.msra.mxu0 0.0
  %281 = vmatprep.subr.mxu0 0.0
  %282 = vmatpush1.msra.mxu0 0.0
  %283 = vmatprep.subr.mxu0 0.0
  %284 = vmatpush1.msra.mxu0 0.0
  %285 = vmatprep.mubr.f32.mxu0 0.0
  %286 = vmatmul.mubr.f32.gmra.mrb[0].mxu0 %v62
  %v287 = vpop.f32.mrb[0].mxu0
  %v288 = vadd.f32 0.0, %v287
  %v289 = vpop.f32.mrb[0].mxu0
  %v290 = vadd.f32 0.0, %v289
  %291 = vdwg.mxu0
  %292 = vmatprep.subr.mxu0 0.0
  %293 = vmatpush1.msra.mxu0 %v77
  %294 = vmatprep.subr.mxu0 0.0
  %295 = vmatpush1.msra.mxu0 0.0
  %296 = vmatprep.subr.mxu0 0.0
  %297 = vmatpush1.msra.mxu0 0.0
  %298 = vmatprep.subr.mxu0 0.0
  %299 = vmatpush1.msra.mxu0 0.0
  %300 = vmatprep.subr.mxu0 0.0
  %301 = vmatpush1.msra.mxu0 0.0
  %302 = vmatprep.subr.mxu0 0.0
  %303 = vmatpush1.msra.mxu0 0.0
  %304 = vmatprep.subr.mxu0 0.0
  %305 = vmatpush1.msra.mxu0 0.0
  %306 = vmatprep.subr.mxu0 0.0
  %307 = vmatpush1.msra.mxu0 0.0
  %308 = vmatprep.subr.mxu0 0.0
  %309 = vmatpush1.msra.mxu0 0.0
  %310 = vmatprep.subr.mxu0 0.0
  %311 = vmatpush1.msra.mxu0 0.0
  %312 = vmatprep.subr.mxu0 0.0
  %313 = vmatpush1.msra.mxu0 0.0
  %314 = vmatprep.subr.mxu0 0.0
  %315 = vmatpush1.msra.mxu0 0.0
  %316 = vmatprep.subr.mxu0 0.0
  %317 = vmatpush1.msra.mxu0 0.0
  %318 = vmatprep.subr.mxu0 0.0
  %319 = vmatpush1.msra.mxu0 0.0
  %320 = vmatprep.subr.mxu0 0.0
  %321 = vmatpush1.msra.mxu0 0.0
  %322 = vmatprep.subr.mxu0 0.0
  %323 = vmatpush1.msra.mxu0 0.0
  %324 = vmatprep.subr.mxu0 0.0
  %325 = vmatpush1.msra.mxu0 0.0
  %326 = vmatprep.subr.mxu0 0.0
  %327 = vmatpush1.msra.mxu0 0.0
  %328 = vmatprep.subr.mxu0 0.0
  %329 = vmatpush1.msra.mxu0 0.0
  %330 = vmatprep.subr.mxu0 0.0
  %331 = vmatpush1.msra.mxu0 0.0
  %332 = vmatprep.subr.mxu0 0.0
  %333 = vmatpush1.msra.mxu0 0.0
  %334 = vmatprep.subr.mxu0 0.0
  %335 = vmatpush1.msra.mxu0 0.0
  %336 = vmatprep.subr.mxu0 0.0
  %337 = vmatpush1.msra.mxu0 0.0
  %338 = vmatprep.subr.mxu0 0.0
  %339 = vmatpush1.msra.mxu0 0.0
  %340 = vmatprep.subr.mxu0 0.0
  %341 = vmatpush1.msra.mxu0 0.0
  %342 = vmatprep.subr.mxu0 0.0
  %343 = vmatpush1.msra.mxu0 0.0
  %344 = vmatprep.subr.mxu0 0.0
  %345 = vmatpush1.msra.mxu0 0.0
  %346 = vmatprep.subr.mxu0 0.0
  %347 = vmatpush1.msra.mxu0 0.0
  %348 = vmatprep.subr.mxu0 0.0
  %349 = vmatpush1.msra.mxu0 0.0
  %350 = vmatprep.subr.mxu0 0.0
  %351 = vmatpush1.msra.mxu0 0.0
  %352 = vmatprep.subr.mxu0 0.0
  %353 = vmatpush1.msra.mxu0 0.0
  %354 = vmatprep.subr.mxu0 0.0
  %355 = vmatpush1.msra.mxu0 0.0
  %356 = vmatprep.mubr.f32.mxu0 0.0
  %357 = vmatmul.mubr.f32.gmra.mrb[0].mxu0 %v62
  %v358 = vpop.f32.mrb[0].mxu0
  %v359 = vadd.f32 0.0, %v358
  %v360 = vpop.f32.mrb[0].mxu0
  %361 = vdwg.mxu0
  %v366 = vcombine.high %v18, %v18
  %v367 = vcombine.high %v19, %v19
  %v368 = vcombine.high %v20, %v20
  %v370 = vsel %vm60, %v17, 0
  %v372 = vsel %vm64, %v18, 0
  %v374 = vsel %vm64, %v366, 0
  %v376 = vsel %vm64, %v19, 0
  %v378 = vsel %vm64, %v367, 0
  %v380 = vsel %vm64, %v20, 0
  %v382 = vsel %vm64, %v368, 0
  %v384 = vsel %vm64, %v21, 0
  %386 = vmatprep.subr.mxu0 %v374
  %387 = vmatpush1.msra.mxu0 %v372
  %388 = vmatprep.subr.mxu0 0.0
  %389 = vmatpush1.msra.mxu0 0.0
  %390 = vmatprep.subr.mxu0 0.0
  %391 = vmatpush1.msra.mxu0 0.0
  %392 = vmatprep.subr.mxu0 0.0
  %393 = vmatpush1.msra.mxu0 0.0
  %394 = vmatprep.subr.mxu0 0.0
  %395 = vmatpush1.msra.mxu0 0.0
  %396 = vmatprep.subr.mxu0 0.0
  %397 = vmatpush1.msra.mxu0 0.0
  %398 = vmatprep.subr.mxu0 0.0
  %399 = vmatpush1.msra.mxu0 0.0
  %400 = vmatprep.subr.mxu0 0.0
  %401 = vmatpush1.msra.mxu0 0.0
  %402 = vmatprep.subr.mxu0 0.0
  %403 = vmatpush1.msra.mxu0 0.0
  %404 = vmatprep.subr.mxu0 0.0
  %405 = vmatpush1.msra.mxu0 0.0
  %406 = vmatprep.subr.mxu0 0.0
  %407 = vmatpush1.msra.mxu0 0.0
  %408 = vmatprep.subr.mxu0 0.0
  %409 = vmatpush1.msra.mxu0 0.0
  %410 = vmatprep.subr.mxu0 0.0
  %411 = vmatpush1.msra.mxu0 0.0
  %412 = vmatprep.subr.mxu0 0.0
  %413 = vmatpush1.msra.mxu0 0.0
  %414 = vmatprep.subr.mxu0 0.0
  %415 = vmatpush1.msra.mxu0 0.0
  %416 = vmatprep.subr.mxu0 0.0
  %417 = vmatpush1.msra.mxu0 0.0
  %418 = vmatprep.subr.mxu0 0.0
  %419 = vmatpush1.msra.mxu0 0.0
  %420 = vmatprep.subr.mxu0 0.0
  %421 = vmatpush1.msra.mxu0 0.0
  %422 = vmatprep.subr.mxu0 0.0
  %423 = vmatpush1.msra.mxu0 0.0
  %424 = vmatprep.subr.mxu0 0.0
  %425 = vmatpush1.msra.mxu0 0.0
  %426 = vmatprep.subr.mxu0 0.0
  %427 = vmatpush1.msra.mxu0 0.0
  %428 = vmatprep.subr.mxu0 0.0
  %429 = vmatpush1.msra.mxu0 0.0
  %430 = vmatprep.subr.mxu0 0.0
  %431 = vmatpush1.msra.mxu0 0.0
  %432 = vmatprep.subr.mxu0 0.0
  %433 = vmatpush1.msra.mxu0 0.0
  %434 = vmatprep.subr.mxu0 0.0
  %435 = vmatpush1.msra.mxu0 0.0
  %436 = vmatprep.subr.mxu0 0.0
  %437 = vmatpush1.msra.mxu0 0.0
  %438 = vmatprep.subr.mxu0 0.0
  %439 = vmatpush1.msra.mxu0 0.0
  %440 = vmatprep.subr.mxu0 0.0
  %441 = vmatpush1.msra.mxu0 0.0
  %442 = vmatprep.subr.mxu0 0.0
  %443 = vmatpush1.msra.mxu0 0.0
  %444 = vmatprep.subr.mxu0 0.0
  %445 = vmatpush1.msra.mxu0 0.0
  %446 = vmatprep.subr.mxu0 0.0
  %447 = vmatpush1.msra.mxu0 0.0
  %448 = vmatprep.subr.mxu0 0.0
  %449 = vmatpush1.msra.mxu0 0.0
  %450 = vmatprep.mubr.f32.mxu0 0.0
  %451 = vmatmul.mubr.f32.gmra.mrb[0].mxu0 %v370
  %v452 = vpop.f32.mrb[0].mxu0
  %v453 = vadd.f32 %v146, %v452
  %v454 = vpop.f32.mrb[0].mxu0
  %v455 = vadd.f32 %v148, %v454
  %456 = vdwg.mxu0
  %457 = vmatprep.subr.mxu0 %v378
  %458 = vmatpush1.msra.mxu0 %v376
  %459 = vmatprep.subr.mxu0 0.0
  %460 = vmatpush1.msra.mxu0 0.0
  %461 = vmatprep.subr.mxu0 0.0
  %462 = vmatpush1.msra.mxu0 0.0
  %463 = vmatprep.subr.mxu0 0.0
  %464 = vmatpush1.msra.mxu0 0.0
  %465 = vmatprep.subr.mxu0 0.0
  %466 = vmatpush1.msra.mxu0 0.0
  %467 = vmatprep.subr.mxu0 0.0
  %468 = vmatpush1.msra.mxu0 0.0
  %469 = vmatprep.subr.mxu0 0.0
  %470 = vmatpush1.msra.mxu0 0.0
  %471 = vmatprep.subr.mxu0 0.0
  %472 = vmatpush1.msra.mxu0 0.0
  %473 = vmatprep.subr.mxu0 0.0
  %474 = vmatpush1.msra.mxu0 0.0
  %475 = vmatprep.subr.mxu0 0.0
  %476 = vmatpush1.msra.mxu0 0.0
  %477 = vmatprep.subr.mxu0 0.0
  %478 = vmatpush1.msra.mxu0 0.0
  %479 = vmatprep.subr.mxu0 0.0
  %480 = vmatpush1.msra.mxu0 0.0
  %481 = vmatprep.subr.mxu0 0.0
  %482 = vmatpush1.msra.mxu0 0.0
  %483 = vmatprep.subr.mxu0 0.0
  %484 = vmatpush1.msra.mxu0 0.0
  %485 = vmatprep.subr.mxu0 0.0
  %486 = vmatpush1.msra.mxu0 0.0
  %487 = vmatprep.subr.mxu0 0.0
  %488 = vmatpush1.msra.mxu0 0.0
  %489 = vmatprep.subr.mxu0 0.0
  %490 = vmatpush1.msra.mxu0 0.0
  %491 = vmatprep.subr.mxu0 0.0
  %492 = vmatpush1.msra.mxu0 0.0
  %493 = vmatprep.subr.mxu0 0.0
  %494 = vmatpush1.msra.mxu0 0.0
  %495 = vmatprep.subr.mxu0 0.0
  %496 = vmatpush1.msra.mxu0 0.0
  %497 = vmatprep.subr.mxu0 0.0
  %498 = vmatpush1.msra.mxu0 0.0
  %499 = vmatprep.subr.mxu0 0.0
  %500 = vmatpush1.msra.mxu0 0.0
  %501 = vmatprep.subr.mxu0 0.0
  %502 = vmatpush1.msra.mxu0 0.0
  %503 = vmatprep.subr.mxu0 0.0
  %504 = vmatpush1.msra.mxu0 0.0
  %505 = vmatprep.subr.mxu0 0.0
  %506 = vmatpush1.msra.mxu0 0.0
  %507 = vmatprep.subr.mxu0 0.0
  %508 = vmatpush1.msra.mxu0 0.0
  %509 = vmatprep.subr.mxu0 0.0
  %510 = vmatpush1.msra.mxu0 0.0
  %511 = vmatprep.subr.mxu0 0.0
  %512 = vmatpush1.msra.mxu0 0.0
  %513 = vmatprep.subr.mxu0 0.0
  %514 = vmatpush1.msra.mxu0 0.0
  %515 = vmatprep.subr.mxu0 0.0
  %516 = vmatpush1.msra.mxu0 0.0
  %517 = vmatprep.subr.mxu0 0.0
  %518 = vmatpush1.msra.mxu0 0.0
  %519 = vmatprep.subr.mxu0 0.0
  %520 = vmatpush1.msra.mxu0 0.0
  %521 = vmatprep.mubr.f32.mxu0 0.0
  %522 = vmatmul.mubr.f32.gmra.mrb[0].mxu0 %v370
  %v523 = vpop.f32.mrb[0].mxu0
  %v524 = vadd.f32 %v217, %v523
  %v525 = vpop.f32.mrb[0].mxu0
  %v526 = vadd.f32 %v219, %v525
  %527 = vdwg.mxu0
  %528 = vmatprep.subr.mxu0 %v382
  %529 = vmatpush1.msra.mxu0 %v380
  %530 = vmatprep.subr.mxu0 0.0
  %531 = vmatpush1.msra.mxu0 0.0
  %532 = vmatprep.subr.mxu0 0.0
  %533 = vmatpush1.msra.mxu0 0.0
  %534 = vmatprep.subr.mxu0 0.0
  %535 = vmatpush1.msra.mxu0 0.0
  %536 = vmatprep.subr.mxu0 0.0
  %537 = vmatpush1.msra.mxu0 0.0
  %538 = vmatprep.subr.mxu0 0.0
  %539 = vmatpush1.msra.mxu0 0.0
  %540 = vmatprep.subr.mxu0 0.0
  %541 = vmatpush1.msra.mxu0 0.0
  %542 = vmatprep.subr.mxu0 0.0
  %543 = vmatpush1.msra.mxu0 0.0
  %544 = vmatprep.subr.mxu0 0.0
  %545 = vmatpush1.msra.mxu0 0.0
  %546 = vmatprep.subr.mxu0 0.0
  %547 = vmatpush1.msra.mxu0 0.0
  %548 = vmatprep.subr.mxu0 0.0
  %549 = vmatpush1.msra.mxu0 0.0
  %550 = vmatprep.subr.mxu0 0.0
  %551 = vmatpush1.msra.mxu0 0.0
  %552 = vmatprep.subr.mxu0 0.0
  %553 = vmatpush1.msra.mxu0 0.0
  %554 = vmatprep.subr.mxu0 0.0
  %555 = vmatpush1.msra.mxu0 0.0
  %556 = vmatprep.subr.mxu0 0.0
  %557 = vmatpush1.msra.mxu0 0.0
  %558 = vmatprep.subr.mxu0 0.0
  %559 = vmatpush1.msra.mxu0 0.0
  %560 = vmatprep.subr.mxu0 0.0
  %561 = vmatpush1.msra.mxu0 0.0
  %562 = vmatprep.subr.mxu0 0.0
  %563 = vmatpush1.msra.mxu0 0.0
  %564 = vmatprep.subr.mxu0 0.0
  %565 = vmatpush1.msra.mxu0 0.0
  %566 = vmatprep.subr.mxu0 0.0
  %567 = vmatpush1.msra.mxu0 0.0
  %568 = vmatprep.subr.mxu0 0.0
  %569 = vmatpush1.msra.mxu0 0.0
  %570 = vmatprep.subr.mxu0 0.0
  %571 = vmatpush1.msra.mxu0 0.0
  %572 = vmatprep.subr.mxu0 0.0
  %573 = vmatpush1.msra.mxu0 0.0
  %574 = vmatprep.subr.mxu0 0.0
  %575 = vmatpush1.msra.mxu0 0.0
  %576 = vmatprep.subr.mxu0 0.0
  %577 = vmatpush1.msra.mxu0 0.0
  %578 = vmatprep.subr.mxu0 0.0
  %579 = vmatpush1.msra.mxu0 0.0
  %580 = vmatprep.subr.mxu0 0.0
  %581 = vmatpush1.msra.mxu0 0.0
  %582 = vmatprep.subr.mxu0 0.0
  %583 = vmatpush1.msra.mxu0 0.0
  %584 = vmatprep.subr.mxu0 0.0
  %585 = vmatpush1.msra.mxu0 0.0
  %586 = vmatprep.subr.mxu0 0.0
  %587 = vmatpush1.msra.mxu0 0.0
  %588 = vmatprep.subr.mxu0 0.0
  %589 = vmatpush1.msra.mxu0 0.0
  %590 = vmatprep.subr.mxu0 0.0
  %591 = vmatpush1.msra.mxu0 0.0
  %592 = vmatprep.mubr.f32.mxu0 0.0
  %593 = vmatmul.mubr.f32.gmra.mrb[0].mxu0 %v370
  %v594 = vpop.f32.mrb[0].mxu0
  %v595 = vadd.f32 %v288, %v594
  %v596 = vpop.f32.mrb[0].mxu0
  %v597 = vadd.f32 %v290, %v596
  %598 = vdwg.mxu0
  %599 = vmatprep.subr.mxu0 0.0
  %600 = vmatpush1.msra.mxu0 %v384
  %601 = vmatprep.subr.mxu0 0.0
  %602 = vmatpush1.msra.mxu0 0.0
  %603 = vmatprep.subr.mxu0 0.0
  %604 = vmatpush1.msra.mxu0 0.0
  %605 = vmatprep.subr.mxu0 0.0
  %606 = vmatpush1.msra.mxu0 0.0
  %607 = vmatprep.subr.mxu0 0.0
  %608 = vmatpush1.msra.mxu0 0.0
  %609 = vmatprep.subr.mxu0 0.0
  %610 = vmatpush1.msra.mxu0 0.0
  %611 = vmatprep.subr.mxu0 0.0
  %612 = vmatpush1.msra.mxu0 0.0
  %613 = vmatprep.subr.mxu0 0.0
  %614 = vmatpush1.msra.mxu0 0.0
  %615 = vmatprep.subr.mxu0 0.0
  %616 = vmatpush1.msra.mxu0 0.0
  %617 = vmatprep.subr.mxu0 0.0
  %618 = vmatpush1.msra.mxu0 0.0
  %619 = vmatprep.subr.mxu0 0.0
  %620 = vmatpush1.msra.mxu0 0.0
  %621 = vmatprep.subr.mxu0 0.0
  %622 = vmatpush1.msra.mxu0 0.0
  %623 = vmatprep.subr.mxu0 0.0
  %624 = vmatpush1.msra.mxu0 0.0
  %625 = vmatprep.subr.mxu0 0.0
  %626 = vmatpush1.msra.mxu0 0.0
  %627 = vmatprep.subr.mxu0 0.0
  %628 = vmatpush1.msra.mxu0 0.0
  %629 = vmatprep.subr.mxu0 0.0
  %630 = vmatpush1.msra.mxu0 0.0
  %631 = vmatprep.subr.mxu0 0.0
  %632 = vmatpush1.msra.mxu0 0.0
  %633 = vmatprep.subr.mxu0 0.0
  %634 = vmatpush1.msra.mxu0 0.0
  %635 = vmatprep.subr.mxu0 0.0
  %636 = vmatpush1.msra.mxu0 0.0
  %637 = vmatprep.subr.mxu0 0.0
  %638 = vmatpush1.msra.mxu0 0.0
  %639 = vmatprep.subr.mxu0 0.0
  %640 = vmatpush1.msra.mxu0 0.0
  %641 = vmatprep.subr.mxu0 0.0
  %642 = vmatpush1.msra.mxu0 0.0
  %643 = vmatprep.subr.mxu0 0.0
  %644 = vmatpush1.msra.mxu0 0.0
  %645 = vmatprep.subr.mxu0 0.0
  %646 = vmatpush1.msra.mxu0 0.0
  %647 = vmatprep.subr.mxu0 0.0
  %648 = vmatpush1.msra.mxu0 0.0
  %649 = vmatprep.subr.mxu0 0.0
  %650 = vmatpush1.msra.mxu0 0.0
  %651 = vmatprep.subr.mxu0 0.0
  %652 = vmatpush1.msra.mxu0 0.0
  %653 = vmatprep.subr.mxu0 0.0
  %654 = vmatpush1.msra.mxu0 0.0
  %655 = vmatprep.subr.mxu0 0.0
  %656 = vmatpush1.msra.mxu0 0.0
  %657 = vmatprep.subr.mxu0 0.0
  %658 = vmatpush1.msra.mxu0 0.0
  %659 = vmatprep.subr.mxu0 0.0
  %660 = vmatpush1.msra.mxu0 0.0
  %661 = vmatprep.subr.mxu0 0.0
  %662 = vmatpush1.msra.mxu0 0.0
  %663 = vmatprep.mubr.f32.mxu0 0.0
  %664 = vmatmul.mubr.f32.gmra.mrb[0].mxu0 %v370
  %v665 = vpop.f32.mrb[0].mxu0
  %v666 = vadd.f32 %v359, %v665
  %v667 = vpop.f32.mrb[0].mxu0
  %668 = vdwg.mxu0
  %s669 = scalar_lea.vmem %s1, 16
  %v670 = vld [vmem:[%s669] sm:$0xff]
  %v671 = vld [vmem:[%s0] sm:$0xff]
  %v672 = vld [vmem:[%s0 + $0x8] sm:$0xff]
  %v673 = vld [vmem:[%s0 + $0x10] sm:$0xff]
  %v674 = vld [vmem:[%s0 + $0x18] sm:$0xff]
  %v679 = vcombine.high %v671, %v671
  %v680 = vcombine.high %v672, %v672
  %v681 = vcombine.high %v673, %v673
  %v682 = vcombine.high %v674, %v674
  %683 = vrot.lane.b32.xlu0 %v671, 126
  %v684 = vpop.permute.xlu0 %683
  %685 = vrot.lane.b32.xlu0 %v679, 126
  %v686 = vpop.permute.xlu0 %685
  %687 = vrot.lane.b32.xlu0 %v672, 126
  %v688 = vpop.permute.xlu0 %687
  %689 = vrot.lane.b32.xlu0 %v680, 126
  %v690 = vpop.permute.xlu0 %689
  %691 = vrot.lane.b32.xlu0 %v673, 126
  %v692 = vpop.permute.xlu0 %691
  %693 = vrot.lane.b32.xlu0 %v681, 126
  %v694 = vpop.permute.xlu0 %693
  %695 = vrot.lane.b32.xlu0 %v674, 126
  %v696 = vpop.permute.xlu0 %695
  %697 = vrot.lane.b32.xlu0 %v682, 126
  %v698 = vpop.permute.xlu0 %697
  %vm699 = vcmask 1031168
  %v700 = vsel %vm699, %v684, %v686
  %v701 = vsel %vm699, %v686, %v688
  %v702 = vsel %vm699, %v688, %v690
  %v703 = vsel %vm699, %v690, %v692
  %v704 = vsel %vm699, %v692, %v694
  %v705 = vsel %vm699, %v694, %v696
  %v706 = vsel %vm699, %v696, %v698
  %v708 = vsel %vm60, %v670, 0
  %v710 = vsel %vm64, %v700, 0
  %v712 = vsel %vm64, %v701, 0
  %v714 = vsel %vm64, %v702, 0
  %v716 = vsel %vm64, %v703, 0
  %v718 = vsel %vm64, %v704, 0
  %v720 = vsel %vm64, %v705, 0
  %v722 = vsel %vm64, %v706, 0
  %724 = vmatprep.subr.mxu0 %v712
  %725 = vmatpush1.msra.mxu0 %v710
  %726 = vmatprep.subr.mxu0 0.0
  %727 = vmatpush1.msra.mxu0 0.0
  %728 = vmatprep.subr.mxu0 0.0
  %729 = vmatpush1.msra.mxu0 0.0
  %730 = vmatprep.subr.mxu0 0.0
  %731 = vmatpush1.msra.mxu0 0.0
  %732 = vmatprep.subr.mxu0 0.0
  %733 = vmatpush1.msra.mxu0 0.0
  %734 = vmatprep.subr.mxu0 0.0
  %735 = vmatpush1.msra.mxu0 0.0
  %736 = vmatprep.subr.mxu0 0.0
  %737 = vmatpush1.msra.mxu0 0.0
  %738 = vmatprep.subr.mxu0 0.0
  %739 = vmatpush1.msra.mxu0 0.0
  %740 = vmatprep.subr.mxu0 0.0
  %741 = vmatpush1.msra.mxu0 0.0
  %742 = vmatprep.subr.mxu0 0.0
  %743 = vmatpush1.msra.mxu0 0.0
  %744 = vmatprep.subr.mxu0 0.0
  %745 = vmatpush1.msra.mxu0 0.0
  %746 = vmatprep.subr.mxu0 0.0
  %747 = vmatpush1.msra.mxu0 0.0
  %748 = vmatprep.subr.mxu0 0.0
  %749 = vmatpush1.msra.mxu0 0.0
  %750 = vmatprep.subr.mxu0 0.0
  %751 = vmatpush1.msra.mxu0 0.0
  %752 = vmatprep.subr.mxu0 0.0
  %753 = vmatpush1.msra.mxu0 0.0
  %754 = vmatprep.subr.mxu0 0.0
  %755 = vmatpush1.msra.mxu0 0.0
  %756 = vmatprep.subr.mxu0 0.0
  %757 = vmatpush1.msra.mxu0 0.0
  %758 = vmatprep.subr.mxu0 0.0
  %759 = vmatpush1.msra.mxu0 0.0
  %760 = vmatprep.subr.mxu0 0.0
  %761 = vmatpush1.msra.mxu0 0.0
  %762 = vmatprep.subr.mxu0 0.0
  %763 = vmatpush1.msra.mxu0 0.0
  %764 = vmatprep.subr.mxu0 0.0
  %765 = vmatpush1.msra.mxu0 0.0
  %766 = vmatprep.subr.mxu0 0.0
  %767 = vmatpush1.msra.mxu0 0.0
  %768 = vmatprep.subr.mxu0 0.0
  %769 = vmatpush1.msra.mxu0 0.0
  %770 = vmatprep.subr.mxu0 0.0
  %771 = vmatpush1.msra.mxu0 0.0
  %772 = vmatprep.subr.mxu0 0.0
  %773 = vmatpush1.msra.mxu0 0.0
  %774 = vmatprep.subr.mxu0 0.0
  %775 = vmatpush1.msra.mxu0 0.0
  %776 = vmatprep.subr.mxu0 0.0
  %777 = vmatpush1.msra.mxu0 0.0
  %778 = vmatprep.subr.mxu0 0.0
  %779 = vmatpush1.msra.mxu0 0.0
  %780 = vmatprep.subr.mxu0 0.0
  %781 = vmatpush1.msra.mxu0 0.0
  %782 = vmatprep.subr.mxu0 0.0
  %783 = vmatpush1.msra.mxu0 0.0
  %784 = vmatprep.subr.mxu0 0.0
  %785 = vmatpush1.msra.mxu0 0.0
  %786 = vmatprep.subr.mxu0 0.0
  %787 = vmatpush1.msra.mxu0 0.0
  %788 = vmatprep.mubr.f32.mxu0 0.0
  %789 = vmatmul.mubr.f32.gmra.mrb[0].mxu0 %v708
  %v790 = vpop.f32.mrb[0].mxu0
  %v791 = vadd.f32 0.0, %v790
  %v792 = vpop.f32.mrb[0].mxu0
  %v793 = vadd.f32 0.0, %v792
  %794 = vdwg.mxu0
  %795 = vmatprep.subr.mxu0 %v716
  %796 = vmatpush1.msra.mxu0 %v714
  %797 = vmatprep.subr.mxu0 0.0
  %798 = vmatpush1.msra.mxu0 0.0
  %799 = vmatprep.subr.mxu0 0.0
  %800 = vmatpush1.msra.mxu0 0.0
  %801 = vmatprep.subr.mxu0 0.0
  %802 = vmatpush1.msra.mxu0 0.0
  %803 = vmatprep.subr.mxu0 0.0
  %804 = vmatpush1.msra.mxu0 0.0
  %805 = vmatprep.subr.mxu0 0.0
  %806 = vmatpush1.msra.mxu0 0.0
  %807 = vmatprep.subr.mxu0 0.0
  %808 = vmatpush1.msra.mxu0 0.0
  %809 = vmatprep.subr.mxu0 0.0
  %810 = vmatpush1.msra.mxu0 0.0
  %811 = vmatprep.subr.mxu0 0.0
  %812 = vmatpush1.msra.mxu0 0.0
  %813 = vmatprep.subr.mxu0 0.0
  %814 = vmatpush1.msra.mxu0 0.0
  %815 = vmatprep.subr.mxu0 0.0
  %816 = vmatpush1.msra.mxu0 0.0
  %817 = vmatprep.subr.mxu0 0.0
  %818 = vmatpush1.msra.mxu0 0.0
  %819 = vmatprep.subr.mxu0 0.0
  %820 = vmatpush1.msra.mxu0 0.0
  %821 = vmatprep.subr.mxu0 0.0
  %822 = vmatpush1.msra.mxu0 0.0
  %823 = vmatprep.subr.mxu0 0.0
  %824 = vmatpush1.msra.mxu0 0.0
  %825 = vmatprep.subr.mxu0 0.0
  %826 = vmatpush1.msra.mxu0 0.0
  %827 = vmatprep.subr.mxu0 0.0
  %828 = vmatpush1.msra.mxu0 0.0
  %829 = vmatprep.subr.mxu0 0.0
  %830 = vmatpush1.msra.mxu0 0.0
  %831 = vmatprep.subr.mxu0 0.0
  %832 = vmatpush1.msra.mxu0 0.0
  %833 = vmatprep.subr.mxu0 0.0
  %834 = vmatpush1.msra.mxu0 0.0
  %835 = vmatprep.subr.mxu0 0.0
  %836 = vmatpush1.msra.mxu0 0.0
  %837 = vmatprep.subr.mxu0 0.0
  %838 = vmatpush1.msra.mxu0 0.0
  %839 = vmatprep.subr.mxu0 0.0
  %840 = vmatpush1.msra.mxu0 0.0
  %841 = vmatprep.subr.mxu0 0.0
  %842 = vmatpush1.msra.mxu0 0.0
  %843 = vmatprep.subr.mxu0 0.0
  %844 = vmatpush1.msra.mxu0 0.0
  %845 = vmatprep.subr.mxu0 0.0
  %846 = vmatpush1.msra.mxu0 0.0
  %847 = vmatprep.subr.mxu0 0.0
  %848 = vmatpush1.msra.mxu0 0.0
  %849 = vmatprep.subr.mxu0 0.0
  %850 = vmatpush1.msra.mxu0 0.0
  %851 = vmatprep.subr.mxu0 0.0
  %852 = vmatpush1.msra.mxu0 0.0
  %853 = vmatprep.subr.mxu0 0.0
  %854 = vmatpush1.msra.mxu0 0.0
  %855 = vmatprep.subr.mxu0 0.0
  %856 = vmatpush1.msra.mxu0 0.0
  %857 = vmatprep.subr.mxu0 0.0
  %858 = vmatpush1.msra.mxu0 0.0
  %859 = vmatprep.mubr.f32.mxu0 0.0
  %860 = vmatmul.mubr.f32.gmra.mrb[0].mxu0 %v708
  %v861 = vpop.f32.mrb[0].mxu0
  %v862 = vadd.f32 0.0, %v861
  %v863 = vpop.f32.mrb[0].mxu0
  %v864 = vadd.f32 0.0, %v863
  %865 = vdwg.mxu0
  %866 = vmatprep.subr.mxu0 %v720
  %867 = vmatpush1.msra.mxu0 %v718
  %868 = vmatprep.subr.mxu0 0.0
  %869 = vmatpush1.msra.mxu0 0.0
  %870 = vmatprep.subr.mxu0 0.0
  %871 = vmatpush1.msra.mxu0 0.0
  %872 = vmatprep.subr.mxu0 0.0
  %873 = vmatpush1.msra.mxu0 0.0
  %874 = vmatprep.subr.mxu0 0.0
  %875 = vmatpush1.msra.mxu0 0.0
  %876 = vmatprep.subr.mxu0 0.0
  %877 = vmatpush1.msra.mxu0 0.0
  %878 = vmatprep.subr.mxu0 0.0
  %879 = vmatpush1.msra.mxu0 0.0
  %880 = vmatprep.subr.mxu0 0.0
  %881 = vmatpush1.msra.mxu0 0.0
  %882 = vmatprep.subr.mxu0 0.0
  %883 = vmatpush1.msra.mxu0 0.0
  %884 = vmatprep.subr.mxu0 0.0
  %885 = vmatpush1.msra.mxu0 0.0
  %886 = vmatprep.subr.mxu0 0.0
  %887 = vmatpush1.msra.mxu0 0.0
  %888 = vmatprep.subr.mxu0 0.0
  %889 = vmatpush1.msra.mxu0 0.0
  %890 = vmatprep.subr.mxu0 0.0
  %891 = vmatpush1.msra.mxu0 0.0
  %892 = vmatprep.subr.mxu0 0.0
  %893 = vmatpush1.msra.mxu0 0.0
  %894 = vmatprep.subr.mxu0 0.0
  %895 = vmatpush1.msra.mxu0 0.0
  %896 = vmatprep.subr.mxu0 0.0
  %897 = vmatpush1.msra.mxu0 0.0
  %898 = vmatprep.subr.mxu0 0.0
  %899 = vmatpush1.msra.mxu0 0.0
  %900 = vmatprep.subr.mxu0 0.0
  %901 = vmatpush1.msra.mxu0 0.0
  %902 = vmatprep.subr.mxu0 0.0
  %903 = vmatpush1.msra.mxu0 0.0
  %904 = vmatprep.subr.mxu0 0.0
  %905 = vmatpush1.msra.mxu0 0.0
  %906 = vmatprep.subr.mxu0 0.0
  %907 = vmatpush1.msra.mxu0 0.0
  %908 = vmatprep.subr.mxu0 0.0
  %909 = vmatpush1.msra.mxu0 0.0
  %910 = vmatprep.subr.mxu0 0.0
  %911 = vmatpush1.msra.mxu0 0.0
  %912 = vmatprep.subr.mxu0 0.0
  %913 = vmatpush1.msra.mxu0 0.0
  %914 = vmatprep.subr.mxu0 0.0
  %915 = vmatpush1.msra.mxu0 0.0
  %916 = vmatprep.subr.mxu0 0.0
  %917 = vmatpush1.msra.mxu0 0.0
  %918 = vmatprep.subr.mxu0 0.0
  %919 = vmatpush1.msra.mxu0 0.0
  %920 = vmatprep.subr.mxu0 0.0
  %921 = vmatpush1.msra.mxu0 0.0
  %922 = vmatprep.subr.mxu0 0.0
  %923 = vmatpush1.msra.mxu0 0.0
  %924 = vmatprep.subr.mxu0 0.0
  %925 = vmatpush1.msra.mxu0 0.0
  %926 = vmatprep.subr.mxu0 0.0
  %927 = vmatpush1.msra.mxu0 0.0
  %928 = vmatprep.subr.mxu0 0.0
  %929 = vmatpush1.msra.mxu0 0.0
  %930 = vmatprep.mubr.f32.mxu0 0.0
  %931 = vmatmul.mubr.f32.gmra.mrb[0].mxu0 %v708
  %v932 = vpop.f32.mrb[0].mxu0
  %v933 = vadd.f32 0.0, %v932
  %v934 = vpop.f32.mrb[0].mxu0
  %v935 = vadd.f32 0.0, %v934
  %936 = vdwg.mxu0
  %937 = vmatprep.subr.mxu0 0.0
  %938 = vmatpush1.msra.mxu0 %v722
  %939 = vmatprep.subr.mxu0 0.0
  %940 = vmatpush1.msra.mxu0 0.0
  %941 = vmatprep.subr.mxu0 0.0
  %942 = vmatpush1.msra.mxu0 0.0
  %943 = vmatprep.subr.mxu0 0.0
  %944 = vmatpush1.msra.mxu0 0.0
  %945 = vmatprep.subr.mxu0 0.0
  %946 = vmatpush1.msra.mxu0 0.0
  %947 = vmatprep.subr.mxu0 0.0
  %948 = vmatpush1.msra.mxu0 0.0
  %949 = vmatprep.subr.mxu0 0.0
  %950 = vmatpush1.msra.mxu0 0.0
  %951 = vmatprep.subr.mxu0 0.0
  %952 = vmatpush1.msra.mxu0 0.0
  %953 = vmatprep.subr.mxu0 0.0
  %954 = vmatpush1.msra.mxu0 0.0
  %955 = vmatprep.subr.mxu0 0.0
  %956 = vmatpush1.msra.mxu0 0.0
  %957 = vmatprep.subr.mxu0 0.0
  %958 = vmatpush1.msra.mxu0 0.0
  %959 = vmatprep.subr.mxu0 0.0
  %960 = vmatpush1.msra.mxu0 0.0
  %961 = vmatprep.subr.mxu0 0.0
  %962 = vmatpush1.msra.mxu0 0.0
  %963 = vmatprep.subr.mxu0 0.0
  %964 = vmatpush1.msra.mxu0 0.0
  %965 = vmatprep.subr.mxu0 0.0
  %966 = vmatpush1.msra.mxu0 0.0
  %967 = vmatprep.subr.mxu0 0.0
  %968 = vmatpush1.msra.mxu0 0.0
  %969 = vmatprep.subr.mxu0 0.0
  %970 = vmatpush1.msra.mxu0 0.0
  %971 = vmatprep.subr.mxu0 0.0
  %972 = vmatpush1.msra.mxu0 0.0
  %973 = vmatprep.subr.mxu0 0.0
  %974 = vmatpush1.msra.mxu0 0.0
  %975 = vmatprep.subr.mxu0 0.0
  %976 = vmatpush1.msra.mxu0 0.0
  %977 = vmatprep.subr.mxu0 0.0
  %978 = vmatpush1.msra.mxu0 0.0
  %979 = vmatprep.subr.mxu0 0.0
  %980 = vmatpush1.msra.mxu0 0.0
  %981 = vmatprep.subr.mxu0 0.0
  %982 = vmatpush1.msra.mxu0 0.0
  %983 = vmatprep.subr.mxu0 0.0
  %984 = vmatpush1.msra.mxu0 0.0
  %985 = vmatprep.subr.mxu0 0.0
  %986 = vmatpush1.msra.mxu0 0.0
  %987 = vmatprep.subr.mxu0 0.0
  %988 = vmatpush1.msra.mxu0 0.0
  %989 = vmatprep.subr.mxu0 0.0
  %990 = vmatpush1.msra.mxu0 0.0
  %991 = vmatprep.subr.mxu0 0.0
  %992 = vmatpush1.msra.mxu0 0.0
  %993 = vmatprep.subr.mxu0 0.0
  %994 = vmatpush1.msra.mxu0 0.0
  %995 = vmatprep.subr.mxu0 0.0
  %996 = vmatpush1.msra.mxu0 0.0
  %997 = vmatprep.subr.mxu0 0.0
  %998 = vmatpush1.msra.mxu0 0.0
  %999 = vmatprep.subr.mxu0 0.0
  %1000 = vmatpush1.msra.mxu0 0.0
  %1001 = vmatprep.mubr.f32.mxu0 0.0
  %1002 = vmatmul.mubr.f32.gmra.mrb[0].mxu0 %v708
  %v1003 = vpop.f32.mrb[0].mxu0
  %v1004 = vadd.f32 0.0, %v1003
  %v1005 = vpop.f32.mrb[0].mxu0
  %1006 = vdwg.mxu0
  %v1007 = vadd.f32 %v453, %v791
  %v1008 = vadd.f32 %v455, %v793
  %v1009 = vadd.f32 %v524, %v862
  %v1010 = vadd.f32 %v526, %v864
  %v1011 = vadd.f32 %v595, %v933
  %v1012 = vadd.f32 %v597, %v935
  %v1013 = vadd.f32 %v666, %v1004
  %s1014 = scalar_lea.vmem %s1, 24
  %v1015 = vld [vmem:[%s1014] sm:$0xff]
  %v1016 = vld [vmem:[%s0] sm:$0xff]
  %v1017 = vld [vmem:[%s0 + $0x8] sm:$0xff]
  %v1018 = vld [vmem:[%s0 + $0x10] sm:$0xff]
  %v1019 = vld [vmem:[%s0 + $0x18] sm:$0xff]
  %v1024 = vcombine.high %v1016, %v1016
  %v1025 = vcombine.high %v1017, %v1017
  %v1026 = vcombine.high %v1018, %v1018
  %v1027 = vcombine.high %v1019, %v1019
  %1028 = vrot.lane.b32.xlu0 %v1016, 110
  %v1029 = vpop.permute.xlu0 %1028
  %1030 = vrot.lane.b32.xlu0 %v1024, 110
  %v1031 = vpop.permute.xlu0 %1030
  %1032 = vrot.lane.b32.xlu0 %v1017, 110
  %v1033 = vpop.permute.xlu0 %1032
  %1034 = vrot.lane.b32.xlu0 %v1025, 110
  %v1035 = vpop.permute.xlu0 %1034
  %1036 = vrot.lane.b32.xlu0 %v1018, 110
  %v1037 = vpop.permute.xlu0 %1036
  %1038 = vrot.lane.b32.xlu0 %v1026, 110
  %v1039 = vpop.permute.xlu0 %1038
  %1040 = vrot.lane.b32.xlu0 %v1019, 110
  %v1041 = vpop.permute.xlu0 %1040
  %1042 = vrot.lane.b32.xlu0 %v1027, 110
  %v1043 = vpop.permute.xlu0 %1042
  %vm1044 = vcmask 900096
  %v1045 = vsel %vm1044, %v1029, %v1031
  %v1046 = vsel %vm1044, %v1031, %v1033
  %v1047 = vsel %vm1044, %v1033, %v1035
  %v1048 = vsel %vm1044, %v1035, %v1037
  %v1049 = vsel %vm1044, %v1037, %v1039
  %v1050 = vsel %vm1044, %v1039, %v1041
  %v1051 = vsel %vm1044, %v1041, %v1043
  %v1053 = vsel %vm60, %v1015, 0
  %v1055 = vsel %vm64, %v1045, 0
  %v1057 = vsel %vm64, %v1046, 0
  %v1059 = vsel %vm64, %v1047, 0
  %v1061 = vsel %vm64, %v1048, 0
  %v1063 = vsel %vm64, %v1049, 0
  %v1065 = vsel %vm64, %v1050, 0
  %v1067 = vsel %vm64, %v1051, 0
  %1069 = vmatprep.subr.mxu0 %v1057
  %1070 = vmatpush1.msra.mxu0 %v1055
  %1071 = vmatprep.subr.mxu0 0.0
  %1072 = vmatpush1.msra.mxu0 0.0
  %1073 = vmatprep.subr.mxu0 0.0
  %1074 = vmatpush1.msra.mxu0 0.0
  %1075 = vmatprep.subr.mxu0 0.0
  %1076 = vmatpush1.msra.mxu0 0.0
  %1077 = vmatprep.subr.mxu0 0.0
  %1078 = vmatpush1.msra.mxu0 0.0
  %1079 = vmatprep.subr.mxu0 0.0
  %1080 = vmatpush1.msra.mxu0 0.0
  %1081 = vmatprep.subr.mxu0 0.0
  %1082 = vmatpush1.msra.mxu0 0.0
  %1083 = vmatprep.subr.mxu0 0.0
  %1084 = vmatpush1.msra.mxu0 0.0
  %1085 = vmatprep.subr.mxu0 0.0
  %1086 = vmatpush1.msra.mxu0 0.0
  %1087 = vmatprep.subr.mxu0 0.0
  %1088 = vmatpush1.msra.mxu0 0.0
  %1089 = vmatprep.subr.mxu0 0.0
  %1090 = vmatpush1.msra.mxu0 0.0
  %1091 = vmatprep.subr.mxu0 0.0
  %1092 = vmatpush1.msra.mxu0 0.0
  %1093 = vmatprep.subr.mxu0 0.0
  %1094 = vmatpush1.msra.mxu0 0.0
  %1095 = vmatprep.subr.mxu0 0.0
  %1096 = vmatpush1.msra.mxu0 0.0
  %1097 = vmatprep.subr.mxu0 0.0
  %1098 = vmatpush1.msra.mxu0 0.0
  %1099 = vmatprep.subr.mxu0 0.0
  %1100 = vmatpush1.msra.mxu0 0.0
  %1101 = vmatprep.subr.mxu0 0.0
  %1102 = vmatpush1.msra.mxu0 0.0
  %1103 = vmatprep.subr.mxu0 0.0
  %1104 = vmatpush1.msra.mxu0 0.0
  %1105 = vmatprep.subr.mxu0 0.0
  %1106 = vmatpush1.msra.mxu0 0.0
  %1107 = vmatprep.subr.mxu0 0.0
  %1108 = vmatpush1.msra.mxu0 0.0
  %1109 = vmatprep.subr.mxu0 0.0
  %1110 = vmatpush1.msra.mxu0 0.0
  %1111 = vmatprep.subr.mxu0 0.0
  %1112 = vmatpush1.msra.mxu0 0.0
  %1113 = vmatprep.subr.mxu0 0.0
  %1114 = vmatpush1.msra.mxu0 0.0
  %1115 = vmatprep.subr.mxu0 0.0
  %1116 = vmatpush1.msra.mxu0 0.0
  %1117 = vmatprep.subr.mxu0 0.0
  %1118 = vmatpush1.msra.mxu0 0.0
  %1119 = vmatprep.subr.mxu0 0.0
  %1120 = vmatpush1.msra.mxu0 0.0
  %1121 = vmatprep.subr.mxu0 0.0
  %1122 = vmatpush1.msra.mxu0 0.0
  %1123 = vmatprep.subr.mxu0 0.0
  %1124 = vmatpush1.msra.mxu0 0.0
  %1125 = vmatprep.subr.mxu0 0.0
  %1126 = vmatpush1.msra.mxu0 0.0
  %1127 = vmatprep.subr.mxu0 0.0
  %1128 = vmatpush1.msra.mxu0 0.0
  %1129 = vmatprep.subr.mxu0 0.0
  %1130 = vmatpush1.msra.mxu0 0.0
  %1131 = vmatprep.subr.mxu0 0.0
  %1132 = vmatpush1.msra.mxu0 0.0
  %1133 = vmatprep.mubr.f32.mxu0 0.0
  %1134 = vmatmul.mubr.f32.gmra.mrb[0].mxu0 %v1053
  %v1135 = vpop.f32.mrb[0].mxu0
  %v1136 = vadd.f32 0.0, %v1135
  %v1137 = vpop.f32.mrb[0].mxu0
  %v1138 = vadd.f32 0.0, %v1137
  %1139 = vdwg.mxu0
  %1140 = vmatprep.subr.mxu0 %v1061
  %1141 = vmatpush1.msra.mxu0 %v1059
  %1142 = vmatprep.subr.mxu0 0.0
  %1143 = vmatpush1.msra.mxu0 0.0
  %1144 = vmatprep.subr.mxu0 0.0
  %1145 = vmatpush1.msra.mxu0 0.0
  %1146 = vmatprep.subr.mxu0 0.0
  %1147 = vmatpush1.msra.mxu0 0.0
  %1148 = vmatprep.subr.mxu0 0.0
  %1149 = vmatpush1.msra.mxu0 0.0
  %1150 = vmatprep.subr.mxu0 0.0
  %1151 = vmatpush1.msra.mxu0 0.0
  %1152 = vmatprep.subr.mxu0 0.0
  %1153 = vmatpush1.msra.mxu0 0.0
  %1154 = vmatprep.subr.mxu0 0.0
  %1155 = vmatpush1.msra.mxu0 0.0
  %1156 = vmatprep.subr.mxu0 0.0
  %1157 = vmatpush1.msra.mxu0 0.0
  %1158 = vmatprep.subr.mxu0 0.0
  %1159 = vmatpush1.msra.mxu0 0.0
  %1160 = vmatprep.subr.mxu0 0.0
  %1161 = vmatpush1.msra.mxu0 0.0
  %1162 = vmatprep.subr.mxu0 0.0
  %1163 = vmatpush1.msra.mxu0 0.0
  %1164 = vmatprep.subr.mxu0 0.0
  %1165 = vmatpush1.msra.mxu0 0.0
  %1166 = vmatprep.subr.mxu0 0.0
  %1167 = vmatpush1.msra.mxu0 0.0
  %1168 = vmatprep.subr.mxu0 0.0
  %1169 = vmatpush1.msra.mxu0 0.0
  %1170 = vmatprep.subr.mxu0 0.0
  %1171 = vmatpush1.msra.mxu0 0.0
  %1172 = vmatprep.subr.mxu0 0.0
  %1173 = vmatpush1.msra.mxu0 0.0
  %1174 = vmatprep.subr.mxu0 0.0
  %1175 = vmatpush1.msra.mxu0 0.0
  %1176 = vmatprep.subr.mxu0 0.0
  %1177 = vmatpush1.msra.mxu0 0.0
  %1178 = vmatprep.subr.mxu0 0.0
  %1179 = vmatpush1.msra.mxu0 0.0
  %1180 = vmatprep.subr.mxu0 0.0
  %1181 = vmatpush1.msra.mxu0 0.0
  %1182 = vmatprep.subr.mxu0 0.0
  %1183 = vmatpush1.msra.mxu0 0.0
  %1184 = vmatprep.subr.mxu0 0.0
  %1185 = vmatpush1.msra.mxu0 0.0
  %1186 = vmatprep.subr.mxu0 0.0
  %1187 = vmatpush1.msra.mxu0 0.0
  %1188 = vmatprep.subr.mxu0 0.0
  %1189 = vmatpush1.msra.mxu0 0.0
  %1190 = vmatprep.subr.mxu0 0.0
  %1191 = vmatpush1.msra.mxu0 0.0
  %1192 = vmatprep.subr.mxu0 0.0
  %1193 = vmatpush1.msra.mxu0 0.0
  %1194 = vmatprep.subr.mxu0 0.0
  %1195 = vmatpush1.msra.mxu0 0.0
  %1196 = vmatprep.subr.mxu0 0.0
  %1197 = vmatpush1.msra.mxu0 0.0
  %1198 = vmatprep.subr.mxu0 0.0
  %1199 = vmatpush1.msra.mxu0 0.0
  %1200 = vmatprep.subr.mxu0 0.0
  %1201 = vmatpush1.msra.mxu0 0.0
  %1202 = vmatprep.subr.mxu0 0.0
  %1203 = vmatpush1.msra.mxu0 0.0
  %1204 = vmatprep.mubr.f32.mxu0 0.0
  %1205 = vmatmul.mubr.f32.gmra.mrb[0].mxu0 %v1053
  %v1206 = vpop.f32.mrb[0].mxu0
  %v1207 = vadd.f32 0.0, %v1206
  %v1208 = vpop.f32.mrb[0].mxu0
  %v1209 = vadd.f32 0.0, %v1208
  %1210 = vdwg.mxu0
  %1211 = vmatprep.subr.mxu0 %v1065
  %1212 = vmatpush1.msra.mxu0 %v1063
  %1213 = vmatprep.subr.mxu0 0.0
  %1214 = vmatpush1.msra.mxu0 0.0
  %1215 = vmatprep.subr.mxu0 0.0
  %1216 = vmatpush1.msra.mxu0 0.0
  %1217 = vmatprep.subr.mxu0 0.0
  %1218 = vmatpush1.msra.mxu0 0.0
  %1219 = vmatprep.subr.mxu0 0.0
  %1220 = vmatpush1.msra.mxu0 0.0
  %1221 = vmatprep.subr.mxu0 0.0
  %1222 = vmatpush1.msra.mxu0 0.0
  %1223 = vmatprep.subr.mxu0 0.0
  %1224 = vmatpush1.msra.mxu0 0.0
  %1225 = vmatprep.subr.mxu0 0.0
  %1226 = vmatpush1.msra.mxu0 0.0
  %1227 = vmatprep.subr.mxu0 0.0
  %1228 = vmatpush1.msra.mxu0 0.0
  %1229 = vmatprep.subr.mxu0 0.0
  %1230 = vmatpush1.msra.mxu0 0.0
  %1231 = vmatprep.subr.mxu0 0.0
  %1232 = vmatpush1.msra.mxu0 0.0
  %1233 = vmatprep.subr.mxu0 0.0
  %1234 = vmatpush1.msra.mxu0 0.0
  %1235 = vmatprep.subr.mxu0 0.0
  %1236 = vmatpush1.msra.mxu0 0.0
  %1237 = vmatprep.subr.mxu0 0.0
  %1238 = vmatpush1.msra.mxu0 0.0
  %1239 = vmatprep.subr.mxu0 0.0
  %1240 = vmatpush1.msra.mxu0 0.0
  %1241 = vmatprep.subr.mxu0 0.0
  %1242 = vmatpush1.msra.mxu0 0.0
  %1243 = vmatprep.subr.mxu0 0.0
  %1244 = vmatpush1.msra.mxu0 0.0
  %1245 = vmatprep.subr.mxu0 0.0
  %1246 = vmatpush1.msra.mxu0 0.0
  %1247 = vmatprep.subr.mxu0 0.0
  %1248 = vmatpush1.msra.mxu0 0.0
  %1249 = vmatprep.subr.mxu0 0.0
  %1250 = vmatpush1.msra.mxu0 0.0
  %1251 = vmatprep.subr.mxu0 0.0
  %1252 = vmatpush1.msra.mxu0 0.0
  %1253 = vmatprep.subr.mxu0 0.0
  %1254 = vmatpush1.msra.mxu0 0.0
  %1255 = vmatprep.subr.mxu0 0.0
  %1256 = vmatpush1.msra.mxu0 0.0
  %1257 = vmatprep.subr.mxu0 0.0
  %1258 = vmatpush1.msra.mxu0 0.0
  %1259 = vmatprep.subr.mxu0 0.0
  %1260 = vmatpush1.msra.mxu0 0.0
  %1261 = vmatprep.subr.mxu0 0.0
  %1262 = vmatpush1.msra.mxu0 0.0
  %1263 = vmatprep.subr.mxu0 0.0
  %1264 = vmatpush1.msra.mxu0 0.0
  %1265 = vmatprep.subr.mxu0 0.0
  %1266 = vmatpush1.msra.mxu0 0.0
  %1267 = vmatprep.subr.mxu0 0.0
  %1268 = vmatpush1.msra.mxu0 0.0
  %1269 = vmatprep.subr.mxu0 0.0
  %1270 = vmatpush1.msra.mxu0 0.0
  %1271 = vmatprep.subr.mxu0 0.0
  %1272 = vmatpush1.msra.mxu0 0.0
  %1273 = vmatprep.subr.mxu0 0.0
  %1274 = vmatpush1.msra.mxu0 0.0
  %1275 = vmatprep.mubr.f32.mxu0 0.0
  %1276 = vmatmul.mubr.f32.gmra.mrb[0].mxu0 %v1053
  %v1277 = vpop.f32.mrb[0].mxu0
  %v1278 = vadd.f32 0.0, %v1277
  %v1279 = vpop.f32.mrb[0].mxu0
  %v1280 = vadd.f32 0.0, %v1279
  %1281 = vdwg.mxu0
  %1282 = vmatprep.subr.mxu0 0.0
  %1283 = vmatpush1.msra.mxu0 %v1067
  %1284 = vmatprep.subr.mxu0 0.0
  %1285 = vmatpush1.msra.mxu0 0.0
  %1286 = vmatprep.subr.mxu0 0.0
  %1287 = vmatpush1.msra.mxu0 0.0
  %1288 = vmatprep.subr.mxu0 0.0
  %1289 = vmatpush1.msra.mxu0 0.0
  %1290 = vmatprep.subr.mxu0 0.0
  %1291 = vmatpush1.msra.mxu0 0.0
  %1292 = vmatprep.subr.mxu0 0.0
  %1293 = vmatpush1.msra.mxu0 0.0
  %1294 = vmatprep.subr.mxu0 0.0
  %1295 = vmatpush1.msra.mxu0 0.0
  %1296 = vmatprep.subr.mxu0 0.0
  %1297 = vmatpush1.msra.mxu0 0.0
  %1298 = vmatprep.subr.mxu0 0.0
  %1299 = vmatpush1.msra.mxu0 0.0
  %1300 = vmatprep.subr.mxu0 0.0
  %1301 = vmatpush1.msra.mxu0 0.0
  %1302 = vmatprep.subr.mxu0 0.0
  %1303 = vmatpush1.msra.mxu0 0.0
  %1304 = vmatprep.subr.mxu0 0.0
  %1305 = vmatpush1.msra.mxu0 0.0
  %1306 = vmatprep.subr.mxu0 0.0
  %1307 = vmatpush1.msra.mxu0 0.0
  %1308 = vmatprep.subr.mxu0 0.0
  %1309 = vmatpush1.msra.mxu0 0.0
  %1310 = vmatprep.subr.mxu0 0.0
  %1311 = vmatpush1.msra.mxu0 0.0
  %1312 = vmatprep.subr.mxu0 0.0
  %1313 = vmatpush1.msra.mxu0 0.0
  %1314 = vmatprep.subr.mxu0 0.0
  %1315 = vmatpush1.msra.mxu0 0.0
  %1316 = vmatprep.subr.mxu0 0.0
  %1317 = vmatpush1.msra.mxu0 0.0
  %1318 = vmatprep.subr.mxu0 0.0
  %1319 = vmatpush1.msra.mxu0 0.0
  %1320 = vmatprep.subr.mxu0 0.0
  %1321 = vmatpush1.msra.mxu0 0.0
  %1322 = vmatprep.subr.mxu0 0.0
  %1323 = vmatpush1.msra.mxu0 0.0
  %1324 = vmatprep.subr.mxu0 0.0
  %1325 = vmatpush1.msra.mxu0 0.0
  %1326 = vmatprep.subr.mxu0 0.0
  %1327 = vmatpush1.msra.mxu0 0.0
  %1328 = vmatprep.subr.mxu0 0.0
  %1329 = vmatpush1.msra.mxu0 0.0
  %1330 = vmatprep.subr.mxu0 0.0
  %1331 = vmatpush1.msra.mxu0 0.0
  %1332 = vmatprep.subr.mxu0 0.0
  %1333 = vmatpush1.msra.mxu0 0.0
  %1334 = vmatprep.subr.mxu0 0.0
  %1335 = vmatpush1.msra.mxu0 0.0
  %1336 = vmatprep.subr.mxu0 0.0
  %1337 = vmatpush1.msra.mxu0 0.0
  %1338 = vmatprep.subr.mxu0 0.0
  %1339 = vmatpush1.msra.mxu0 0.0
  %1340 = vmatprep.subr.mxu0 0.0
  %1341 = vmatpush1.msra.mxu0 0.0
  %1342 = vmatprep.subr.mxu0 0.0
  %1343 = vmatpush1.msra.mxu0 0.0
  %1344 = vmatprep.subr.mxu0 0.0
  %1345 = vmatpush1.msra.mxu0 0.0
  %1346 = vmatprep.mubr.f32.mxu0 0.0
  %1347 = vmatmul.mubr.f32.gmra.mrb[0].mxu0 %v1053
  %v1348 = vpop.f32.mrb[0].mxu0
  %v1349 = vadd.f32 0.0, %v1348
  %v1350 = vpop.f32.mrb[0].mxu0
  %1351 = vdwg.mxu0
  %v1352 = vadd.f32 %v1007, %v1136
  %v1353 = vadd.f32 %v1008, %v1138
  %v1354 = vadd.f32 %v1009, %v1207
  %v1355 = vadd.f32 %v1010, %v1209
  %v1356 = vadd.f32 %v1011, %v1278
  %v1357 = vadd.f32 %v1012, %v1280
  %v1358 = vadd.f32 %v1013, %v1349
  %s1359 = scalar_lea.vmem %s1, 32
  %v1360 = vld [vmem:[%s1359] sm:$0xff]
  %v1361 = vld [vmem:[%s0] sm:$0xff]
  %v1362 = vld [vmem:[%s0 + $0x8] sm:$0xff]
  %v1363 = vld [vmem:[%s0 + $0x10] sm:$0xff]
  %v1364 = vld [vmem:[%s0 + $0x18] sm:$0xff]
  %v1369 = vcombine.high %v1361, %v1361
  %v1370 = vcombine.high %v1362, %v1362
  %v1371 = vcombine.high %v1363, %v1363
  %v1372 = vcombine.high %v1364, %v1364
  %1373 = vrot.lane.b32.xlu0 %v1361, 109
  %v1374 = vpop.permute.xlu0 %1373
  %1375 = vrot.lane.b32.xlu0 %v1369, 109
  %v1376 = vpop.permute.xlu0 %1375
  %1377 = vrot.lane.b32.xlu0 %v1362, 109
  %v1378 = vpop.permute.xlu0 %1377
  %1379 = vrot.lane.b32.xlu0 %v1370, 109
  %v1380 = vpop.permute.xlu0 %1379
  %1381 = vrot.lane.b32.xlu0 %v1363, 109
  %v1382 = vpop.permute.xlu0 %1381
  %1383 = vrot.lane.b32.xlu0 %v1371, 109
  %v1384 = vpop.permute.xlu0 %1383
  %1385 = vrot.lane.b32.xlu0 %v1364, 109
  %v1386 = vpop.permute.xlu0 %1385
  %1387 = vrot.lane.b32.xlu0 %v1372, 109
  %v1388 = vpop.permute.xlu0 %1387
  %vm1389 = vcmask 891904
  %v1390 = vsel %vm1389, %v1374, %v1376
  %v1391 = vsel %vm1389, %v1376, %v1378
  %v1392 = vsel %vm1389, %v1378, %v1380
  %v1393 = vsel %vm1389, %v1380, %v1382
  %v1394 = vsel %vm1389, %v1382, %v1384
  %v1395 = vsel %vm1389, %v1384, %v1386
  %v1396 = vsel %vm1389, %v1386, %v1388
  %v1398 = vsel %vm60, %v1360, 0
  %v1400 = vsel %vm64, %v1390, 0
  %v1402 = vsel %vm64, %v1391, 0
  %v1404 = vsel %vm64, %v1392, 0
  %v1406 = vsel %vm64, %v1393, 0
  %v1408 = vsel %vm64, %v1394, 0
  %v1410 = vsel %vm64, %v1395, 0
  %v1412 = vsel %vm64, %v1396, 0
  %1414 = vmatprep.subr.mxu0 %v1402
  %1415 = vmatpush1.msra.mxu0 %v1400
  %1416 = vmatprep.subr.mxu0 0.0
  %1417 = vmatpush1.msra.mxu0 0.0
  %1418 = vmatprep.subr.mxu0 0.0
  %1419 = vmatpush1.msra.mxu0 0.0
  %1420 = vmatprep.subr.mxu0 0.0
  %1421 = vmatpush1.msra.mxu0 0.0
  %1422 = vmatprep.subr.mxu0 0.0
  %1423 = vmatpush1.msra.mxu0 0.0
  %1424 = vmatprep.subr.mxu0 0.0
  %1425 = vmatpush1.msra.mxu0 0.0
  %1426 = vmatprep.subr.mxu0 0.0
  %1427 = vmatpush1.msra.mxu0 0.0
  %1428 = vmatprep.subr.mxu0 0.0
  %1429 = vmatpush1.msra.mxu0 0.0
  %1430 = vmatprep.subr.mxu0 0.0
  %1431 = vmatpush1.msra.mxu0 0.0
  %1432 = vmatprep.subr.mxu0 0.0
  %1433 = vmatpush1.msra.mxu0 0.0
  %1434 = vmatprep.subr.mxu0 0.0
  %1435 = vmatpush1.msra.mxu0 0.0
  %1436 = vmatprep.subr.mxu0 0.0
  %1437 = vmatpush1.msra.mxu0 0.0
  %1438 = vmatprep.subr.mxu0 0.0
  %1439 = vmatpush1.msra.mxu0 0.0
  %1440 = vmatprep.subr.mxu0 0.0
  %1441 = vmatpush1.msra.mxu0 0.0
  %1442 = vmatprep.subr.mxu0 0.0
  %1443 = vmatpush1.msra.mxu0 0.0
  %1444 = vmatprep.subr.mxu0 0.0
  %1445 = vmatpush1.msra.mxu0 0.0
  %1446 = vmatprep.subr.mxu0 0.0
  %1447 = vmatpush1.msra.mxu0 0.0
  %1448 = vmatprep.subr.mxu0 0.0
  %1449 = vmatpush1.msra.mxu0 0.0
  %1450 = vmatprep.subr.mxu0 0.0
  %1451 = vmatpush1.msra.mxu0 0.0
  %1452 = vmatprep.subr.mxu0 0.0
  %1453 = vmatpush1.msra.mxu0 0.0
  %1454 = vmatprep.subr.mxu0 0.0
  %1455 = vmatpush1.msra.mxu0 0.0
  %1456 = vmatprep.subr.mxu0 0.0
  %1457 = vmatpush1.msra.mxu0 0.0
  %1458 = vmatprep.subr.mxu0 0.0
  %1459 = vmatpush1.msra.mxu0 0.0
  %1460 = vmatprep.subr.mxu0 0.0
  %1461 = vmatpush1.msra.mxu0 0.0
  %1462 = vmatprep.subr.mxu0 0.0
  %1463 = vmatpush1.msra.mxu0 0.0
  %1464 = vmatprep.subr.mxu0 0.0
  %1465 = vmatpush1.msra.mxu0 0.0
  %1466 = vmatprep.subr.mxu0 0.0
  %1467 = vmatpush1.msra.mxu0 0.0
  %1468 = vmatprep.subr.mxu0 0.0
  %1469 = vmatpush1.msra.mxu0 0.0
  %1470 = vmatprep.subr.mxu0 0.0
  %1471 = vmatpush1.msra.mxu0 0.0
  %1472 = vmatprep.subr.mxu0 0.0
  %1473 = vmatpush1.msra.mxu0 0.0
  %1474 = vmatprep.subr.mxu0 0.0
  %1475 = vmatpush1.msra.mxu0 0.0
  %1476 = vmatprep.subr.mxu0 0.0
  %1477 = vmatpush1.msra.mxu0 0.0
  %1478 = vmatprep.mubr.f32.mxu0 0.0
  %1479 = vmatmul.mubr.f32.gmra.mrb[0].mxu0 %v1398
  %v1480 = vpop.f32.mrb[0].mxu0
  %v1481 = vadd.f32 0.0, %v1480
  %v1482 = vpop.f32.mrb[0].mxu0
  %v1483 = vadd.f32 0.0, %v1482
  %1484 = vdwg.mxu0
  %1485 = vmatprep.subr.mxu0 %v1406
  %1486 = vmatpush1.msra.mxu0 %v1404
  %1487 = vmatprep.subr.mxu0 0.0
  %1488 = vmatpush1.msra.mxu0 0.0
  %1489 = vmatprep.subr.mxu0 0.0
  %1490 = vmatpush1.msra.mxu0 0.0
  %1491 = vmatprep.subr.mxu0 0.0
  %1492 = vmatpush1.msra.mxu0 0.0
  %1493 = vmatprep.subr.mxu0 0.0
  %1494 = vmatpush1.msra.mxu0 0.0
  %1495 = vmatprep.subr.mxu0 0.0
  %1496 = vmatpush1.msra.mxu0 0.0
  %1497 = vmatprep.subr.mxu0 0.0
  %1498 = vmatpush1.msra.mxu0 0.0
  %1499 = vmatprep.subr.mxu0 0.0
  %1500 = vmatpush1.msra.mxu0 0.0
  %1501 = vmatprep.subr.mxu0 0.0
  %1502 = vmatpush1.msra.mxu0 0.0
  %1503 = vmatprep.subr.mxu0 0.0
  %1504 = vmatpush1.msra.mxu0 0.0
  %1505 = vmatprep.subr.mxu0 0.0
  %1506 = vmatpush1.msra.mxu0 0.0
  %1507 = vmatprep.subr.mxu0 0.0
  %1508 = vmatpush1.msra.mxu0 0.0
  %1509 = vmatprep.subr.mxu0 0.0
  %1510 = vmatpush1.msra.mxu0 0.0
  %1511 = vmatprep.subr.mxu0 0.0
  %1512 = vmatpush1.msra.mxu0 0.0
  %1513 = vmatprep.subr.mxu0 0.0
  %1514 = vmatpush1.msra.mxu0 0.0
  %1515 = vmatprep.subr.mxu0 0.0
  %1516 = vmatpush1.msra.mxu0 0.0
  %1517 = vmatprep.subr.mxu0 0.0
  %1518 = vmatpush1.msra.mxu0 0.0
  %1519 = vmatprep.subr.mxu0 0.0
  %1520 = vmatpush1.msra.mxu0 0.0
  %1521 = vmatprep.subr.mxu0 0.0
  %1522 = vmatpush1.msra.mxu0 0.0
  %1523 = vmatprep.subr.mxu0 0.0
  %1524 = vmatpush1.msra.mxu0 0.0
  %1525 = vmatprep.subr.mxu0 0.0
  %1526 = vmatpush1.msra.mxu0 0.0
  %1527 = vmatprep.subr.mxu0 0.0
  %1528 = vmatpush1.msra.mxu0 0.0
  %1529 = vmatprep.subr.mxu0 0.0
  %1530 = vmatpush1.msra.mxu0 0.0
  %1531 = vmatprep.subr.mxu0 0.0
  %1532 = vmatpush1.msra.mxu0 0.0
  %1533 = vmatprep.subr.mxu0 0.0
  %1534 = vmatpush1.msra.mxu0 0.0
  %1535 = vmatprep.subr.mxu0 0.0
  %1536 = vmatpush1.msra.mxu0 0.0
  %1537 = vmatprep.subr.mxu0 0.0
  %1538 = vmatpush1.msra.mxu0 0.0
  %1539 = vmatprep.subr.mxu0 0.0
  %1540 = vmatpush1.msra.mxu0 0.0
  %1541 = vmatprep.subr.mxu0 0.0
  %1542 = vmatpush1.msra.mxu0 0.0
  %1543 = vmatprep.subr.mxu0 0.0
  %1544 = vmatpush1.msra.mxu0 0.0
  %1545 = vmatprep.subr.mxu0 0.0
  %1546 = vmatpush1.msra.mxu0 0.0
  %1547 = vmatprep.subr.mxu0 0.0
  %1548 = vmatpush1.msra.mxu0 0.0
  %1549 = vmatprep.mubr.f32.mxu0 0.0
  %1550 = vmatmul.mubr.f32.gmra.mrb[0].mxu0 %v1398
  %v1551 = vpop.f32.mrb[0].mxu0
  %v1552 = vadd.f32 0.0, %v1551
  %v1553 = vpop.f32.mrb[0].mxu0
  %v1554 = vadd.f32 0.0, %v1553
  %1555 = vdwg.mxu0
  %1556 = vmatprep.subr.mxu0 %v1410
  %1557 = vmatpush1.msra.mxu0 %v1408
  %1558 = vmatprep.subr.mxu0 0.0
  %1559 = vmatpush1.msra.mxu0 0.0
  %1560 = vmatprep.subr.mxu0 0.0
  %1561 = vmatpush1.msra.mxu0 0.0
  %1562 = vmatprep.subr.mxu0 0.0
  %1563 = vmatpush1.msra.mxu0 0.0
  %1564 = vmatprep.subr.mxu0 0.0
  %1565 = vmatpush1.msra.mxu0 0.0
  %1566 = vmatprep.subr.mxu0 0.0
  %1567 = vmatpush1.msra.mxu0 0.0
  %1568 = vmatprep.subr.mxu0 0.0
  %1569 = vmatpush1.msra.mxu0 0.0
  %1570 = vmatprep.subr.mxu0 0.0
  %1571 = vmatpush1.msra.mxu0 0.0
  %1572 = vmatprep.subr.mxu0 0.0
  %1573 = vmatpush1.msra.mxu0 0.0
  %1574 = vmatprep.subr.mxu0 0.0
  %1575 = vmatpush1.msra.mxu0 0.0
  %1576 = vmatprep.subr.mxu0 0.0
  %1577 = vmatpush1.msra.mxu0 0.0
  %1578 = vmatprep.subr.mxu0 0.0
  %1579 = vmatpush1.msra.mxu0 0.0
  %1580 = vmatprep.subr.mxu0 0.0
  %1581 = vmatpush1.msra.mxu0 0.0
  %1582 = vmatprep.subr.mxu0 0.0
  %1583 = vmatpush1.msra.mxu0 0.0
  %1584 = vmatprep.subr.mxu0 0.0
  %1585 = vmatpush1.msra.mxu0 0.0
  %1586 = vmatprep.subr.mxu0 0.0
  %1587 = vmatpush1.msra.mxu0 0.0
  %1588 = vmatprep.subr.mxu0 0.0
  %1589 = vmatpush1.msra.mxu0 0.0
  %1590 = vmatprep.subr.mxu0 0.0
  %1591 = vmatpush1.msra.mxu0 0.0
  %1592 = vmatprep.subr.mxu0 0.0
  %1593 = vmatpush1.msra.mxu0 0.0
  %1594 = vmatprep.subr.mxu0 0.0
  %1595 = vmatpush1.msra.mxu0 0.0
  %1596 = vmatprep.subr.mxu0 0.0
  %1597 = vmatpush1.msra.mxu0 0.0
  %1598 = vmatprep.subr.mxu0 0.0
  %1599 = vmatpush1.msra.mxu0 0.0
  %1600 = vmatprep.subr.mxu0 0.0
  %1601 = vmatpush1.msra.mxu0 0.0
  %1602 = vmatprep.subr.mxu0 0.0
  %1603 = vmatpush1.msra.mxu0 0.0
  %1604 = vmatprep.subr.mxu0 0.0
  %1605 = vmatpush1.msra.mxu0 0.0
  %1606 = vmatprep.subr.mxu0 0.0
  %1607 = vmatpush1.msra.mxu0 0.0
  %1608 = vmatprep.subr.mxu0 0.0
  %1609 = vmatpush1.msra.mxu0 0.0
  %1610 = vmatprep.subr.mxu0 0.0
  %1611 = vmatpush1.msra.mxu0 0.0
  %1612 = vmatprep.subr.mxu0 0.0
  %1613 = vmatpush1.msra.mxu0 0.0
  %1614 = vmatprep.subr.mxu0 0.0
  %1615 = vmatpush1.msra.mxu0 0.0
  %1616 = vmatprep.subr.mxu0 0.0
  %1617 = vmatpush1.msra.mxu0 0.0
  %1618 = vmatprep.subr.mxu0 0.0
  %1619 = vmatpush1.msra.mxu0 0.0
  %1620 = vmatprep.mubr.f32.mxu0 0.0
  %1621 = vmatmul.mubr.f32.gmra.mrb[0].mxu0 %v1398
  %v1622 = vpop.f32.mrb[0].mxu0
  %v1623 = vadd.f32 0.0, %v1622
  %v1624 = vpop.f32.mrb[0].mxu0
  %v1625 = vadd.f32 0.0, %v1624
  %1626 = vdwg.mxu0
  %1627 = vmatprep.subr.mxu0 0.0
  %1628 = vmatpush1.msra.mxu0 %v1412
  %1629 = vmatprep.subr.mxu0 0.0
  %1630 = vmatpush1.msra.mxu0 0.0
  %1631 = vmatprep.subr.mxu0 0.0
  %1632 = vmatpush1.msra.mxu0 0.0
  %1633 = vmatprep.subr.mxu0 0.0
  %1634 = vmatpush1.msra.mxu0 0.0
  %1635 = vmatprep.subr.mxu0 0.0
  %1636 = vmatpush1.msra.mxu0 0.0
  %1637 = vmatprep.subr.mxu0 0.0
  %1638 = vmatpush1.msra.mxu0 0.0
  %1639 = vmatprep.subr.mxu0 0.0
  %1640 = vmatpush1.msra.mxu0 0.0
  %1641 = vmatprep.subr.mxu0 0.0
  %1642 = vmatpush1.msra.mxu0 0.0
  %1643 = vmatprep.subr.mxu0 0.0
  %1644 = vmatpush1.msra.mxu0 0.0
  %1645 = vmatprep.subr.mxu0 0.0
  %1646 = vmatpush1.msra.mxu0 0.0
  %1647 = vmatprep.subr.mxu0 0.0
  %1648 = vmatpush1.msra.mxu0 0.0
  %1649 = vmatprep.subr.mxu0 0.0
  %1650 = vmatpush1.msra.mxu0 0.0
  %1651 = vmatprep.subr.mxu0 0.0
  %1652 = vmatpush1.msra.mxu0 0.0
  %1653 = vmatprep.subr.mxu0 0.0
  %1654 = vmatpush1.msra.mxu0 0.0
  %1655 = vmatprep.subr.mxu0 0.0
  %1656 = vmatpush1.msra.mxu0 0.0
  %1657 = vmatprep.subr.mxu0 0.0
  %1658 = vmatpush1.msra.mxu0 0.0
  %1659 = vmatprep.subr.mxu0 0.0
  %1660 = vmatpush1.msra.mxu0 0.0
  %1661 = vmatprep.subr.mxu0 0.0
  %1662 = vmatpush1.msra.mxu0 0.0
  %1663 = vmatprep.subr.mxu0 0.0
  %1664 = vmatpush1.msra.mxu0 0.0
  %1665 = vmatprep.subr.mxu0 0.0
  %1666 = vmatpush1.msra.mxu0 0.0
  %1667 = vmatprep.subr.mxu0 0.0
  %1668 = vmatpush1.msra.mxu0 0.0
  %1669 = vmatprep.subr.mxu0 0.0
  %1670 = vmatpush1.msra.mxu0 0.0
  %1671 = vmatprep.subr.mxu0 0.0
  %1672 = vmatpush1.msra.mxu0 0.0
  %1673 = vmatprep.subr.mxu0 0.0
  %1674 = vmatpush1.msra.mxu0 0.0
  %1675 = vmatprep.subr.mxu0 0.0
  %1676 = vmatpush1.msra.mxu0 0.0
  %1677 = vmatprep.subr.mxu0 0.0
  %1678 = vmatpush1.msra.mxu0 0.0
  %1679 = vmatprep.subr.mxu0 0.0
  %1680 = vmatpush1.msra.mxu0 0.0
  %1681 = vmatprep.subr.mxu0 0.0
  %1682 = vmatpush1.msra.mxu0 0.0
  %1683 = vmatprep.subr.mxu0 0.0
  %1684 = vmatpush1.msra.mxu0 0.0
  %1685 = vmatprep.subr.mxu0 0.0
  %1686 = vmatpush1.msra.mxu0 0.0
  %1687 = vmatprep.subr.mxu0 0.0
  %1688 = vmatpush1.msra.mxu0 0.0
  %1689 = vmatprep.subr.mxu0 0.0
  %1690 = vmatpush1.msra.mxu0 0.0
  %1691 = vmatprep.mubr.f32.mxu0 0.0
  %1692 = vmatmul.mubr.f32.gmra.mrb[0].mxu0 %v1398
  %v1693 = vpop.f32.mrb[0].mxu0
  %v1694 = vadd.f32 0.0, %v1693
  %v1695 = vpop.f32.mrb[0].mxu0
  %1696 = vdwg.mxu0
  %v1697 = vadd.f32 %v1352, %v1481
  %v1698 = vadd.f32 %v1353, %v1483
  %v1699 = vadd.f32 %v1354, %v1552
  %v1700 = vadd.f32 %v1355, %v1554
  %v1701 = vadd.f32 %v1356, %v1623
  %v1702 = vadd.f32 %v1357, %v1625
  %v1703 = vadd.f32 %v1358, %v1694
  %s1704 = scalar_lea.vmem %s1, 40
  %v1705 = vld [vmem:[%s1704] sm:$0xff]
  %v1706 = vld [vmem:[%s0] sm:$0xff]
  %v1707 = vld [vmem:[%s0 + $0x8] sm:$0xff]
  %v1708 = vld [vmem:[%s0 + $0x10] sm:$0xff]
  %v1709 = vld [vmem:[%s0 + $0x18] sm:$0xff]
  %v1714 = vcombine.high %v1706, %v1706
  %v1715 = vcombine.high %v1707, %v1707
  %v1716 = vcombine.high %v1708, %v1708
  %v1717 = vcombine.high %v1709, %v1709
  %1718 = vrot.lane.b32.xlu0 %v1706, 108
  %v1719 = vpop.permute.xlu0 %1718
  %1720 = vrot.lane.b32.xlu0 %v1714, 108
  %v1721 = vpop.permute.xlu0 %1720
  %1722 = vrot.lane.b32.xlu0 %v1707, 108
  %v1723 = vpop.permute.xlu0 %1722
  %1724 = vrot.lane.b32.xlu0 %v1715, 108
  %v1725 = vpop.permute.xlu0 %1724
  %1726 = vrot.lane.b32.xlu0 %v1708, 108
  %v1727 = vpop.permute.xlu0 %1726
  %1728 = vrot.lane.b32.xlu0 %v1716, 108
  %v1729 = vpop.permute.xlu0 %1728
  %1730 = vrot.lane.b32.xlu0 %v1709, 108
  %v1731 = vpop.permute.xlu0 %1730
  %1732 = vrot.lane.b32.xlu0 %v1717, 108
  %v1733 = vpop.permute.xlu0 %1732
  %vm1734 = vcmask 883712
  %v1735 = vsel %vm1734, %v1719, %v1721
  %v1736 = vsel %vm1734, %v1721, %v1723
  %v1737 = vsel %vm1734, %v1723, %v1725
  %v1738 = vsel %vm1734, %v1725, %v1727
  %v1739 = vsel %vm1734, %v1727, %v1729
  %v1740 = vsel %vm1734, %v1729, %v1731
  %v1741 = vsel %vm1734, %v1731, %v1733
  %v1743 = vsel %vm60, %v1705, 0
  %v1745 = vsel %vm64, %v1735, 0
  %v1747 = vsel %vm64, %v1736, 0
  %v1749 = vsel %vm64, %v1737, 0
  %v1751 = vsel %vm64, %v1738, 0
  %v1753 = vsel %vm64, %v1739, 0
  %v1755 = vsel %vm64, %v1740, 0
  %v1757 = vsel %vm64, %v1741, 0
  %1759 = vmatprep.subr.mxu0 %v1747
  %1760 = vmatpush1.msra.mxu0 %v1745
  %1761 = vmatprep.subr.mxu0 0.0
  %1762 = vmatpush1.msra.mxu0 0.0
  %1763 = vmatprep.subr.mxu0 0.0
  %1764 = vmatpush1.msra.mxu0 0.0
  %1765 = vmatprep.subr.mxu0 0.0
  %1766 = vmatpush1.msra.mxu0 0.0
  %1767 = vmatprep.subr.mxu0 0.0
  %1768 = vmatpush1.msra.mxu0 0.0
  %1769 = vmatprep.subr.mxu0 0.0
  %1770 = vmatpush1.msra.mxu0 0.0
  %1771 = vmatprep.subr.mxu0 0.0
  %1772 = vmatpush1.msra.mxu0 0.0
  %1773 = vmatprep.subr.mxu0 0.0
  %1774 = vmatpush1.msra.mxu0 0.0
  %1775 = vmatprep.subr.mxu0 0.0
  %1776 = vmatpush1.msra.mxu0 0.0
  %1777 = vmatprep.subr.mxu0 0.0
  %1778 = vmatpush1.msra.mxu0 0.0
  %1779 = vmatprep.subr.mxu0 0.0
  %1780 = vmatpush1.msra.mxu0 0.0
  %1781 = vmatprep.subr.mxu0 0.0
  %1782 = vmatpush1.msra.mxu0 0.0
  %1783 = vmatprep.subr.mxu0 0.0
  %1784 = vmatpush1.msra.mxu0 0.0
  %1785 = vmatprep.subr.mxu0 0.0
  %1786 = vmatpush1.msra.mxu0 0.0
  %1787 = vmatprep.subr.mxu0 0.0
  %1788 = vmatpush1.msra.mxu0 0.0
  %1789 = vmatprep.subr.mxu0 0.0
  %1790 = vmatpush1.msra.mxu0 0.0
  %1791 = vmatprep.subr.mxu0 0.0
  %1792 = vmatpush1.msra.mxu0 0.0
  %1793 = vmatprep.subr.mxu0 0.0
  %1794 = vmatpush1.msra.mxu0 0.0
  %1795 = vmatprep.subr.mxu0 0.0
  %1796 = vmatpush1.msra.mxu0 0.0
  %1797 = vmatprep.subr.mxu0 0.0
  %1798 = vmatpush1.msra.mxu0 0.0
  %1799 = vmatprep.subr.mxu0 0.0
  %1800 = vmatpush1.msra.mxu0 0.0
  %1801 = vmatprep.subr.mxu0 0.0
  %1802 = vmatpush1.msra.mxu0 0.0
  %1803 = vmatprep.subr.mxu0 0.0
  %1804 = vmatpush1.msra.mxu0 0.0
  %1805 = vmatprep.subr.mxu0 0.0
  %1806 = vmatpush1.msra.mxu0 0.0
  %1807 = vmatprep.subr.mxu0 0.0
  %1808 = vmatpush1.msra.mxu0 0.0
  %1809 = vmatprep.subr.mxu0 0.0
  %1810 = vmatpush1.msra.mxu0 0.0
  %1811 = vmatprep.subr.mxu0 0.0
  %1812 = vmatpush1.msra.mxu0 0.0
  %1813 = vmatprep.subr.mxu0 0.0
  %1814 = vmatpush1.msra.mxu0 0.0
  %1815 = vmatprep.subr.mxu0 0.0
  %1816 = vmatpush1.msra.mxu0 0.0
  %1817 = vmatprep.subr.mxu0 0.0
  %1818 = vmatpush1.msra.mxu0 0.0
  %1819 = vmatprep.subr.mxu0 0.0
  %1820 = vmatpush1.msra.mxu0 0.0
  %1821 = vmatprep.subr.mxu0 0.0
  %1822 = vmatpush1.msra.mxu0 0.0
  %1823 = vmatprep.mubr.f32.mxu0 0.0
  %1824 = vmatmul.mubr.f32.gmra.mrb[0].mxu0 %v1743
  %v1825 = vpop.f32.mrb[0].mxu0
  %v1826 = vadd.f32 0.0, %v1825
  %v1827 = vpop.f32.mrb[0].mxu0
  %v1828 = vadd.f32 0.0, %v1827
  %1829 = vdwg.mxu0
  %1830 = vmatprep.subr.mxu0 %v1751
  %1831 = vmatpush1.msra.mxu0 %v1749
  %1832 = vmatprep.subr.mxu0 0.0
  %1833 = vmatpush1.msra.mxu0 0.0
  %1834 = vmatprep.subr.mxu0 0.0
  %1835 = vmatpush1.msra.mxu0 0.0
  %1836 = vmatprep.subr.mxu0 0.0
  %1837 = vmatpush1.msra.mxu0 0.0
  %1838 = vmatprep.subr.mxu0 0.0
  %1839 = vmatpush1.msra.mxu0 0.0
  %1840 = vmatprep.subr.mxu0 0.0
  %1841 = vmatpush1.msra.mxu0 0.0
  %1842 = vmatprep.subr.mxu0 0.0
  %1843 = vmatpush1.msra.mxu0 0.0
  %1844 = vmatprep.subr.mxu0 0.0
  %1845 = vmatpush1.msra.mxu0 0.0
  %1846 = vmatprep.subr.mxu0 0.0
  %1847 = vmatpush1.msra.mxu0 0.0
  %1848 = vmatprep.subr.mxu0 0.0
  %1849 = vmatpush1.msra.mxu0 0.0
  %1850 = vmatprep.subr.mxu0 0.0
  %1851 = vmatpush1.msra.mxu0 0.0
  %1852 = vmatprep.subr.mxu0 0.0
  %1853 = vmatpush1.msra.mxu0 0.0
  %1854 = vmatprep.subr.mxu0 0.0
  %1855 = vmatpush1.msra.mxu0 0.0
  %1856 = vmatprep.subr.mxu0 0.0
  %1857 = vmatpush1.msra.mxu0 0.0
  %1858 = vmatprep.subr.mxu0 0.0
  %1859 = vmatpush1.msra.mxu0 0.0
  %1860 = vmatprep.subr.mxu0 0.0
  %1861 = vmatpush1.msra.mxu0 0.0
  %1862 = vmatprep.subr.mxu0 0.0
  %1863 = vmatpush1.msra.mxu0 0.0
  %1864 = vmatprep.subr.mxu0 0.0
  %1865 = vmatpush1.msra.mxu0 0.0
  %1866 = vmatprep.subr.mxu0 0.0
  %1867 = vmatpush1.msra.mxu0 0.0
  %1868 = vmatprep.subr.mxu0 0.0
  %1869 = vmatpush1.msra.mxu0 0.0
  %1870 = vmatprep.subr.mxu0 0.0
  %1871 = vmatpush1.msra.mxu0 0.0
  %1872 = vmatprep.subr.mxu0 0.0
  %1873 = vmatpush1.msra.mxu0 0.0
  %1874 = vmatprep.subr.mxu0 0.0
  %1875 = vmatpush1.msra.mxu0 0.0
  %1876 = vmatprep.subr.mxu0 0.0
  %1877 = vmatpush1.msra.mxu0 0.0
  %1878 = vmatprep.subr.mxu0 0.0
  %1879 = vmatpush1.msra.mxu0 0.0
  %1880 = vmatprep.subr.mxu0 0.0
  %1881 = vmatpush1.msra.mxu0 0.0
  %1882 = vmatprep.subr.mxu0 0.0
  %1883 = vmatpush1.msra.mxu0 0.0
  %1884 = vmatprep.subr.mxu0 0.0
  %1885 = vmatpush1.msra.mxu0 0.0
  %1886 = vmatprep.subr.mxu0 0.0
  %1887 = vmatpush1.msra.mxu0 0.0
  %1888 = vmatprep.subr.mxu0 0.0
  %1889 = vmatpush1.msra.mxu0 0.0
  %1890 = vmatprep.subr.mxu0 0.0
  %1891 = vmatpush1.msra.mxu0 0.0
  %1892 = vmatprep.subr.mxu0 0.0
  %1893 = vmatpush1.msra.mxu0 0.0
  %1894 = vmatprep.mubr.f32.mxu0 0.0
  %1895 = vmatmul.mubr.f32.gmra.mrb[0].mxu0 %v1743
  %v1896 = vpop.f32.mrb[0].mxu0
  %v1897 = vadd.f32 0.0, %v1896
  %v1898 = vpop.f32.mrb[0].mxu0
  %v1899 = vadd.f32 0.0, %v1898
  %1900 = vdwg.mxu0
  %1901 = vmatprep.subr.mxu0 %v1755
  %1902 = vmatpush1.msra.mxu0 %v1753
  %1903 = vmatprep.subr.mxu0 0.0
  %1904 = vmatpush1.msra.mxu0 0.0
  %1905 = vmatprep.subr.mxu0 0.0
  %1906 = vmatpush1.msra.mxu0 0.0
  %1907 = vmatprep.subr.mxu0 0.0
  %1908 = vmatpush1.msra.mxu0 0.0
  %1909 = vmatprep.subr.mxu0 0.0
  %1910 = vmatpush1.msra.mxu0 0.0
  %1911 = vmatprep.subr.mxu0 0.0
  %1912 = vmatpush1.msra.mxu0 0.0
  %1913 = vmatprep.subr.mxu0 0.0
  %1914 = vmatpush1.msra.mxu0 0.0
  %1915 = vmatprep.subr.mxu0 0.0
  %1916 = vmatpush1.msra.mxu0 0.0
  %1917 = vmatprep.subr.mxu0 0.0
  %1918 = vmatpush1.msra.mxu0 0.0
  %1919 = vmatprep.subr.mxu0 0.0
  %1920 = vmatpush1.msra.mxu0 0.0
  %1921 = vmatprep.subr.mxu0 0.0
  %1922 = vmatpush1.msra.mxu0 0.0
  %1923 = vmatprep.subr.mxu0 0.0
  %1924 = vmatpush1.msra.mxu0 0.0
  %1925 = vmatprep.subr.mxu0 0.0
  %1926 = vmatpush1.msra.mxu0 0.0
  %1927 = vmatprep.subr.mxu0 0.0
  %1928 = vmatpush1.msra.mxu0 0.0
  %1929 = vmatprep.subr.mxu0 0.0
  %1930 = vmatpush1.msra.mxu0 0.0
  %1931 = vmatprep.subr.mxu0 0.0
  %1932 = vmatpush1.msra.mxu0 0.0
  %1933 = vmatprep.subr.mxu0 0.0
  %1934 = vmatpush1.msra.mxu0 0.0
  %1935 = vmatprep.subr.mxu0 0.0
  %1936 = vmatpush1.msra.mxu0 0.0
  %1937 = vmatprep.subr.mxu0 0.0
  %1938 = vmatpush1.msra.mxu0 0.0
  %1939 = vmatprep.subr.mxu0 0.0
  %1940 = vmatpush1.msra.mxu0 0.0
  %1941 = vmatprep.subr.mxu0 0.0
  %1942 = vmatpush1.msra.mxu0 0.0
  %1943 = vmatprep.subr.mxu0 0.0
  %1944 = vmatpush1.msra.mxu0 0.0
  %1945 = vmatprep.subr.mxu0 0.0
  %1946 = vmatpush1.msra.mxu0 0.0
  %1947 = vmatprep.subr.mxu0 0.0
  %1948 = vmatpush1.msra.mxu0 0.0
  %1949 = vmatprep.subr.mxu0 0.0
  %1950 = vmatpush1.msra.mxu0 0.0
  %1951 = vmatprep.subr.mxu0 0.0
  %1952 = vmatpush1.msra.mxu0 0.0
  %1953 = vmatprep.subr.mxu0 0.0
  %1954 = vmatpush1.msra.mxu0 0.0
  %1955 = vmatprep.subr.mxu0 0.0
  %1956 = vmatpush1.msra.mxu0 0.0
  %1957 = vmatprep.subr.mxu0 0.0
  %1958 = vmatpush1.msra.mxu0 0.0
  %1959 = vmatprep.subr.mxu0 0.0
  %1960 = vmatpush1.msra.mxu0 0.0
  %1961 = vmatprep.subr.mxu0 0.0
  %1962 = vmatpush1.msra.mxu0 0.0
  %1963 = vmatprep.subr.mxu0 0.0
  %1964 = vmatpush1.msra.mxu0 0.0
  %1965 = vmatprep.mubr.f32.mxu0 0.0
  %1966 = vmatmul.mubr.f32.gmra.mrb[0].mxu0 %v1743
  %v1967 = vpop.f32.mrb[0].mxu0
  %v1968 = vadd.f32 0.0, %v1967
  %v1969 = vpop.f32.mrb[0].mxu0
  %v1970 = vadd.f32 0.0, %v1969
  %1971 = vdwg.mxu0
  %1972 = vmatprep.subr.mxu0 0.0
  %1973 = vmatpush1.msra.mxu0 %v1757
  %1974 = vmatprep.subr.mxu0 0.0
  %1975 = vmatpush1.msra.mxu0 0.0
  %1976 = vmatprep.subr.mxu0 0.0
  %1977 = vmatpush1.msra.mxu0 0.0
  %1978 = vmatprep.subr.mxu0 0.0
  %1979 = vmatpush1.msra.mxu0 0.0
  %1980 = vmatprep.subr.mxu0 0.0
  %1981 = vmatpush1.msra.mxu0 0.0
  %1982 = vmatprep.subr.mxu0 0.0
  %1983 = vmatpush1.msra.mxu0 0.0
  %1984 = vmatprep.subr.mxu0 0.0
  %1985 = vmatpush1.msra.mxu0 0.0
  %1986 = vmatprep.subr.mxu0 0.0
  %1987 = vmatpush1.msra.mxu0 0.0
  %1988 = vmatprep.subr.mxu0 0.0
  %1989 = vmatpush1.msra.mxu0 0.0
  %1990 = vmatprep.subr.mxu0 0.0
  %1991 = vmatpush1.msra.mxu0 0.0
  %1992 = vmatprep.subr.mxu0 0.0
  %1993 = vmatpush1.msra.mxu0 0.0
  %1994 = vmatprep.subr.mxu0 0.0
  %1995 = vmatpush1.msra.mxu0 0.0
  %1996 = vmatprep.subr.mxu0 0.0
  %1997 = vmatpush1.msra.mxu0 0.0
  %1998 = vmatprep.subr.mxu0 0.0
  %1999 = vmatpush1.msra.mxu0 0.0
  %2000 = vmatprep.subr.mxu0 0.0
  %2001 = vmatpush1.msra.mxu0 0.0
  %2002 = vmatprep.subr.mxu0 0.0
  %2003 = vmatpush1.msra.mxu0 0.0
  %2004 = vmatprep.subr.mxu0 0.0
  %2005 = vmatpush1.msra.mxu0 0.0
  %2006 = vmatprep.subr.mxu0 0.0
  %2007 = vmatpush1.msra.mxu0 0.0
  %2008 = vmatprep.subr.mxu0 0.0
  %2009 = vmatpush1.msra.mxu0 0.0
  %2010 = vmatprep.subr.mxu0 0.0
  %2011 = vmatpush1.msra.mxu0 0.0
  %2012 = vmatprep.subr.mxu0 0.0
  %2013 = vmatpush1.msra.mxu0 0.0
  %2014 = vmatprep.subr.mxu0 0.0
  %2015 = vmatpush1.msra.mxu0 0.0
  %2016 = vmatprep.subr.mxu0 0.0
  %2017 = vmatpush1.msra.mxu0 0.0
  %2018 = vmatprep.subr.mxu0 0.0
  %2019 = vmatpush1.msra.mxu0 0.0
  %2020 = vmatprep.subr.mxu0 0.0
  %2021 = vmatpush1.msra.mxu0 0.0
  %2022 = vmatprep.subr.mxu0 0.0
  %2023 = vmatpush1.msra.mxu0 0.0
  %2024 = vmatprep.subr.mxu0 0.0
  %2025 = vmatpush1.msra.mxu0 0.0
  %2026 = vmatprep.subr.mxu0 0.0
  %2027 = vmatpush1.msra.mxu0 0.0
  %2028 = vmatprep.subr.mxu0 0.0
  %2029 = vmatpush1.msra.mxu0 0.0
  %2030 = vmatprep.subr.mxu0 0.0
  %2031 = vmatpush1.msra.mxu0 0.0
  %2032 = vmatprep.subr.mxu0 0.0
  %2033 = vmatpush1.msra.mxu0 0.0
  %2034 = vmatprep.subr.mxu0 0.0
  %2035 = vmatpush1.msra.mxu0 0.0
  %2036 = vmatprep.mubr.f32.mxu0 0.0
  %2037 = vmatmul.mubr.f32.gmra.mrb[0].mxu0 %v1743
  %v2038 = vpop.f32.mrb[0].mxu0
  %v2039 = vadd.f32 0.0, %v2038
  %v2040 = vpop.f32.mrb[0].mxu0
  %2041 = vdwg.mxu0
  %v2042 = vadd.f32 %v1697, %v1826
  %v2043 = vadd.f32 %v1698, %v1828
  %v2044 = vadd.f32 %v1699, %v1897
  %v2045 = vadd.f32 %v1700, %v1899
  %v2046 = vadd.f32 %v1701, %v1968
  %v2047 = vadd.f32 %v1702, %v1970
  %v2048 = vadd.f32 %v1703, %v2039
  %s2049 = scalar_lea.vmem %s1, 48
  %v2050 = vld [vmem:[%s2049] sm:$0xff]
  %v2051 = vld [vmem:[%s0] sm:$0xff]
  %v2052 = vld [vmem:[%s0 + $0x8] sm:$0xff]
  %v2053 = vld [vmem:[%s0 + $0x10] sm:$0xff]
  %v2054 = vld [vmem:[%s0 + $0x18] sm:$0xff]
  %v2059 = vcombine.high %v2051, %v2051
  %v2060 = vcombine.high %v2052, %v2052
  %v2061 = vcombine.high %v2053, %v2053
  %v2062 = vcombine.high %v2054, %v2054
  %2063 = vrot.lane.b32.xlu0 %v2051, 92
  %v2064 = vpop.permute.xlu0 %2063
  %2065 = vrot.lane.b32.xlu0 %v2059, 92
  %v2066 = vpop.permute.xlu0 %2065
  %2067 = vrot.lane.b32.xlu0 %v2052, 92
  %v2068 = vpop.permute.xlu0 %2067
  %2069 = vrot.lane.b32.xlu0 %v2060, 92
  %v2070 = vpop.permute.xlu0 %2069
  %2071 = vrot.lane.b32.xlu0 %v2053, 92
  %v2072 = vpop.permute.xlu0 %2071
  %2073 = vrot.lane.b32.xlu0 %v2061, 92
  %v2074 = vpop.permute.xlu0 %2073
  %2075 = vrot.lane.b32.xlu0 %v2054, 92
  %v2076 = vpop.permute.xlu0 %2075
  %2077 = vrot.lane.b32.xlu0 %v2062, 92
  %v2078 = vpop.permute.xlu0 %2077
  %vm2079 = vcmask 752640
  %v2080 = vsel %vm2079, %v2064, %v2066
  %v2081 = vsel %vm2079, %v2066, %v2068
  %v2082 = vsel %vm2079, %v2068, %v2070
  %v2083 = vsel %vm2079, %v2070, %v2072
  %v2084 = vsel %vm2079, %v2072, %v2074
  %v2085 = vsel %vm2079, %v2074, %v2076
  %v2086 = vsel %vm2079, %v2076, %v2078
  %v2088 = vsel %vm60, %v2050, 0
  %v2090 = vsel %vm64, %v2080, 0
  %v2092 = vsel %vm64, %v2081, 0
  %v2094 = vsel %vm64, %v2082, 0
  %v2096 = vsel %vm64, %v2083, 0
  %v2098 = vsel %vm64, %v2084, 0
  %v2100 = vsel %vm64, %v2085, 0
  %v2102 = vsel %vm64, %v2086, 0
  %2104 = vmatprep.subr.mxu0 %v2092
  %2105 = vmatpush1.msra.mxu0 %v2090
  %2106 = vmatprep.subr.mxu0 0.0
  %2107 = vmatpush1.msra.mxu0 0.0
  %2108 = vmatprep.subr.mxu0 0.0
  %2109 = vmatpush1.msra.mxu0 0.0
  %2110 = vmatprep.subr.mxu0 0.0
  %2111 = vmatpush1.msra.mxu0 0.0
  %2112 = vmatprep.subr.mxu0 0.0
  %2113 = vmatpush1.msra.mxu0 0.0
  %2114 = vmatprep.subr.mxu0 0.0
  %2115 = vmatpush1.msra.mxu0 0.0
  %2116 = vmatprep.subr.mxu0 0.0
  %2117 = vmatpush1.msra.mxu0 0.0
  %2118 = vmatprep.subr.mxu0 0.0
  %2119 = vmatpush1.msra.mxu0 0.0
  %2120 = vmatprep.subr.mxu0 0.0
  %2121 = vmatpush1.msra.mxu0 0.0
  %2122 = vmatprep.subr.mxu0 0.0
  %2123 = vmatpush1.msra.mxu0 0.0
  %2124 = vmatprep.subr.mxu0 0.0
  %2125 = vmatpush1.msra.mxu0 0.0
  %2126 = vmatprep.subr.mxu0 0.0
  %2127 = vmatpush1.msra.mxu0 0.0
  %2128 = vmatprep.subr.mxu0 0.0
  %2129 = vmatpush1.msra.mxu0 0.0
  %2130 = vmatprep.subr.mxu0 0.0
  %2131 = vmatpush1.msra.mxu0 0.0
  %2132 = vmatprep.subr.mxu0 0.0
  %2133 = vmatpush1.msra.mxu0 0.0
  %2134 = vmatprep.subr.mxu0 0.0
  %2135 = vmatpush1.msra.mxu0 0.0
  %2136 = vmatprep.subr.mxu0 0.0
  %2137 = vmatpush1.msra.mxu0 0.0
  %2138 = vmatprep.subr.mxu0 0.0
  %2139 = vmatpush1.msra.mxu0 0.0
  %2140 = vmatprep.subr.mxu0 0.0
  %2141 = vmatpush1.msra.mxu0 0.0
  %2142 = vmatprep.subr.mxu0 0.0
  %2143 = vmatpush1.msra.mxu0 0.0
  %2144 = vmatprep.subr.mxu0 0.0
  %2145 = vmatpush1.msra.mxu0 0.0
  %2146 = vmatprep.subr.mxu0 0.0
  %2147 = vmatpush1.msra.mxu0 0.0
  %2148 = vmatprep.subr.mxu0 0.0
  %2149 = vmatpush1.msra.mxu0 0.0
  %2150 = vmatprep.subr.mxu0 0.0
  %2151 = vmatpush1.msra.mxu0 0.0
  %2152 = vmatprep.subr.mxu0 0.0
  %2153 = vmatpush1.msra.mxu0 0.0
  %2154 = vmatprep.subr.mxu0 0.0
  %2155 = vmatpush1.msra.mxu0 0.0
  %2156 = vmatprep.subr.mxu0 0.0
  %2157 = vmatpush1.msra.mxu0 0.0
  %2158 = vmatprep.subr.mxu0 0.0
  %2159 = vmatpush1.msra.mxu0 0.0
  %2160 = vmatprep.subr.mxu0 0.0
  %2161 = vmatpush1.msra.mxu0 0.0
  %2162 = vmatprep.subr.mxu0 0.0
  %2163 = vmatpush1.msra.mxu0 0.0
  %2164 = vmatprep.subr.mxu0 0.0
  %2165 = vmatpush1.msra.mxu0 0.0
  %2166 = vmatprep.subr.mxu0 0.0
  %2167 = vmatpush1.msra.mxu0 0.0
  %2168 = vmatprep.mubr.f32.mxu0 0.0
  %2169 = vmatmul.mubr.f32.gmra.mrb[0].mxu0 %v2088
  %v2170 = vpop.f32.mrb[0].mxu0
  %v2171 = vadd.f32 0.0, %v2170
  %v2172 = vpop.f32.mrb[0].mxu0
  %v2173 = vadd.f32 0.0, %v2172
  %2174 = vdwg.mxu0
  %2175 = vmatprep.subr.mxu0 %v2096
  %2176 = vmatpush1.msra.mxu0 %v2094
  %2177 = vmatprep.subr.mxu0 0.0
  %2178 = vmatpush1.msra.mxu0 0.0
  %2179 = vmatprep.subr.mxu0 0.0
  %2180 = vmatpush1.msra.mxu0 0.0
  %2181 = vmatprep.subr.mxu0 0.0
  %2182 = vmatpush1.msra.mxu0 0.0
  %2183 = vmatprep.subr.mxu0 0.0
  %2184 = vmatpush1.msra.mxu0 0.0
  %2185 = vmatprep.subr.mxu0 0.0
  %2186 = vmatpush1.msra.mxu0 0.0
  %2187 = vmatprep.subr.mxu0 0.0
  %2188 = vmatpush1.msra.mxu0 0.0
  %2189 = vmatprep.subr.mxu0 0.0
  %2190 = vmatpush1.msra.mxu0 0.0
  %2191 = vmatprep.subr.mxu0 0.0
  %2192 = vmatpush1.msra.mxu0 0.0
  %2193 = vmatprep.subr.mxu0 0.0
  %2194 = vmatpush1.msra.mxu0 0.0
  %2195 = vmatprep.subr.mxu0 0.0
  %2196 = vmatpush1.msra.mxu0 0.0
  %2197 = vmatprep.subr.mxu0 0.0
  %2198 = vmatpush1.msra.mxu0 0.0
  %2199 = vmatprep.subr.mxu0 0.0
  %2200 = vmatpush1.msra.mxu0 0.0
  %2201 = vmatprep.subr.mxu0 0.0
  %2202 = vmatpush1.msra.mxu0 0.0
  %2203 = vmatprep.subr.mxu0 0.0
  %2204 = vmatpush1.msra.mxu0 0.0
  %2205 = vmatprep.subr.mxu0 0.0
  %2206 = vmatpush1.msra.mxu0 0.0
  %2207 = vmatprep.subr.mxu0 0.0
  %2208 = vmatpush1.msra.mxu0 0.0
  %2209 = vmatprep.subr.mxu0 0.0
  %2210 = vmatpush1.msra.mxu0 0.0
  %2211 = vmatprep.subr.mxu0 0.0
  %2212 = vmatpush1.msra.mxu0 0.0
  %2213 = vmatprep.subr.mxu0 0.0
  %2214 = vmatpush1.msra.mxu0 0.0
  %2215 = vmatprep.subr.mxu0 0.0
  %2216 = vmatpush1.msra.mxu0 0.0
  %2217 = vmatprep.subr.mxu0 0.0
  %2218 = vmatpush1.msra.mxu0 0.0
  %2219 = vmatprep.subr.mxu0 0.0
  %2220 = vmatpush1.msra.mxu0 0.0
  %2221 = vmatprep.subr.mxu0 0.0
  %2222 = vmatpush1.msra.mxu0 0.0
  %2223 = vmatprep.subr.mxu0 0.0
  %2224 = vmatpush1.msra.mxu0 0.0
  %2225 = vmatprep.subr.mxu0 0.0
  %2226 = vmatpush1.msra.mxu0 0.0
  %2227 = vmatprep.subr.mxu0 0.0
  %2228 = vmatpush1.msra.mxu0 0.0
  %2229 = vmatprep.subr.mxu0 0.0
  %2230 = vmatpush1.msra.mxu0 0.0
  %2231 = vmatprep.subr.mxu0 0.0
  %2232 = vmatpush1.msra.mxu0 0.0
  %2233 = vmatprep.subr.mxu0 0.0
  %2234 = vmatpush1.msra.mxu0 0.0
  %2235 = vmatprep.subr.mxu0 0.0
  %2236 = vmatpush1.msra.mxu0 0.0
  %2237 = vmatprep.subr.mxu0 0.0
  %2238 = vmatpush1.msra.mxu0 0.0
  %2239 = vmatprep.mubr.f32.mxu0 0.0
  %2240 = vmatmul.mubr.f32.gmra.mrb[0].mxu0 %v2088
  %v2241 = vpop.f32.mrb[0].mxu0
  %v2242 = vadd.f32 0.0, %v2241
  %v2243 = vpop.f32.mrb[0].mxu0
  %v2244 = vadd.f32 0.0, %v2243
  %2245 = vdwg.mxu0
  %2246 = vmatprep.subr.mxu0 %v2100
  %2247 = vmatpush1.msra.mxu0 %v2098
  %2248 = vmatprep.subr.mxu0 0.0
  %2249 = vmatpush1.msra.mxu0 0.0
  %2250 = vmatprep.subr.mxu0 0.0
  %2251 = vmatpush1.msra.mxu0 0.0
  %2252 = vmatprep.subr.mxu0 0.0
  %2253 = vmatpush1.msra.mxu0 0.0
  %2254 = vmatprep.subr.mxu0 0.0
  %2255 = vmatpush1.msra.mxu0 0.0
  %2256 = vmatprep.subr.mxu0 0.0
  %2257 = vmatpush1.msra.mxu0 0.0
  %2258 = vmatprep.subr.mxu0 0.0
  %2259 = vmatpush1.msra.mxu0 0.0
  %2260 = vmatprep.subr.mxu0 0.0
  %2261 = vmatpush1.msra.mxu0 0.0
  %2262 = vmatprep.subr.mxu0 0.0
  %2263 = vmatpush1.msra.mxu0 0.0
  %2264 = vmatprep.subr.mxu0 0.0
  %2265 = vmatpush1.msra.mxu0 0.0
  %2266 = vmatprep.subr.mxu0 0.0
  %2267 = vmatpush1.msra.mxu0 0.0
  %2268 = vmatprep.subr.mxu0 0.0
  %2269 = vmatpush1.msra.mxu0 0.0
  %2270 = vmatprep.subr.mxu0 0.0
  %2271 = vmatpush1.msra.mxu0 0.0
  %2272 = vmatprep.subr.mxu0 0.0
  %2273 = vmatpush1.msra.mxu0 0.0
  %2274 = vmatprep.subr.mxu0 0.0
  %2275 = vmatpush1.msra.mxu0 0.0
  %2276 = vmatprep.subr.mxu0 0.0
  %2277 = vmatpush1.msra.mxu0 0.0
  %2278 = vmatprep.subr.mxu0 0.0
  %2279 = vmatpush1.msra.mxu0 0.0
  %2280 = vmatprep.subr.mxu0 0.0
  %2281 = vmatpush1.msra.mxu0 0.0
  %2282 = vmatprep.subr.mxu0 0.0
  %2283 = vmatpush1.msra.mxu0 0.0
  %2284 = vmatprep.subr.mxu0 0.0
  %2285 = vmatpush1.msra.mxu0 0.0
  %2286 = vmatprep.subr.mxu0 0.0
  %2287 = vmatpush1.msra.mxu0 0.0
  %2288 = vmatprep.subr.mxu0 0.0
  %2289 = vmatpush1.msra.mxu0 0.0
  %2290 = vmatprep.subr.mxu0 0.0
  %2291 = vmatpush1.msra.mxu0 0.0
  %2292 = vmatprep.subr.mxu0 0.0
  %2293 = vmatpush1.msra.mxu0 0.0
  %2294 = vmatprep.subr.mxu0 0.0
  %2295 = vmatpush1.msra.mxu0 0.0
  %2296 = vmatprep.subr.mxu0 0.0
  %2297 = vmatpush1.msra.mxu0 0.0
  %2298 = vmatprep.subr.mxu0 0.0
  %2299 = vmatpush1.msra.mxu0 0.0
  %2300 = vmatprep.subr.mxu0 0.0
  %2301 = vmatpush1.msra.mxu0 0.0
  %2302 = vmatprep.subr.mxu0 0.0
  %2303 = vmatpush1.msra.mxu0 0.0
  %2304 = vmatprep.subr.mxu0 0.0
  %2305 = vmatpush1.msra.mxu0 0.0
  %2306 = vmatprep.subr.mxu0 0.0
  %2307 = vmatpush1.msra.mxu0 0.0
  %2308 = vmatprep.subr.mxu0 0.0
  %2309 = vmatpush1.msra.mxu0 0.0
  %2310 = vmatprep.mubr.f32.mxu0 0.0
  %2311 = vmatmul.mubr.f32.gmra.mrb[0].mxu0 %v2088
  %v2312 = vpop.f32.mrb[0].mxu0
  %v2313 = vadd.f32 0.0, %v2312
  %v2314 = vpop.f32.mrb[0].mxu0
  %v2315 = vadd.f32 0.0, %v2314
  %2316 = vdwg.mxu0
  %2317 = vmatprep.subr.mxu0 0.0
  %2318 = vmatpush1.msra.mxu0 %v2102
  %2319 = vmatprep.subr.mxu0 0.0
  %2320 = vmatpush1.msra.mxu0 0.0
  %2321 = vmatprep.subr.mxu0 0.0
  %2322 = vmatpush1.msra.mxu0 0.0
  %2323 = vmatprep.subr.mxu0 0.0
  %2324 = vmatpush1.msra.mxu0 0.0
  %2325 = vmatprep.subr.mxu0 0.0
  %2326 = vmatpush1.msra.mxu0 0.0
  %2327 = vmatprep.subr.mxu0 0.0
  %2328 = vmatpush1.msra.mxu0 0.0
  %2329 = vmatprep.subr.mxu0 0.0
  %2330 = vmatpush1.msra.mxu0 0.0
  %2331 = vmatprep.subr.mxu0 0.0
  %2332 = vmatpush1.msra.mxu0 0.0
  %2333 = vmatprep.subr.mxu0 0.0
  %2334 = vmatpush1.msra.mxu0 0.0
  %2335 = vmatprep.subr.mxu0 0.0
  %2336 = vmatpush1.msra.mxu0 0.0
  %2337 = vmatprep.subr.mxu0 0.0
  %2338 = vmatpush1.msra.mxu0 0.0
  %2339 = vmatprep.subr.mxu0 0.0
  %2340 = vmatpush1.msra.mxu0 0.0
  %2341 = vmatprep.subr.mxu0 0.0
  %2342 = vmatpush1.msra.mxu0 0.0
  %2343 = vmatprep.subr.mxu0 0.0
  %2344 = vmatpush1.msra.mxu0 0.0
  %2345 = vmatprep.subr.mxu0 0.0
  %2346 = vmatpush1.msra.mxu0 0.0
  %2347 = vmatprep.subr.mxu0 0.0
  %2348 = vmatpush1.msra.mxu0 0.0
  %2349 = vmatprep.subr.mxu0 0.0
  %2350 = vmatpush1.msra.mxu0 0.0
  %2351 = vmatprep.subr.mxu0 0.0
  %2352 = vmatpush1.msra.mxu0 0.0
  %2353 = vmatprep.subr.mxu0 0.0
  %2354 = vmatpush1.msra.mxu0 0.0
  %2355 = vmatprep.subr.mxu0 0.0
  %2356 = vmatpush1.msra.mxu0 0.0
  %2357 = vmatprep.subr.mxu0 0.0
  %2358 = vmatpush1.msra.mxu0 0.0
  %2359 = vmatprep.subr.mxu0 0.0
  %2360 = vmatpush1.msra.mxu0 0.0
  %2361 = vmatprep.subr.mxu0 0.0
  %2362 = vmatpush1.msra.mxu0 0.0
  %2363 = vmatprep.subr.mxu0 0.0
  %2364 = vmatpush1.msra.mxu0 0.0
  %2365 = vmatprep.subr.mxu0 0.0
  %2366 = vmatpush1.msra.mxu0 0.0
  %2367 = vmatprep.subr.mxu0 0.0
  %2368 = vmatpush1.msra.mxu0 0.0
  %2369 = vmatprep.subr.mxu0 0.0
  %2370 = vmatpush1.msra.mxu0 0.0
  %2371 = vmatprep.subr.mxu0 0.0
  %2372 = vmatpush1.msra.mxu0 0.0
  %2373 = vmatprep.subr.mxu0 0.0
  %2374 = vmatpush1.msra.mxu0 0.0
  %2375 = vmatprep.subr.mxu0 0.0
  %2376 = vmatpush1.msra.mxu0 0.0
  %2377 = vmatprep.subr.mxu0 0.0
  %2378 = vmatpush1.msra.mxu0 0.0
  %2379 = vmatprep.subr.mxu0 0.0
  %2380 = vmatpush1.msra.mxu0 0.0
  %2381 = vmatprep.mubr.f32.mxu0 0.0
  %2382 = vmatmul.mubr.f32.gmra.mrb[0].mxu0 %v2088
  %v2383 = vpop.f32.mrb[0].mxu0
  %v2384 = vadd.f32 0.0, %v2383
  %v2385 = vpop.f32.mrb[0].mxu0
  %2386 = vdwg.mxu0
  %v2387 = vadd.f32 %v2042, %v2171
  %v2388 = vadd.f32 %v2043, %v2173
  %v2389 = vadd.f32 %v2044, %v2242
  %v2390 = vadd.f32 %v2045, %v2244
  %v2391 = vadd.f32 %v2046, %v2313
  %v2392 = vadd.f32 %v2047, %v2315
  %v2393 = vadd.f32 %v2048, %v2384
  %s2394 = scalar_lea.vmem %s1, 56
  %v2395 = vld [vmem:[%s2394] sm:$0xff]
  %v2396 = vld [vmem:[%s0] sm:$0xff]
  %v2397 = vld [vmem:[%s0 + $0x8] sm:$0xff]
  %v2398 = vld [vmem:[%s0 + $0x10] sm:$0xff]
  %v2399 = vld [vmem:[%s0 + $0x18] sm:$0xff]
  %v2404 = vcombine.high %v2396, %v2396
  %v2405 = vcombine.high %v2397, %v2397
  %v2406 = vcombine.high %v2398, %v2398
  %v2407 = vcombine.high %v2399, %v2399
  %2408 = vrot.lane.b32.xlu0 %v2396, 91
  %v2409 = vpop.permute.xlu0 %2408
  %2410 = vrot.lane.b32.xlu0 %v2404, 91
  %v2411 = vpop.permute.xlu0 %2410
  %2412 = vrot.lane.b32.xlu0 %v2397, 91
  %v2413 = vpop.permute.xlu0 %2412
  %2414 = vrot.lane.b32.xlu0 %v2405, 91
  %v2415 = vpop.permute.xlu0 %2414
  %2416 = vrot.lane.b32.xlu0 %v2398, 91
  %v2417 = vpop.permute.xlu0 %2416
  %2418 = vrot.lane.b32.xlu0 %v2406, 91
  %v2419 = vpop.permute.xlu0 %2418
  %2420 = vrot.lane.b32.xlu0 %v2399, 91
  %v2421 = vpop.permute.xlu0 %2420
  %2422 = vrot.lane.b32.xlu0 %v2407, 91
  %v2423 = vpop.permute.xlu0 %2422
  %vm2424 = vcmask 744448
  %v2425 = vsel %vm2424, %v2409, %v2411
  %v2426 = vsel %vm2424, %v2411, %v2413
  %v2427 = vsel %vm2424, %v2413, %v2415
  %v2428 = vsel %vm2424, %v2415, %v2417
  %v2429 = vsel %vm2424, %v2417, %v2419
  %v2430 = vsel %vm2424, %v2419, %v2421
  %v2431 = vsel %vm2424, %v2421, %v2423
  %v2433 = vsel %vm60, %v2395, 0
  %v2435 = vsel %vm64, %v2425, 0
  %v2437 = vsel %vm64, %v2426, 0
  %v2439 = vsel %vm64, %v2427, 0
  %v2441 = vsel %vm64, %v2428, 0
  %v2443 = vsel %vm64, %v2429, 0
  %v2445 = vsel %vm64, %v2430, 0
  %v2447 = vsel %vm64, %v2431, 0
  %2449 = vmatprep.subr.mxu0 %v2437
  %2450 = vmatpush1.msra.mxu0 %v2435
  %2451 = vmatprep.subr.mxu0 0.0
  %2452 = vmatpush1.msra.mxu0 0.0
  %2453 = vmatprep.subr.mxu0 0.0
  %2454 = vmatpush1.msra.mxu0 0.0
  %2455 = vmatprep.subr.mxu0 0.0
  %2456 = vmatpush1.msra.mxu0 0.0
  %2457 = vmatprep.subr.mxu0 0.0
  %2458 = vmatpush1.msra.mxu0 0.0
  %2459 = vmatprep.subr.mxu0 0.0
  %2460 = vmatpush1.msra.mxu0 0.0
  %2461 = vmatprep.subr.mxu0 0.0
  %2462 = vmatpush1.msra.mxu0 0.0
  %2463 = vmatprep.subr.mxu0 0.0
  %2464 = vmatpush1.msra.mxu0 0.0
  %2465 = vmatprep.subr.mxu0 0.0
  %2466 = vmatpush1.msra.mxu0 0.0
  %2467 = vmatprep.subr.mxu0 0.0
  %2468 = vmatpush1.msra.mxu0 0.0
  %2469 = vmatprep.subr.mxu0 0.0
  %2470 = vmatpush1.msra.mxu0 0.0
  %2471 = vmatprep.subr.mxu0 0.0
  %2472 = vmatpush1.msra.mxu0 0.0
  %2473 = vmatprep.subr.mxu0 0.0
  %2474 = vmatpush1.msra.mxu0 0.0
  %2475 = vmatprep.subr.mxu0 0.0
  %2476 = vmatpush1.msra.mxu0 0.0
  %2477 = vmatprep.subr.mxu0 0.0
  %2478 = vmatpush1.msra.mxu0 0.0
  %2479 = vmatprep.subr.mxu0 0.0
  %2480 = vmatpush1.msra.mxu0 0.0
  %2481 = vmatprep.subr.mxu0 0.0
  %2482 = vmatpush1.msra.mxu0 0.0
  %2483 = vmatprep.subr.mxu0 0.0
  %2484 = vmatpush1.msra.mxu0 0.0
  %2485 = vmatprep.subr.mxu0 0.0
  %2486 = vmatpush1.msra.mxu0 0.0
  %2487 = vmatprep.subr.mxu0 0.0
  %2488 = vmatpush1.msra.mxu0 0.0
  %2489 = vmatprep.subr.mxu0 0.0
  %2490 = vmatpush1.msra.mxu0 0.0
  %2491 = vmatprep.subr.mxu0 0.0
  %2492 = vmatpush1.msra.mxu0 0.0
  %2493 = vmatprep.subr.mxu0 0.0
  %2494 = vmatpush1.msra.mxu0 0.0
  %2495 = vmatprep.subr.mxu0 0.0
  %2496 = vmatpush1.msra.mxu0 0.0
  %2497 = vmatprep.subr.mxu0 0.0
  %2498 = vmatpush1.msra.mxu0 0.0
  %2499 = vmatprep.subr.mxu0 0.0
  %2500 = vmatpush1.msra.mxu0 0.0
  %2501 = vmatprep.subr.mxu0 0.0
  %2502 = vmatpush1.msra.mxu0 0.0
  %2503 = vmatprep.subr.mxu0 0.0
  %2504 = vmatpush1.msra.mxu0 0.0
  %2505 = vmatprep.subr.mxu0 0.0
  %2506 = vmatpush1.msra.mxu0 0.0
  %2507 = vmatprep.subr.mxu0 0.0
  %2508 = vmatpush1.msra.mxu0 0.0
  %2509 = vmatprep.subr.mxu0 0.0
  %2510 = vmatpush1.msra.mxu0 0.0
  %2511 = vmatprep.subr.mxu0 0.0
  %2512 = vmatpush1.msra.mxu0 0.0
  %2513 = vmatprep.mubr.f32.mxu0 0.0
  %2514 = vmatmul.mubr.f32.gmra.mrb[0].mxu0 %v2433
  %v2515 = vpop.f32.mrb[0].mxu0
  %v2516 = vadd.f32 0.0, %v2515
  %v2517 = vpop.f32.mrb[0].mxu0
  %v2518 = vadd.f32 0.0, %v2517
  %2519 = vdwg.mxu0
  %2520 = vmatprep.subr.mxu0 %v2441
  %2521 = vmatpush1.msra.mxu0 %v2439
  %2522 = vmatprep.subr.mxu0 0.0
  %2523 = vmatpush1.msra.mxu0 0.0
  %2524 = vmatprep.subr.mxu0 0.0
  %2525 = vmatpush1.msra.mxu0 0.0
  %2526 = vmatprep.subr.mxu0 0.0
  %2527 = vmatpush1.msra.mxu0 0.0
  %2528 = vmatprep.subr.mxu0 0.0
  %2529 = vmatpush1.msra.mxu0 0.0
  %2530 = vmatprep.subr.mxu0 0.0
  %2531 = vmatpush1.msra.mxu0 0.0
  %2532 = vmatprep.subr.mxu0 0.0
  %2533 = vmatpush1.msra.mxu0 0.0
  %2534 = vmatprep.subr.mxu0 0.0
  %2535 = vmatpush1.msra.mxu0 0.0
  %2536 = vmatprep.subr.mxu0 0.0
  %2537 = vmatpush1.msra.mxu0 0.0
  %2538 = vmatprep.subr.mxu0 0.0
  %2539 = vmatpush1.msra.mxu0 0.0
  %2540 = vmatprep.subr.mxu0 0.0
  %2541 = vmatpush1.msra.mxu0 0.0
  %2542 = vmatprep.subr.mxu0 0.0
  %2543 = vmatpush1.msra.mxu0 0.0
  %2544 = vmatprep.subr.mxu0 0.0
  %2545 = vmatpush1.msra.mxu0 0.0
  %2546 = vmatprep.subr.mxu0 0.0
  %2547 = vmatpush1.msra.mxu0 0.0
  %2548 = vmatprep.subr.mxu0 0.0
  %2549 = vmatpush1.msra.mxu0 0.0
  %2550 = vmatprep.subr.mxu0 0.0
  %2551 = vmatpush1.msra.mxu0 0.0
  %2552 = vmatprep.subr.mxu0 0.0
  %2553 = vmatpush1.msra.mxu0 0.0
  %2554 = vmatprep.subr.mxu0 0.0
  %2555 = vmatpush1.msra.mxu0 0.0
  %2556 = vmatprep.subr.mxu0 0.0
  %2557 = vmatpush1.msra.mxu0 0.0
  %2558 = vmatprep.subr.mxu0 0.0
  %2559 = vmatpush1.msra.mxu0 0.0
  %2560 = vmatprep.subr.mxu0 0.0
  %2561 = vmatpush1.msra.mxu0 0.0
  %2562 = vmatprep.subr.mxu0 0.0
  %2563 = vmatpush1.msra.mxu0 0.0
  %2564 = vmatprep.subr.mxu0 0.0
  %2565 = vmatpush1.msra.mxu0 0.0
  %2566 = vmatprep.subr.mxu0 0.0
  %2567 = vmatpush1.msra.mxu0 0.0
  %2568 = vmatprep.subr.mxu0 0.0
  %2569 = vmatpush1.msra.mxu0 0.0
  %2570 = vmatprep.subr.mxu0 0.0
  %2571 = vmatpush1.msra.mxu0 0.0
  %2572 = vmatprep.subr.mxu0 0.0
  %2573 = vmatpush1.msra.mxu0 0.0
  %2574 = vmatprep.subr.mxu0 0.0
  %2575 = vmatpush1.msra.mxu0 0.0
  %2576 = vmatprep.subr.mxu0 0.0
  %2577 = vmatpush1.msra.mxu0 0.0
  %2578 = vmatprep.subr.mxu0 0.0
  %2579 = vmatpush1.msra.mxu0 0.0
  %2580 = vmatprep.subr.mxu0 0.0
  %2581 = vmatpush1.msra.mxu0 0.0
  %2582 = vmatprep.subr.mxu0 0.0
  %2583 = vmatpush1.msra.mxu0 0.0
  %2584 = vmatprep.mubr.f32.mxu0 0.0
  %2585 = vmatmul.mubr.f32.gmra.mrb[0].mxu0 %v2433
  %v2586 = vpop.f32.mrb[0].mxu0
  %v2587 = vadd.f32 0.0, %v2586
  %v2588 = vpop.f32.mrb[0].mxu0
  %v2589 = vadd.f32 0.0, %v2588
  %2590 = vdwg.mxu0
  %2591 = vmatprep.subr.mxu0 %v2445
  %2592 = vmatpush1.msra.mxu0 %v2443
  %2593 = vmatprep.subr.mxu0 0.0
  %2594 = vmatpush1.msra.mxu0 0.0
  %2595 = vmatprep.subr.mxu0 0.0
  %2596 = vmatpush1.msra.mxu0 0.0
  %2597 = vmatprep.subr.mxu0 0.0
  %2598 = vmatpush1.msra.mxu0 0.0
  %2599 = vmatprep.subr.mxu0 0.0
  %2600 = vmatpush1.msra.mxu0 0.0
  %2601 = vmatprep.subr.mxu0 0.0
  %2602 = vmatpush1.msra.mxu0 0.0
  %2603 = vmatprep.subr.mxu0 0.0
  %2604 = vmatpush1.msra.mxu0 0.0
  %2605 = vmatprep.subr.mxu0 0.0
  %2606 = vmatpush1.msra.mxu0 0.0
  %2607 = vmatprep.subr.mxu0 0.0
  %2608 = vmatpush1.msra.mxu0 0.0
  %2609 = vmatprep.subr.mxu0 0.0
  %2610 = vmatpush1.msra.mxu0 0.0
  %2611 = vmatprep.subr.mxu0 0.0
  %2612 = vmatpush1.msra.mxu0 0.0
  %2613 = vmatprep.subr.mxu0 0.0
  %2614 = vmatpush1.msra.mxu0 0.0
  %2615 = vmatprep.subr.mxu0 0.0
  %2616 = vmatpush1.msra.mxu0 0.0
  %2617 = vmatprep.subr.mxu0 0.0
  %2618 = vmatpush1.msra.mxu0 0.0
  %2619 = vmatprep.subr.mxu0 0.0
  %2620 = vmatpush1.msra.mxu0 0.0
  %2621 = vmatprep.subr.mxu0 0.0
  %2622 = vmatpush1.msra.mxu0 0.0
  %2623 = vmatprep.subr.mxu0 0.0
  %2624 = vmatpush1.msra.mxu0 0.0
  %2625 = vmatprep.subr.mxu0 0.0
  %2626 = vmatpush1.msra.mxu0 0.0
  %2627 = vmatprep.subr.mxu0 0.0
  %2628 = vmatpush1.msra.mxu0 0.0
  %2629 = vmatprep.subr.mxu0 0.0
  %2630 = vmatpush1.msra.mxu0 0.0
  %2631 = vmatprep.subr.mxu0 0.0
  %2632 = vmatpush1.msra.mxu0 0.0
  %2633 = vmatprep.subr.mxu0 0.0
  %2634 = vmatpush1.msra.mxu0 0.0
  %2635 = vmatprep.subr.mxu0 0.0
  %2636 = vmatpush1.msra.mxu0 0.0
  %2637 = vmatprep.subr.mxu0 0.0
  %2638 = vmatpush1.msra.mxu0 0.0
  %2639 = vmatprep.subr.mxu0 0.0
  %2640 = vmatpush1.msra.mxu0 0.0
  %2641 = vmatprep.subr.mxu0 0.0
  %2642 = vmatpush1.msra.mxu0 0.0
  %2643 = vmatprep.subr.mxu0 0.0
  %2644 = vmatpush1.msra.mxu0 0.0
  %2645 = vmatprep.subr.mxu0 0.0
  %2646 = vmatpush1.msra.mxu0 0.0
  %2647 = vmatprep.subr.mxu0 0.0
  %2648 = vmatpush1.msra.mxu0 0.0
  %2649 = vmatprep.subr.mxu0 0.0
  %2650 = vmatpush1.msra.mxu0 0.0
  %2651 = vmatprep.subr.mxu0 0.0
  %2652 = vmatpush1.msra.mxu0 0.0
  %2653 = vmatprep.subr.mxu0 0.0
  %2654 = vmatpush1.msra.mxu0 0.0
  %2655 = vmatprep.mubr.f32.mxu0 0.0
  %2656 = vmatmul.mubr.f32.gmra.mrb[0].mxu0 %v2433
  %v2657 = vpop.f32.mrb[0].mxu0
  %v2658 = vadd.f32 0.0, %v2657
  %v2659 = vpop.f32.mrb[0].mxu0
  %v2660 = vadd.f32 0.0, %v2659
  %2661 = vdwg.mxu0
  %2662 = vmatprep.subr.mxu0 0.0
  %2663 = vmatpush1.msra.mxu0 %v2447
  %2664 = vmatprep.subr.mxu0 0.0
  %2665 = vmatpush1.msra.mxu0 0.0
  %2666 = vmatprep.subr.mxu0 0.0
  %2667 = vmatpush1.msra.mxu0 0.0
  %2668 = vmatprep.subr.mxu0 0.0
  %2669 = vmatpush1.msra.mxu0 0.0
  %2670 = vmatprep.subr.mxu0 0.0
  %2671 = vmatpush1.msra.mxu0 0.0
  %2672 = vmatprep.subr.mxu0 0.0
  %2673 = vmatpush1.msra.mxu0 0.0
  %2674 = vmatprep.subr.mxu0 0.0
  %2675 = vmatpush1.msra.mxu0 0.0
  %2676 = vmatprep.subr.mxu0 0.0
  %2677 = vmatpush1.msra.mxu0 0.0
  %2678 = vmatprep.subr.mxu0 0.0
  %2679 = vmatpush1.msra.mxu0 0.0
  %2680 = vmatprep.subr.mxu0 0.0
  %2681 = vmatpush1.msra.mxu0 0.0
  %2682 = vmatprep.subr.mxu0 0.0
  %2683 = vmatpush1.msra.mxu0 0.0
  %2684 = vmatprep.subr.mxu0 0.0
  %2685 = vmatpush1.msra.mxu0 0.0
  %2686 = vmatprep.subr.mxu0 0.0
  %2687 = vmatpush1.msra.mxu0 0.0
  %2688 = vmatprep.subr.mxu0 0.0
  %2689 = vmatpush1.msra.mxu0 0.0
  %2690 = vmatprep.subr.mxu0 0.0
  %2691 = vmatpush1.msra.mxu0 0.0
  %2692 = vmatprep.subr.mxu0 0.0
  %2693 = vmatpush1.msra.mxu0 0.0
  %2694 = vmatprep.subr.mxu0 0.0
  %2695 = vmatpush1.msra.mxu0 0.0
  %2696 = vmatprep.subr.mxu0 0.0
  %2697 = vmatpush1.msra.mxu0 0.0
  %2698 = vmatprep.subr.mxu0 0.0
  %2699 = vmatpush1.msra.mxu0 0.0
  %2700 = vmatprep.subr.mxu0 0.0
  %2701 = vmatpush1.msra.mxu0 0.0
  %2702 = vmatprep.subr.mxu0 0.0
  %2703 = vmatpush1.msra.mxu0 0.0
  %2704 = vmatprep.subr.mxu0 0.0
  %2705 = vmatpush1.msra.mxu0 0.0
  %2706 = vmatprep.subr.mxu0 0.0
  %2707 = vmatpush1.msra.mxu0 0.0
  %2708 = vmatprep.subr.mxu0 0.0
  %2709 = vmatpush1.msra.mxu0 0.0
  %2710 = vmatprep.subr.mxu0 0.0
  %2711 = vmatpush1.msra.mxu0 0.0
  %2712 = vmatprep.subr.mxu0 0.0
  %2713 = vmatpush1.msra.mxu0 0.0
  %2714 = vmatprep.subr.mxu0 0.0
  %2715 = vmatpush1.msra.mxu0 0.0
  %2716 = vmatprep.subr.mxu0 0.0
  %2717 = vmatpush1.msra.mxu0 0.0
  %2718 = vmatprep.subr.mxu0 0.0
  %2719 = vmatpush1.msra.mxu0 0.0
  %2720 = vmatprep.subr.mxu0 0.0
  %2721 = vmatpush1.msra.mxu0 0.0
  %2722 = vmatprep.subr.mxu0 0.0
  %2723 = vmatpush1.msra.mxu0 0.0
  %2724 = vmatprep.subr.mxu0 0.0
  %2725 = vmatpush1.msra.mxu0 0.0
  %2726 = vmatprep.mubr.f32.mxu0 0.0
  %2727 = vmatmul.mubr.f32.gmra.mrb[0].mxu0 %v2433
  %v2728 = vpop.f32.mrb[0].mxu0
  %v2729 = vadd.f32 0.0, %v2728
  %v2730 = vpop.f32.mrb[0].mxu0
  %2731 = vdwg.mxu0
  %v2732 = vadd.f32 %v2387, %v2516
  %v2733 = vadd.f32 %v2388, %v2518
  %v2734 = vadd.f32 %v2389, %v2587
  %v2735 = vadd.f32 %v2390, %v2589
  %v2736 = vadd.f32 %v2391, %v2658
  %v2737 = vadd.f32 %v2392, %v2660
  %v2738 = vadd.f32 %v2393, %v2729
  %s2739 = scalar_lea.vmem %s1, 64
  %v2740 = vld [vmem:[%s2739] sm:$0xff]
  %v2741 = vld [vmem:[%s0] sm:$0xff]
  %v2742 = vld [vmem:[%s0 + $0x8] sm:$0xff]
  %v2743 = vld [vmem:[%s0 + $0x10] sm:$0xff]
  %v2744 = vld [vmem:[%s0 + $0x18] sm:$0xff]
  %v2749 = vcombine.high %v2741, %v2741
  %v2750 = vcombine.high %v2742, %v2742
  %v2751 = vcombine.high %v2743, %v2743
  %v2752 = vcombine.high %v2744, %v2744
  %2753 = vrot.lane.b32.xlu0 %v2741, 90
  %v2754 = vpop.permute.xlu0 %2753
  %2755 = vrot.lane.b32.xlu0 %v2749, 90
  %v2756 = vpop.permute.xlu0 %2755
  %2757 = vrot.lane.b32.xlu0 %v2742, 90
  %v2758 = vpop.permute.xlu0 %2757
  %2759 = vrot.lane.b32.xlu0 %v2750, 90
  %v2760 = vpop.permute.xlu0 %2759
  %2761 = vrot.lane.b32.xlu0 %v2743, 90
  %v2762 = vpop.permute.xlu0 %2761
  %2763 = vrot.lane.b32.xlu0 %v2751, 90
  %v2764 = vpop.permute.xlu0 %2763
  %2765 = vrot.lane.b32.xlu0 %v2744, 90
  %v2766 = vpop.permute.xlu0 %2765
  %2767 = vrot.lane.b32.xlu0 %v2752, 90
  %v2768 = vpop.permute.xlu0 %2767
  %vm2769 = vcmask 736256
  %v2770 = vsel %vm2769, %v2754, %v2756
  %v2771 = vsel %vm2769, %v2756, %v2758
  %v2772 = vsel %vm2769, %v2758, %v2760
  %v2773 = vsel %vm2769, %v2760, %v2762
  %v2774 = vsel %vm2769, %v2762, %v2764
  %v2775 = vsel %vm2769, %v2764, %v2766
  %v2776 = vsel %vm2769, %v2766, %v2768
  %v2778 = vsel %vm60, %v2740, 0
  %v2780 = vsel %vm64, %v2770, 0
  %v2782 = vsel %vm64, %v2771, 0
  %v2784 = vsel %vm64, %v2772, 0
  %v2786 = vsel %vm64, %v2773, 0
  %v2788 = vsel %vm64, %v2774, 0
  %v2790 = vsel %vm64, %v2775, 0
  %v2792 = vsel %vm64, %v2776, 0
  %2794 = vmatprep.subr.mxu0 %v2782
  %2795 = vmatpush1.msra.mxu0 %v2780
  %2796 = vmatprep.subr.mxu0 0.0
  %2797 = vmatpush1.msra.mxu0 0.0
  %2798 = vmatprep.subr.mxu0 0.0
  %2799 = vmatpush1.msra.mxu0 0.0
  %2800 = vmatprep.subr.mxu0 0.0
  %2801 = vmatpush1.msra.mxu0 0.0
  %2802 = vmatprep.subr.mxu0 0.0
  %2803 = vmatpush1.msra.mxu0 0.0
  %2804 = vmatprep.subr.mxu0 0.0
  %2805 = vmatpush1.msra.mxu0 0.0
  %2806 = vmatprep.subr.mxu0 0.0
  %2807 = vmatpush1.msra.mxu0 0.0
  %2808 = vmatprep.subr.mxu0 0.0
  %2809 = vmatpush1.msra.mxu0 0.0
  %2810 = vmatprep.subr.mxu0 0.0
  %2811 = vmatpush1.msra.mxu0 0.0
  %2812 = vmatprep.subr.mxu0 0.0
  %2813 = vmatpush1.msra.mxu0 0.0
  %2814 = vmatprep.subr.mxu0 0.0
  %2815 = vmatpush1.msra.mxu0 0.0
  %2816 = vmatprep.subr.mxu0 0.0
  %2817 = vmatpush1.msra.mxu0 0.0
  %2818 = vmatprep.subr.mxu0 0.0
  %2819 = vmatpush1.msra.mxu0 0.0
  %2820 = vmatprep.subr.mxu0 0.0
  %2821 = vmatpush1.msra.mxu0 0.0
  %2822 = vmatprep.subr.mxu0 0.0
  %2823 = vmatpush1.msra.mxu0 0.0
  %2824 = vmatprep.subr.mxu0 0.0
  %2825 = vmatpush1.msra.mxu0 0.0
  %2826 = vmatprep.subr.mxu0 0.0
  %2827 = vmatpush1.msra.mxu0 0.0
  %2828 = vmatprep.subr.mxu0 0.0
  %2829 = vmatpush1.msra.mxu0 0.0
  %2830 = vmatprep.subr.mxu0 0.0
  %2831 = vmatpush1.msra.mxu0 0.0
  %2832 = vmatprep.subr.mxu0 0.0
  %2833 = vmatpush1.msra.mxu0 0.0
  %2834 = vmatprep.subr.mxu0 0.0
  %2835 = vmatpush1.msra.mxu0 0.0
  %2836 = vmatprep.subr.mxu0 0.0
  %2837 = vmatpush1.msra.mxu0 0.0
  %2838 = vmatprep.subr.mxu0 0.0
  %2839 = vmatpush1.msra.mxu0 0.0
  %2840 = vmatprep.subr.mxu0 0.0
  %2841 = vmatpush1.msra.mxu0 0.0
  %2842 = vmatprep.subr.mxu0 0.0
  %2843 = vmatpush1.msra.mxu0 0.0
  %2844 = vmatprep.subr.mxu0 0.0
  %2845 = vmatpush1.msra.mxu0 0.0
  %2846 = vmatprep.subr.mxu0 0.0
  %2847 = vmatpush1.msra.mxu0 0.0
  %2848 = vmatprep.subr.mxu0 0.0
  %2849 = vmatpush1.msra.mxu0 0.0
  %2850 = vmatprep.subr.mxu0 0.0
  %2851 = vmatpush1.msra.mxu0 0.0
  %2852 = vmatprep.subr.mxu0 0.0
  %2853 = vmatpush1.msra.mxu0 0.0
  %2854 = vmatprep.subr.mxu0 0.0
  %2855 = vmatpush1.msra.mxu0 0.0
  %2856 = vmatprep.subr.mxu0 0.0
  %2857 = vmatpush1.msra.mxu0 0.0
  %2858 = vmatprep.mubr.f32.mxu0 0.0
  %2859 = vmatmul.mubr.f32.gmra.mrb[0].mxu0 %v2778
  %v2860 = vpop.f32.mrb[0].mxu0
  %v2861 = vadd.f32 0.0, %v2860
  %v2862 = vpop.f32.mrb[0].mxu0
  %v2863 = vadd.f32 0.0, %v2862
  %2864 = vdwg.mxu0
  %2865 = vmatprep.subr.mxu0 %v2786
  %2866 = vmatpush1.msra.mxu0 %v2784
  %2867 = vmatprep.subr.mxu0 0.0
  %2868 = vmatpush1.msra.mxu0 0.0
  %2869 = vmatprep.subr.mxu0 0.0
  %2870 = vmatpush1.msra.mxu0 0.0
  %2871 = vmatprep.subr.mxu0 0.0
  %2872 = vmatpush1.msra.mxu0 0.0
  %2873 = vmatprep.subr.mxu0 0.0
  %2874 = vmatpush1.msra.mxu0 0.0
  %2875 = vmatprep.subr.mxu0 0.0
  %2876 = vmatpush1.msra.mxu0 0.0
  %2877 = vmatprep.subr.mxu0 0.0
  %2878 = vmatpush1.msra.mxu0 0.0
  %2879 = vmatprep.subr.mxu0 0.0
  %2880 = vmatpush1.msra.mxu0 0.0
  %2881 = vmatprep.subr.mxu0 0.0
  %2882 = vmatpush1.msra.mxu0 0.0
  %2883 = vmatprep.subr.mxu0 0.0
  %2884 = vmatpush1.msra.mxu0 0.0
  %2885 = vmatprep.subr.mxu0 0.0
  %2886 = vmatpush1.msra.mxu0 0.0
  %2887 = vmatprep.subr.mxu0 0.0
  %2888 = vmatpush1.msra.mxu0 0.0
  %2889 = vmatprep.subr.mxu0 0.0
  %2890 = vmatpush1.msra.mxu0 0.0
  %2891 = vmatprep.subr.mxu0 0.0
  %2892 = vmatpush1.msra.mxu0 0.0
  %2893 = vmatprep.subr.mxu0 0.0
  %2894 = vmatpush1.msra.mxu0 0.0
  %2895 = vmatprep.subr.mxu0 0.0
  %2896 = vmatpush1.msra.mxu0 0.0
  %2897 = vmatprep.subr.mxu0 0.0
  %2898 = vmatpush1.msra.mxu0 0.0
  %2899 = vmatprep.subr.mxu0 0.0
  %2900 = vmatpush1.msra.mxu0 0.0
  %2901 = vmatprep.subr.mxu0 0.0
  %2902 = vmatpush1.msra.mxu0 0.0
  %2903 = vmatprep.subr.mxu0 0.0
  %2904 = vmatpush1.msra.mxu0 0.0
  %2905 = vmatprep.subr.mxu0 0.0
  %2906 = vmatpush1.msra.mxu0 0.0
  %2907 = vmatprep.subr.mxu0 0.0
  %2908 = vmatpush1.msra.mxu0 0.0
  %2909 = vmatprep.subr.mxu0 0.0
  %2910 = vmatpush1.msra.mxu0 0.0
  %2911 = vmatprep.subr.mxu0 0.0
  %2912 = vmatpush1.msra.mxu0 0.0
  %2913 = vmatprep.subr.mxu0 0.0
  %2914 = vmatpush1.msra.mxu0 0.0
  %2915 = vmatprep.subr.mxu0 0.0
  %2916 = vmatpush1.msra.mxu0 0.0
  %2917 = vmatprep.subr.mxu0 0.0
  %2918 = vmatpush1.msra.mxu0 0.0
  %2919 = vmatprep.subr.mxu0 0.0
  %2920 = vmatpush1.msra.mxu0 0.0
  %2921 = vmatprep.subr.mxu0 0.0
  %2922 = vmatpush1.msra.mxu0 0.0
  %2923 = vmatprep.subr.mxu0 0.0
  %2924 = vmatpush1.msra.mxu0 0.0
  %2925 = vmatprep.subr.mxu0 0.0
  %2926 = vmatpush1.msra.mxu0 0.0
  %2927 = vmatprep.subr.mxu0 0.0
  %2928 = vmatpush1.msra.mxu0 0.0
  %2929 = vmatprep.mubr.f32.mxu0 0.0
  %2930 = vmatmul.mubr.f32.gmra.mrb[0].mxu0 %v2778
  %v2931 = vpop.f32.mrb[0].mxu0
  %v2932 = vadd.f32 0.0, %v2931
  %v2933 = vpop.f32.mrb[0].mxu0
  %v2934 = vadd.f32 0.0, %v2933
  %2935 = vdwg.mxu0
  %2936 = vmatprep.subr.mxu0 %v2790
  %2937 = vmatpush1.msra.mxu0 %v2788
  %2938 = vmatprep.subr.mxu0 0.0
  %2939 = vmatpush1.msra.mxu0 0.0
  %2940 = vmatprep.subr.mxu0 0.0
  %2941 = vmatpush1.msra.mxu0 0.0
  %2942 = vmatprep.subr.mxu0 0.0
  %2943 = vmatpush1.msra.mxu0 0.0
  %2944 = vmatprep.subr.mxu0 0.0
  %2945 = vmatpush1.msra.mxu0 0.0
  %2946 = vmatprep.subr.mxu0 0.0
  %2947 = vmatpush1.msra.mxu0 0.0
  %2948 = vmatprep.subr.mxu0 0.0
  %2949 = vmatpush1.msra.mxu0 0.0
  %2950 = vmatprep.subr.mxu0 0.0
  %2951 = vmatpush1.msra.mxu0 0.0
  %2952 = vmatprep.subr.mxu0 0.0
  %2953 = vmatpush1.msra.mxu0 0.0
  %2954 = vmatprep.subr.mxu0 0.0
  %2955 = vmatpush1.msra.mxu0 0.0
  %2956 = vmatprep.subr.mxu0 0.0
  %2957 = vmatpush1.msra.mxu0 0.0
  %2958 = vmatprep.subr.mxu0 0.0
  %2959 = vmatpush1.msra.mxu0 0.0
  %2960 = vmatprep.subr.mxu0 0.0
  %2961 = vmatpush1.msra.mxu0 0.0
  %2962 = vmatprep.subr.mxu0 0.0
  %2963 = vmatpush1.msra.mxu0 0.0
  %2964 = vmatprep.subr.mxu0 0.0
  %2965 = vmatpush1.msra.mxu0 0.0
  %2966 = vmatprep.subr.mxu0 0.0
  %2967 = vmatpush1.msra.mxu0 0.0
  %2968 = vmatprep.subr.mxu0 0.0
  %2969 = vmatpush1.msra.mxu0 0.0
  %2970 = vmatprep.subr.mxu0 0.0
  %2971 = vmatpush1.msra.mxu0 0.0
  %2972 = vmatprep.subr.mxu0 0.0
  %2973 = vmatpush1.msra.mxu0 0.0
  %2974 = vmatprep.subr.mxu0 0.0
  %2975 = vmatpush1.msra.mxu0 0.0
  %2976 = vmatprep.subr.mxu0 0.0
  %2977 = vmatpush1.msra.mxu0 0.0
  %2978 = vmatprep.subr.mxu0 0.0
  %2979 = vmatpush1.msra.mxu0 0.0
  %2980 = vmatprep.subr.mxu0 0.0
  %2981 = vmatpush1.msra.mxu0 0.0
  %2982 = vmatprep.subr.mxu0 0.0
  %2983 = vmatpush1.msra.mxu0 0.0
  %2984 = vmatprep.subr.mxu0 0.0
  %2985 = vmatpush1.msra.mxu0 0.0
  %2986 = vmatprep.subr.mxu0 0.0
  %2987 = vmatpush1.msra.mxu0 0.0
  %2988 = vmatprep.subr.mxu0 0.0
  %2989 = vmatpush1.msra.mxu0 0.0
  %2990 = vmatprep.subr.mxu0 0.0
  %2991 = vmatpush1.msra.mxu0 0.0
  %2992 = vmatprep.subr.mxu0 0.0
  %2993 = vmatpush1.msra.mxu0 0.0
  %2994 = vmatprep.subr.mxu0 0.0
  %2995 = vmatpush1.msra.mxu0 0.0
  %2996 = vmatprep.subr.mxu0 0.0
  %2997 = vmatpush1.msra.mxu0 0.0
  %2998 = vmatprep.subr.mxu0 0.0
  %2999 = vmatpush1.msra.mxu0 0.0
  %3000 = vmatprep.mubr.f32.mxu0 0.0
  %3001 = vmatmul.mubr.f32.gmra.mrb[0].mxu0 %v2778
  %v3002 = vpop.f32.mrb[0].mxu0
  %v3003 = vadd.f32 0.0, %v3002
  %v3004 = vpop.f32.mrb[0].mxu0
  %v3005 = vadd.f32 0.0, %v3004
  %3006 = vdwg.mxu0
  %3007 = vmatprep.subr.mxu0 0.0
  %3008 = vmatpush1.msra.mxu0 %v2792
  %3009 = vmatprep.subr.mxu0 0.0
  %3010 = vmatpush1.msra.mxu0 0.0
  %3011 = vmatprep.subr.mxu0 0.0
  %3012 = vmatpush1.msra.mxu0 0.0
  %3013 = vmatprep.subr.mxu0 0.0
  %3014 = vmatpush1.msra.mxu0 0.0
  %3015 = vmatprep.subr.mxu0 0.0
  %3016 = vmatpush1.msra.mxu0 0.0
  %3017 = vmatprep.subr.mxu0 0.0
  %3018 = vmatpush1.msra.mxu0 0.0
  %3019 = vmatprep.subr.mxu0 0.0
  %3020 = vmatpush1.msra.mxu0 0.0
  %3021 = vmatprep.subr.mxu0 0.0
  %3022 = vmatpush1.msra.mxu0 0.0
  %3023 = vmatprep.subr.mxu0 0.0
  %3024 = vmatpush1.msra.mxu0 0.0
  %3025 = vmatprep.subr.mxu0 0.0
  %3026 = vmatpush1.msra.mxu0 0.0
  %3027 = vmatprep.subr.mxu0 0.0
  %3028 = vmatpush1.msra.mxu0 0.0
  %3029 = vmatprep.subr.mxu0 0.0
  %3030 = vmatpush1.msra.mxu0 0.0
  %3031 = vmatprep.subr.mxu0 0.0
  %3032 = vmatpush1.msra.mxu0 0.0
  %3033 = vmatprep.subr.mxu0 0.0
  %3034 = vmatpush1.msra.mxu0 0.0
  %3035 = vmatprep.subr.mxu0 0.0
  %3036 = vmatpush1.msra.mxu0 0.0
  %3037 = vmatprep.subr.mxu0 0.0
  %3038 = vmatpush1.msra.mxu0 0.0
  %3039 = vmatprep.subr.mxu0 0.0
  %3040 = vmatpush1.msra.mxu0 0.0
  %3041 = vmatprep.subr.mxu0 0.0
  %3042 = vmatpush1.msra.mxu0 0.0
  %3043 = vmatprep.subr.mxu0 0.0
  %3044 = vmatpush1.msra.mxu0 0.0
  %3045 = vmatprep.subr.mxu0 0.0
  %3046 = vmatpush1.msra.mxu0 0.0
  %3047 = vmatprep.subr.mxu0 0.0
  %3048 = vmatpush1.msra.mxu0 0.0
  %3049 = vmatprep.subr.mxu0 0.0
  %3050 = vmatpush1.msra.mxu0 0.0
  %3051 = vmatprep.subr.mxu0 0.0
  %3052 = vmatpush1.msra.mxu0 0.0
  %3053 = vmatprep.subr.mxu0 0.0
  %3054 = vmatpush1.msra.mxu0 0.0
  %3055 = vmatprep.subr.mxu0 0.0
  %3056 = vmatpush1.msra.mxu0 0.0
  %3057 = vmatprep.subr.mxu0 0.0
  %3058 = vmatpush1.msra.mxu0 0.0
  %3059 = vmatprep.subr.mxu0 0.0
  %3060 = vmatpush1.msra.mxu0 0.0
  %3061 = vmatprep.subr.mxu0 0.0
  %3062 = vmatpush1.msra.mxu0 0.0
  %3063 = vmatprep.subr.mxu0 0.0
  %3064 = vmatpush1.msra.mxu0 0.0
  %3065 = vmatprep.subr.mxu0 0.0
  %3066 = vmatpush1.msra.mxu0 0.0
  %3067 = vmatprep.subr.mxu0 0.0
  %3068 = vmatpush1.msra.mxu0 0.0
  %3069 = vmatprep.subr.mxu0 0.0
  %3070 = vmatpush1.msra.mxu0 0.0
  %3071 = vmatprep.mubr.f32.mxu0 0.0
  %3072 = vmatmul.mubr.f32.gmra.mrb[0].mxu0 %v2778
  %v3073 = vpop.f32.mrb[0].mxu0
  %v3074 = vadd.f32 0.0, %v3073
  %v3075 = vpop.f32.mrb[0].mxu0
  %3076 = vdwg.mxu0
  %v3077 = vadd.f32 %v2732, %v2861
  %v3078 = vadd.f32 %v2733, %v2863
  %v3079 = vadd.f32 %v2734, %v2932
  %v3080 = vadd.f32 %v2735, %v2934
  %v3081 = vadd.f32 %v2736, %v3003
  %v3082 = vadd.f32 %v2737, %v3005
  %v3083 = vadd.f32 %v2738, %v3074
  %v3084 = vld [vmem:[%s2] sm:$0xff]
  %3086 = vset.pattern.permute.xlu0 0
  %3087 = vperm.xlu0 %3086, %v3084
  %v3088 = vpop.permute.xlu0 %3087
  %v3090 = vadd.f32 %v3077, %v3088
  %v3091 = vadd.f32 %v3078, %v3088
  %v3092 = vadd.f32 %v3079, %v3088
  %v3093 = vadd.f32 %v3080, %v3088
  %v3094 = vadd.f32 %v3081, %v3088
  %v3095 = vadd.f32 %v3082, %v3088
  %v3096 = vadd.f32 %v3083, %v3088
  %v3097 = vmax.f32 %v3090, 0.0
  %v3098 = vmax.f32 %v3091, 0.0
  %v3099 = vmax.f32 %v3092, 0.0
  %v3100 = vmax.f32 %v3093, 0.0
  %v3101 = vmax.f32 %v3094, 0.0
  %v3102 = vmax.f32 %v3095, 0.0
  %v3103 = vmax.f32 %v3096, 0.0
  %v3104 = vld [vmem:[%s3] sm:$0xff]
  %v3105 = vld [vmem:[%s3 + $0x8] sm:$0xff]
  %v3106 = vld [vmem:[%s3 + $0x10] sm:$0xff]
  %v3107 = vld [vmem:[%s3 + $0x18] sm:$0xff]
  %v3108 = vld [vmem:[%s3 + $0x20] sm:$0xff]
  %v3109 = vld [vmem:[%s3 + $0x28] sm:$0xff]
  %v3110 = vld [vmem:[%s3 + $0x30] sm:$0xff]
  %v3111 = vld [vmem:[%s3 + $0x38] sm:$0xff]
  %v3112 = vld [vmem:[%s3 + $0x40] sm:$0xff]
  %v3113 = vld [vmem:[%s3 + $0x48] sm:$0xff]
  %v3114 = vld [vmem:[%s3 + $0x50] sm:$0xff]
  %v3115 = vld [vmem:[%s3 + $0x58] sm:$0xff]
  %v3116 = vld [vmem:[%s3 + $0x60] sm:$0xff]
  %v3117 = vld [vmem:[%s3 + $0x68] sm:$0xff]
  %v3118 = vld [vmem:[%s3 + $0x70] sm:$0xff]
  %v3119 = vld [vmem:[%s3 + $0x78] sm:$0xff]
  %v3120 = vld [vmem:[%s3 + $0x80] sm:$0xff]
  %v3121 = vld [vmem:[%s3 + $0x88] sm:$0xff]
  %v3122 = vld [vmem:[%s3 + $0x90] sm:$0xff]
  %v3123 = vld [vmem:[%s3 + $0x98] sm:$0xff]
  %v3124 = vld [vmem:[%s3 + $0xa0] sm:$0xff]
  %v3125 = vld [vmem:[%s3 + $0xa8] sm:$0xff]
  %v3126 = vld [vmem:[%s3 + $0xb0] sm:$0xff]
  %v3127 = vld [vmem:[%s3 + $0xb8] sm:$0xff]
  %v3128 = vld [vmem:[%s3 + $0xc0] sm:$0xff]
  %v3129 = vld [vmem:[%s3 + $0xc8] sm:$0xff]
  %v3130 = vld [vmem:[%s3 + $0xd0] sm:$0xff]
  %v3131 = vld [vmem:[%s3 + $0xd8] sm:$0xff]
  %v3132 = vld [vmem:[%s3 + $0xe0] sm:$0xff]
  %v3133 = vld [vmem:[%s3 + $0xe8] sm:$0xff]
  %v3134 = vld [vmem:[%s3 + $0xf0] sm:$0xff]
  %v3135 = vld [vmem:[%s3 + $0xf8] sm:$0xff]
  %v3136 = vld [vmem:[%s3 + $0x100] sm:$0xff]
  %v3137 = vld [vmem:[%s3 + $0x108] sm:$0xff]
  %v3138 = vld [vmem:[%s3 + $0x110] sm:$0xff]
  %v3139 = vld [vmem:[%s3 + $0x118] sm:$0xff]
  %v3140 = vld [vmem:[%s3 + $0x120] sm:$0xff]
  %v3141 = vld [vmem:[%s3 + $0x128] sm:$0xff]
  %v3142 = vld [vmem:[%s3 + $0x130] sm:$0xff]
  %v3143 = vld [vmem:[%s3 + $0x138] sm:$0xff]
  %v3144 = vld [vmem:[%s3 + $0x140] sm:$0xff]
  %v3145 = vld [vmem:[%s3 + $0x148] sm:$0xff]
  %v3146 = vld [vmem:[%s3 + $0x150] sm:$0xff]
  %v3147 = vld [vmem:[%s3 + $0x158] sm:$0xff]
  %v3148 = vld [vmem:[%s3 + $0x160] sm:$0xff]
  %v3149 = vld [vmem:[%s3 + $0x168] sm:$0xff]
  %v3150 = vld [vmem:[%s3 + $0x170] sm:$0xff]
  %v3151 = vld [vmem:[%s3 + $0x178] sm:$0xff]
  %v3152 = vld [vmem:[%s3 + $0x180] sm:$0xff]
  %v3153 = vld [vmem:[%s3 + $0x188] sm:$0xff]
  %v3154 = vld [vmem:[%s3 + $0x190] sm:$0xff]
  %v3155 = vld [vmem:[%s3 + $0x198] sm:$0xff]
  %v3156 = vld [vmem:[%s3 + $0x1a0] sm:$0xff]
  %v3157 = vld [vmem:[%s3 + $0x1a8] sm:$0xff]
  %v3158 = vld [vmem:[%s3 + $0x1b0] sm:$0xff]
  %v3159 = vld [vmem:[%s3 + $0x1b8] sm:$0xff]
  %v3160 = vld [vmem:[%s3 + $0x1c0] sm:$0xff]
  %v3161 = vld [vmem:[%s3 + $0x1c8] sm:$0xff]
  %v3162 = vld [vmem:[%s3 + $0x1d0] sm:$0xff]
  %v3163 = vld [vmem:[%s3 + $0x1d8] sm:$0xff]
  %v3164 = vld [vmem:[%s3 + $0x1e0] sm:$0xff]
  %v3165 = vld [vmem:[%s3 + $0x1e8] sm:$0xff]
  %v3166 = vld [vmem:[%s3 + $0x1f0] sm:$0xff]
  %v3167 = vld [vmem:[%s3 + $0x1f8] sm:$0xff]
  %v3168 = vld [vmem:[%s3 + $0x200] sm:$0xff]
  %v3169 = vld [vmem:[%s3 + $0x208] sm:$0xff]
  %v3170 = vld [vmem:[%s3 + $0x210] sm:$0xff]
  %v3171 = vld [vmem:[%s3 + $0x218] sm:$0xff]
  %v3172 = vld [vmem:[%s3 + $0x220] sm:$0xff]
  %v3173 = vld [vmem:[%s3 + $0x228] sm:$0xff]
  %v3174 = vld [vmem:[%s3 + $0x230] sm:$0xff]
  %v3175 = vld [vmem:[%s3 + $0x238] sm:$0xff]
  %v3176 = vld [vmem:[%s3 + $0x240] sm:$0xff]
  %v3177 = vld [vmem:[%s3 + $0x248] sm:$0xff]
  %v3178 = vld [vmem:[%s3 + $0x250] sm:$0xff]
  %v3179 = vld [vmem:[%s3 + $0x258] sm:$0xff]
  %v3180 = vld [vmem:[%s3 + $0x260] sm:$0xff]
  %v3181 = vld [vmem:[%s3 + $0x268] sm:$0xff]
  %v3182 = vld [vmem:[%s3 + $0x270] sm:$0xff]
  %v3183 = vld [vmem:[%s3 + $0x278] sm:$0xff]
  %v3184 = vld [vmem:[%s3 + $0x280] sm:$0xff]
  %v3185 = vld [vmem:[%s3 + $0x288] sm:$0xff]
  %v3186 = vld [vmem:[%s3 + $0x290] sm:$0xff]
  %v3187 = vld [vmem:[%s3 + $0x298] sm:$0xff]
  %v3188 = vld [vmem:[%s3 + $0x2a0] sm:$0xff]
  %v3189 = vld [vmem:[%s3 + $0x2a8] sm:$0xff]
  %v3190 = vld [vmem:[%s3 + $0x2b0] sm:$0xff]
  %v3191 = vld [vmem:[%s3 + $0x2b8] sm:$0xff]
  %v3192 = vld [vmem:[%s3 + $0x2c0] sm:$0xff]
  %v3193 = vld [vmem:[%s3 + $0x2c8] sm:$0xff]
  %v3194 = vld [vmem:[%s3 + $0x2d0] sm:$0xff]
  %v3195 = vld [vmem:[%s3 + $0x2d8] sm:$0xff]
  %v3196 = vld [vmem:[%s3 + $0x2e0] sm:$0xff]
  %v3197 = vld [vmem:[%s3 + $0x2e8] sm:$0xff]
  %v3198 = vld [vmem:[%s3 + $0x2f0] sm:$0xff]
  %v3199 = vld [vmem:[%s3 + $0x2f8] sm:$0xff]
  %v3200 = vld [vmem:[%s3 + $0x300] sm:$0xff]
  %v3201 = vld [vmem:[%s3 + $0x308] sm:$0xff]
  %v3202 = vld [vmem:[%s3 + $0x310] sm:$0xff]
  %v3203 = vld [vmem:[%s3 + $0x318] sm:$0xff]
  %v3204 = vld [vmem:[%s3 + $0x320] sm:$0xff]
  %v3205 = vld [vmem:[%s3 + $0x328] sm:$0xff]
  %v3206 = vld [vmem:[%s3 + $0x330] sm:$0xff]
  %v3207 = vld [vmem:[%s3 + $0x338] sm:$0xff]
  %v3208 = vld [vmem:[%s3 + $0x340] sm:$0xff]
  %v3209 = vld [vmem:[%s3 + $0x348] sm:$0xff]
  %v3210 = vld [vmem:[%s3 + $0x350] sm:$0xff]
  %v3211 = vld [vmem:[%s3 + $0x358] sm:$0xff]
  %v3212 = vld [vmem:[%s3 + $0x360] sm:$0xff]
  %v3213 = vld [vmem:[%s3 + $0x368] sm:$0xff]
  %v3214 = vld [vmem:[%s3 + $0x370] sm:$0xff]
  %v3215 = vld [vmem:[%s3 + $0x378] sm:$0xff]
  %3216 = vmatprep.subr.mxu0 0.0
  %3217 = vmatpush1.msra.mxu0 %v3104
  %3218 = vmatprep.subr.mxu0 0.0
  %3219 = vmatpush1.msra.mxu0 %v3105
  %3220 = vmatprep.subr.mxu0 0.0
  %3221 = vmatpush1.msra.mxu0 %v3106
  %3222 = vmatprep.subr.mxu0 0.0
  %3223 = vmatpush1.msra.mxu0 %v3107
  %3224 = vmatprep.subr.mxu0 0.0
  %3225 = vmatpush1.msra.mxu0 %v3108
  %3226 = vmatprep.subr.mxu0 0.0
  %3227 = vmatpush1.msra.mxu0 %v3109
  %3228 = vmatprep.subr.mxu0 0.0
  %3229 = vmatpush1.msra.mxu0 %v3110
  %3230 = vmatprep.subr.mxu0 0.0
  %3231 = vmatpush1.msra.mxu0 %v3111
  %3232 = vmatprep.subr.mxu0 0.0
  %3233 = vmatpush1.msra.mxu0 %v3112
  %3234 = vmatprep.subr.mxu0 0.0
  %3235 = vmatpush1.msra.mxu0 %v3113
  %3236 = vmatprep.subr.mxu0 0.0
  %3237 = vmatpush1.msra.mxu0 %v3114
  %3238 = vmatprep.subr.mxu0 0.0
  %3239 = vmatpush1.msra.mxu0 %v3115
  %3240 = vmatprep.subr.mxu0 0.0
  %3241 = vmatpush1.msra.mxu0 %v3116
  %3242 = vmatprep.subr.mxu0 0.0
  %3243 = vmatpush1.msra.mxu0 %v3117
  %3244 = vmatprep.subr.mxu0 0.0
  %3245 = vmatpush1.msra.mxu0 %v3118
  %3246 = vmatprep.subr.mxu0 0.0
  %3247 = vmatpush1.msra.mxu0 %v3119
  %3248 = vmatprep.subr.mxu0 0.0
  %3249 = vmatpush1.msra.mxu0 %v3120
  %3250 = vmatprep.subr.mxu0 0.0
  %3251 = vmatpush1.msra.mxu0 %v3121
  %3252 = vmatprep.subr.mxu0 0.0
  %3253 = vmatpush1.msra.mxu0 %v3122
  %3254 = vmatprep.subr.mxu0 0.0
  %3255 = vmatpush1.msra.mxu0 %v3123
  %3256 = vmatprep.subr.mxu0 0.0
  %3257 = vmatpush1.msra.mxu0 %v3124
  %3258 = vmatprep.subr.mxu0 0.0
  %3259 = vmatpush1.msra.mxu0 %v3125
  %3260 = vmatprep.subr.mxu0 0.0
  %3261 = vmatpush1.msra.mxu0 %v3126
  %3262 = vmatprep.subr.mxu0 0.0
  %3263 = vmatpush1.msra.mxu0 %v3127
  %3264 = vmatprep.subr.mxu0 0.0
  %3265 = vmatpush1.msra.mxu0 %v3128
  %3266 = vmatprep.subr.mxu0 0.0
  %3267 = vmatpush1.msra.mxu0 %v3129
  %3268 = vmatprep.subr.mxu0 0.0
  %3269 = vmatpush1.msra.mxu0 %v3130
  %3270 = vmatprep.subr.mxu0 0.0
  %3271 = vmatpush1.msra.mxu0 %v3131
  %3272 = vmatprep.subr.mxu0 0.0
  %3273 = vmatpush1.msra.mxu0 %v3132
  %3274 = vmatprep.subr.mxu0 0.0
  %3275 = vmatpush1.msra.mxu0 %v3133
  %3276 = vmatprep.subr.mxu0 0.0
  %3277 = vmatpush1.msra.mxu0 %v3134
  %3278 = vmatprep.subr.mxu0 0.0
  %3279 = vmatpush1.msra.mxu0 %v3135
  %3280 = vmatprep.mubr.f32.mxu0 %v3098
  %3281 = vmatmul.mubr.f32.gmra.mrb[0].mxu0 %v3097
  %v3282 = vpop.f32.mrb[0].mxu0
  %v3283 = vadd.f32 0.0, %v3282
  %v3284 = vpop.f32.mrb[0].mxu0
  %3285 = vdwg.mxu0
  %3286 = vmatprep.subr.mxu0 0.0
  %3287 = vmatpush1.msra.mxu0 %v3136
  %3288 = vmatprep.subr.mxu0 0.0
  %3289 = vmatpush1.msra.mxu0 %v3137
  %3290 = vmatprep.subr.mxu0 0.0
  %3291 = vmatpush1.msra.mxu0 %v3138
  %3292 = vmatprep.subr.mxu0 0.0
  %3293 = vmatpush1.msra.mxu0 %v3139
  %3294 = vmatprep.subr.mxu0 0.0
  %3295 = vmatpush1.msra.mxu0 %v3140
  %3296 = vmatprep.subr.mxu0 0.0
  %3297 = vmatpush1.msra.mxu0 %v3141
  %3298 = vmatprep.subr.mxu0 0.0
  %3299 = vmatpush1.msra.mxu0 %v3142
  %3300 = vmatprep.subr.mxu0 0.0
  %3301 = vmatpush1.msra.mxu0 %v3143
  %3302 = vmatprep.subr.mxu0 0.0
  %3303 = vmatpush1.msra.mxu0 %v3144
  %3304 = vmatprep.subr.mxu0 0.0
  %3305 = vmatpush1.msra.mxu0 %v3145
  %3306 = vmatprep.subr.mxu0 0.0
  %3307 = vmatpush1.msra.mxu0 %v3146
  %3308 = vmatprep.subr.mxu0 0.0
  %3309 = vmatpush1.msra.mxu0 %v3147
  %3310 = vmatprep.subr.mxu0 0.0
  %3311 = vmatpush1.msra.mxu0 %v3148
  %3312 = vmatprep.subr.mxu0 0.0
  %3313 = vmatpush1.msra.mxu0 %v3149
  %3314 = vmatprep.subr.mxu0 0.0
  %3315 = vmatpush1.msra.mxu0 %v3150
  %3316 = vmatprep.subr.mxu0 0.0
  %3317 = vmatpush1.msra.mxu0 %v3151
  %3318 = vmatprep.subr.mxu0 0.0
  %3319 = vmatpush1.msra.mxu0 %v3152
  %3320 = vmatprep.subr.mxu0 0.0
  %3321 = vmatpush1.msra.mxu0 %v3153
  %3322 = vmatprep.subr.mxu0 0.0
  %3323 = vmatpush1.msra.mxu0 %v3154
  %3324 = vmatprep.subr.mxu0 0.0
  %3325 = vmatpush1.msra.mxu0 %v3155
  %3326 = vmatprep.subr.mxu0 0.0
  %3327 = vmatpush1.msra.mxu0 %v3156
  %3328 = vmatprep.subr.mxu0 0.0
  %3329 = vmatpush1.msra.mxu0 %v3157
  %3330 = vmatprep.subr.mxu0 0.0
  %3331 = vmatpush1.msra.mxu0 %v3158
  %3332 = vmatprep.subr.mxu0 0.0
  %3333 = vmatpush1.msra.mxu0 %v3159
  %3334 = vmatprep.subr.mxu0 0.0
  %3335 = vmatpush1.msra.mxu0 %v3160
  %3336 = vmatprep.subr.mxu0 0.0
  %3337 = vmatpush1.msra.mxu0 %v3161
  %3338 = vmatprep.subr.mxu0 0.0
  %3339 = vmatpush1.msra.mxu0 %v3162
  %3340 = vmatprep.subr.mxu0 0.0
  %3341 = vmatpush1.msra.mxu0 %v3163
  %3342 = vmatprep.subr.mxu0 0.0
  %3343 = vmatpush1.msra.mxu0 %v3164
  %3344 = vmatprep.subr.mxu0 0.0
  %3345 = vmatpush1.msra.mxu0 %v3165
  %3346 = vmatprep.subr.mxu0 0.0
  %3347 = vmatpush1.msra.mxu0 %v3166
  %3348 = vmatprep.subr.mxu0 0.0
  %3349 = vmatpush1.msra.mxu0 %v3167
  %3350 = vmatprep.mubr.f32.mxu0 %v3100
  %3351 = vmatmul.mubr.f32.gmra.mrb[0].mxu0 %v3099
  %v3352 = vpop.f32.mrb[0].mxu0
  %v3353 = vadd.f32 %v3283, %v3352
  %v3354 = vpop.f32.mrb[0].mxu0
  %3355 = vdwg.mxu0
  %3356 = vmatprep.subr.mxu0 0.0
  %3357 = vmatpush1.msra.mxu0 %v3168
  %3358 = vmatprep.subr.mxu0 0.0
  %3359 = vmatpush1.msra.mxu0 %v3169
  %3360 = vmatprep.subr.mxu0 0.0
  %3361 = vmatpush1.msra.mxu0 %v3170
  %3362 = vmatprep.subr.mxu0 0.0
  %3363 = vmatpush1.msra.mxu0 %v3171
  %3364 = vmatprep.subr.mxu0 0.0
  %3365 = vmatpush1.msra.mxu0 %v3172
  %3366 = vmatprep.subr.mxu0 0.0
  %3367 = vmatpush1.msra.mxu0 %v3173
  %3368 = vmatprep.subr.mxu0 0.0
  %3369 = vmatpush1.msra.mxu0 %v3174
  %3370 = vmatprep.subr.mxu0 0.0
  %3371 = vmatpush1.msra.mxu0 %v3175
  %3372 = vmatprep.subr.mxu0 0.0
  %3373 = vmatpush1.msra.mxu0 %v3176
  %3374 = vmatprep.subr.mxu0 0.0
  %3375 = vmatpush1.msra.mxu0 %v3177
  %3376 = vmatprep.subr.mxu0 0.0
  %3377 = vmatpush1.msra.mxu0 %v3178
  %3378 = vmatprep.subr.mxu0 0.0
  %3379 = vmatpush1.msra.mxu0 %v3179
  %3380 = vmatprep.subr.mxu0 0.0
  %3381 = vmatpush1.msra.mxu0 %v3180
  %3382 = vmatprep.subr.mxu0 0.0
  %3383 = vmatpush1.msra.mxu0 %v3181
  %3384 = vmatprep.subr.mxu0 0.0
  %3385 = vmatpush1.msra.mxu0 %v3182
  %3386 = vmatprep.subr.mxu0 0.0
  %3387 = vmatpush1.msra.mxu0 %v3183
  %3388 = vmatprep.subr.mxu0 0.0
  %3389 = vmatpush1.msra.mxu0 %v3184
  %3390 = vmatprep.subr.mxu0 0.0
  %3391 = vmatpush1.msra.mxu0 %v3185
  %3392 = vmatprep.subr.mxu0 0.0
  %3393 = vmatpush1.msra.mxu0 %v3186
  %3394 = vmatprep.subr.mxu0 0.0
  %3395 = vmatpush1.msra.mxu0 %v3187
  %3396 = vmatprep.subr.mxu0 0.0
  %3397 = vmatpush1.msra.mxu0 %v3188
  %3398 = vmatprep.subr.mxu0 0.0
  %3399 = vmatpush1.msra.mxu0 %v3189
  %3400 = vmatprep.subr.mxu0 0.0
  %3401 = vmatpush1.msra.mxu0 %v3190
  %3402 = vmatprep.subr.mxu0 0.0
  %3403 = vmatpush1.msra.mxu0 %v3191
  %3404 = vmatprep.subr.mxu0 0.0
  %3405 = vmatpush1.msra.mxu0 %v3192
  %3406 = vmatprep.subr.mxu0 0.0
  %3407 = vmatpush1.msra.mxu0 %v3193
  %3408 = vmatprep.subr.mxu0 0.0
  %3409 = vmatpush1.msra.mxu0 %v3194
  %3410 = vmatprep.subr.mxu0 0.0
  %3411 = vmatpush1.msra.mxu0 %v3195
  %3412 = vmatprep.subr.mxu0 0.0
  %3413 = vmatpush1.msra.mxu0 %v3196
  %3414 = vmatprep.subr.mxu0 0.0
  %3415 = vmatpush1.msra.mxu0 %v3197
  %3416 = vmatprep.subr.mxu0 0.0
  %3417 = vmatpush1.msra.mxu0 %v3198
  %3418 = vmatprep.subr.mxu0 0.0
  %3419 = vmatpush1.msra.mxu0 %v3199
  %3420 = vmatprep.mubr.f32.mxu0 %v3102
  %3421 = vmatmul.mubr.f32.gmra.mrb[0].mxu0 %v3101
  %v3422 = vpop.f32.mrb[0].mxu0
  %v3423 = vadd.f32 %v3353, %v3422
  %v3424 = vpop.f32.mrb[0].mxu0
  %3425 = vdwg.mxu0
  %3426 = vmatprep.subr.mxu0 0.0
  %3427 = vmatpush1.msra.mxu0 %v3200
  %3428 = vmatprep.subr.mxu0 0.0
  %3429 = vmatpush1.msra.mxu0 %v3201
  %3430 = vmatprep.subr.mxu0 0.0
  %3431 = vmatpush1.msra.mxu0 %v3202
  %3432 = vmatprep.subr.mxu0 0.0
  %3433 = vmatpush1.msra.mxu0 %v3203
  %3434 = vmatprep.subr.mxu0 0.0
  %3435 = vmatpush1.msra.mxu0 %v3204
  %3436 = vmatprep.subr.mxu0 0.0
  %3437 = vmatpush1.msra.mxu0 %v3205
  %3438 = vmatprep.subr.mxu0 0.0
  %3439 = vmatpush1.msra.mxu0 %v3206
  %3440 = vmatprep.subr.mxu0 0.0
  %3441 = vmatpush1.msra.mxu0 %v3207
  %3442 = vmatprep.subr.mxu0 0.0
  %3443 = vmatpush1.msra.mxu0 %v3208
  %3444 = vmatprep.subr.mxu0 0.0
  %3445 = vmatpush1.msra.mxu0 %v3209
  %3446 = vmatprep.subr.mxu0 0.0
  %3447 = vmatpush1.msra.mxu0 %v3210
  %3448 = vmatprep.subr.mxu0 0.0
  %3449 = vmatpush1.msra.mxu0 %v3211
  %3450 = vmatprep.subr.mxu0 0.0
  %3451 = vmatpush1.msra.mxu0 %v3212
  %3452 = vmatprep.subr.mxu0 0.0
  %3453 = vmatpush1.msra.mxu0 %v3213
  %3454 = vmatprep.subr.mxu0 0.0
  %3455 = vmatpush1.msra.mxu0 %v3214
  %3456 = vmatprep.subr.mxu0 0.0
  %3457 = vmatpush1.msra.mxu0 %v3215
  %3458 = vmatprep.subr.mxu0 0.0
  %3459 = vmatpush1.msra.mxu0 0.0
  %3460 = vmatprep.subr.mxu0 0.0
  %3461 = vmatpush1.msra.mxu0 0.0
  %3462 = vmatprep.subr.mxu0 0.0
  %3463 = vmatpush1.msra.mxu0 0.0
  %3464 = vmatprep.subr.mxu0 0.0
  %3465 = vmatpush1.msra.mxu0 0.0
  %3466 = vmatprep.subr.mxu0 0.0
  %3467 = vmatpush1.msra.mxu0 0.0
  %3468 = vmatprep.subr.mxu0 0.0
  %3469 = vmatpush1.msra.mxu0 0.0
  %3470 = vmatprep.subr.mxu0 0.0
  %3471 = vmatpush1.msra.mxu0 0.0
  %3472 = vmatprep.subr.mxu0 0.0
  %3473 = vmatpush1.msra.mxu0 0.0
  %3474 = vmatprep.subr.mxu0 0.0
  %3475 = vmatpush1.msra.mxu0 0.0
  %3476 = vmatprep.subr.mxu0 0.0
  %3477 = vmatpush1.msra.mxu0 0.0
  %3478 = vmatprep.subr.mxu0 0.0
  %3479 = vmatpush1.msra.mxu0 0.0
  %3480 = vmatprep.subr.mxu0 0.0
  %3481 = vmatpush1.msra.mxu0 0.0
  %3482 = vmatprep.subr.mxu0 0.0
  %3483 = vmatpush1.msra.mxu0 0.0
  %3484 = vmatprep.subr.mxu0 0.0
  %3485 = vmatpush1.msra.mxu0 0.0
  %3486 = vmatprep.subr.mxu0 0.0
  %3487 = vmatpush1.msra.mxu0 0.0
  %3488 = vmatprep.subr.mxu0 0.0
  %3489 = vmatpush1.msra.mxu0 0.0
  %3490 = vmatprep.mubr.f32.mxu0 0.0
  %3491 = vmatmul.mubr.f32.gmra.mrb[0].mxu0 %v3103
  %v3492 = vpop.f32.mrb[0].mxu0
  %v3493 = vadd.f32 %v3423, %v3492
  %v3494 = vpop.f32.mrb[0].mxu0
  %3495 = vdwg.mxu0
  %vm3496 = vcmask 15360
  %3497 = vst.msk [vmem:[%s4] sm:$0xff] %vm3496, %v3493
  // Predicated region
  $region18: #{tpu_custom_call.1} parent=0 // pred_check
    _
  $region19: #{tpu_custom_call.1} parent=0 // pred_check_branch
    %3499 = sbr.rel (0) target = $region21
  $region20: #{tpu_custom_call.1} parent=0 // pred_region
    _
  $region21: #{tpu_custom_call.1} parent=0 // pred_fallthru
    _
  // Predicated region
  $region22: #{tpu_custom_call.1} parent=0 // pred_check
    _
  $region23: #{tpu_custom_call.1} parent=0 // pred_check_branch
    %3501 = sbr.rel (0) target = $region25
  $region24: #{tpu_custom_call.1} parent=0 // pred_region
    _
  $region25: #{tpu_custom_call.1} parent=0 // pred_fallthru
    _

</llo_original>
